<compile_context>
chip_gen: v7x
topology: tpu7x:2x2x1
jax: 0.10.0
libtpu: 0.0.40
codegen_flags: <defaults>
</compile_context>

<pallas_src>
import functools

import jax
import jax.numpy as jnp
import numpy as np
from jax.experimental import pallas as pl
from jax.experimental.pallas import tpu as pltpu

HIDDEN = 750        # as in the PyTorch module
HIDDEN_PAD = 768    # padded to a multiple of 128 lanes (zero padding, exact math)


def _round_up(x, m):
    return ((x + m - 1) // m) * m


def _vae_kernel(max_action, latent_dim,
                state_ref, action_ref, noise_ref,
                we1s_ref, we1a_ref, be1_ref,
                we2_ref, be2_ref,
                wml_ref, bml_ref,
                wd1s_ref, wd1z_ref, bd1_ref,
                wd2_ref, bd2_ref,
                wd3_ref, bd3_ref,
                u_ref, mean_ref, std_ref):
    f32 = jnp.float32

    def mm(x, w_ref):
        w = w_ref[...]
        # bf16 (or f32) MXU matmul with f32 accumulation.
        return jnp.dot(x.astype(w.dtype), w, preferred_element_type=f32)

    s = state_ref[...]
    a = action_ref[...]
    n = noise_ref[...]

    # ----- encoder -----
    # e1: relu([state, action] @ W_e1 + b_e1)   (concat done as split matmul)
    h = mm(s, we1s_ref) + mm(a, we1a_ref) + be1_ref[...]
    h = jnp.maximum(h, 0.0)
    # e2
    h = mm(h, we2_ref) + be2_ref[...]
    h = jnp.maximum(h, 0.0)

    # fused heads: cols [0:L) = mean, [L:2L) = log_std, rest zero-padded
    ml = mm(h, wml_ref) + bml_ref[...]                 # (TB, HEAD_PAD)
    std_slab = jnp.exp(jnp.clip(ml, -4.0, 15.0))       # std lives at cols [L, 2L)

    mean = ml[:, :latent_dim]
    std = std_slab[:, latent_dim:2 * latent_dim]
    z = mean + std * n                                 # reparameterization

    # ----- decoder -----
    d = mm(s, wd1s_ref) + mm(z, wd1z_ref) + bd1_ref[...]
    d = jnp.maximum(d, 0.0)
    d = mm(d, wd2_ref) + bd2_ref[...]
    d = jnp.maximum(d, 0.0)
    u_ref[...] = max_action * jnp.tanh(mm(d, wd3_ref) + bd3_ref[...])

    # lane-dense output slabs; the wrapper slices out the real columns
    mean_ref[...] = ml
    std_ref[...] = std_slab


def vae_forward(params, state, action, noise, max_action, *, block_rows=512):
    """Full VAE forward (encode + reparameterize + decode) in one Pallas call,
    pipelined over batch tiles with weights resident in VMEM."""
    batch, state_dim = state.shape
    action_dim = action.shape[1]
    latent_dim = noise.shape[1]
    hp = params["we2"].shape[0]
    head_pad = params["w_ml"].shape[1]
    act_pad = params["wd3"].shape[1]

    block_rows = _round_up(block_rows, 8)
    pb = _round_up(batch, 8)
    if pb <= block_rows:
        tb = pb
    else:
        tb = block_rows
        pb = _round_up(batch, tb)
    if pb != batch:
        pad = pb - batch
        state = jnp.pad(state, ((0, pad), (0, 0)))
        action = jnp.pad(action, ((0, pad), (0, 0)))
        noise = jnp.pad(noise, ((0, pad), (0, 0)))

    weight_args = (
        params["we1_s"], params["we1_a"], params["be1"],
        params["we2"], params["be2"],
        params["w_ml"], params["b_ml"],
        params["wd1_s"], params["wd1_z"], params["bd1"],
        params["wd2"], params["bd2"],
        params["wd3"], params["bd3"],
    )
    args = (state, action, noise) + weight_args

    def row_spec(feat):
        return pl.BlockSpec((tb, feat), lambda i: (i, 0))

    def const_spec(arr):
        return pl.BlockSpec(arr.shape, lambda i: (0, 0))   # weight stays resident

    in_specs = ([row_spec(state_dim), row_spec(action_dim), row_spec(latent_dim)]
                + [const_spec(w) for w in weight_args])
    out_specs = (row_spec(act_pad), row_spec(head_pad), row_spec(head_pad))
    out_shape = (
        jax.ShapeDtypeStruct((pb, act_pad), jnp.float32),   # u slab
        jax.ShapeDtypeStruct((pb, head_pad), jnp.float32),  # [mean | log_std] slab
        jax.ShapeDtypeStruct((pb, head_pad), jnp.float32),  # exp(clip(.)) slab
    )

    flops = 2 * pb * ((state_dim + action_dim) * hp + hp * hp + hp * head_pad
                      + (state_dim + latent_dim) * hp + hp * hp + hp * act_pad)
    bytes_accessed = (sum(int(np.prod(x.shape)) * x.dtype.itemsize for x in args)
                      + sum(int(np.prod(o.shape)) * 4 for o in out_shape))
    cost = pl.CostEstimate(flops=flops,
                           transcendentals=pb * (head_pad + act_pad),
                           bytes_accessed=bytes_accessed)

    kernel = functools.partial(_vae_kernel, float(max_action), latent_dim)
    u_slab, mean_slab, std_slab = pl.pallas_call(
        kernel,
        grid=(pb // tb,),
        in_specs=in_specs,
        out_specs=out_specs,
        out_shape=out_shape,
        compiler_params=pltpu.CompilerParams(
            dimension_semantics=("parallel",),
            vmem_limit_bytes=32 * 1024 * 1024),
        cost_estimate=cost,
    )(*args)

    u = u_slab[:batch, :action_dim]
    mean = mean_slab[:batch, :latent_dim]
    std = std_slab[:batch, latent_dim:2 * latent_dim]
    return u, mean, std


def _init_linear(key, fan_in, fan_out):
    """PyTorch-style nn.Linear init, weight stored as (in, out)."""
    kw, kb = jax.random.split(key)
    bound = 1.0 / np.sqrt(fan_in)
    w = jax.random.uniform(kw, (fan_in, fan_out), jnp.float32, -bound, bound)
    b = jax.random.uniform(kb, (1, fan_out), jnp.float32, -bound, bound)
    return w, b


def make_params(key, state_dim, action_dim, latent_dim, weight_dtype=jnp.bfloat16):
    """Builds padded / fused parameters.  Zero padding keeps the math exact."""
    hp = HIDDEN_PAD
    head_pad = _round_up(2 * latent_dim, 128)
    act_pad = _round_up(action_dim, 128)

    keys = jax.random.split(key, 7)
    we1, be1 = _init_linear(keys[0], state_dim + action_dim, HIDDEN)
    we2, be2 = _init_linear(keys[1], HIDDEN, HIDDEN)
    wm, bm = _init_linear(keys[2], HIDDEN, latent_dim)
    wls, bls = _init_linear(keys[3], HIDDEN, latent_dim)
    wd1, bd1 = _init_linear(keys[4], state_dim + latent_dim, HIDDEN)
    wd2, bd2 = _init_linear(keys[5], HIDDEN, HIDDEN)
    wd3, bd3 = _init_linear(keys[6], HIDDEN, action_dim)

    def pad_to(x, rows, cols):
        return jnp.pad(x, ((0, rows - x.shape[0]), (0, cols - x.shape[1])))

    w_ml = jnp.concatenate([wm, wls], axis=1)   # fused mean/log_std head
    b_ml = jnp.concatenate([bm, bls], axis=1)

    wd = weight_dtype
    return {
        # split the concat-facing weights so the kernel avoids concatenation
        "we1_s": pad_to(we1[:state_dim], state_dim, hp).astype(wd),
        "we1_a": pad_to(we1[state_dim:], action_dim, hp).astype(wd),
        "be1":   pad_to(be1, 1, hp),
        "we2":   pad_to(we2, hp, hp).astype(wd),
        "be2":   pad_to(be2, 1, hp),
        "w_ml":  pad_to(w_ml, hp, head_pad).astype(wd),
        "b_ml":  pad_to(b_ml, 1, head_pad),
        "wd1_s": pad_to(wd1[:state_dim], state_dim, hp).astype(wd),
        "wd1_z": pad_to(wd1[state_dim:], latent_dim, hp).astype(wd),
        "bd1":   pad_to(bd1, 1, hp),
        "wd2":   pad_to(wd2, hp, hp).astype(wd),
        "bd2":   pad_to(bd2, 1, hp),
        "wd3":   pad_to(wd3, hp, act_pad).astype(wd),
        "bd3":   pad_to(bd3, 1, act_pad),
    }


def vae_reference(params, state, action, noise, max_action):
    """Pure-JAX reference (mirrors the kernel's weight dtype exactly)."""
    action_dim = params["we1_a"].shape[0]
    latent_dim = params["wd1_z"].shape[0]

    def mm(x, w):
        return jnp.dot(x.astype(w.dtype), w, preferred_element_type=jnp.float32)

    h = jax.nn.relu(mm(state, params["we1_s"]) + mm(action, params["we1_a"]) + params["be1"])
    h = jax.nn.relu(mm(h, params["we2"]) + params["be2"])
    ml = mm(h, params["w_ml"]) + params["b_ml"]
    mean = ml[:, :latent_dim]
    log_std = jnp.clip(ml[:, latent_dim:2 * latent_dim], -4.0, 15.0)
    std = jnp.exp(log_std)
    z = mean + std * noise
    d = jax.nn.relu(mm(state, params["wd1_s"]) + mm(z, params["wd1_z"]) + params["bd1"])
    d = jax.nn.relu(mm(d, params["wd2"]) + params["bd2"])
    u = max_action * jnp.tanh(mm(d, params["wd3"]) + params["bd3"])
    return u[:, :action_dim], mean, std


if __name__ == "__main__":
    state_dim, action_dim = 8, 4
    latent_dim = 2 * action_dim   # BCQ convention
    max_action = 1.0

    root = jax.random.PRNGKey(0)
    k_params, k_state, k_action, k_noise = jax.random.split(root, 4)

    def run_case(batch, weight_dtype, rtol, atol):
        params = make_params(k_params, state_dim, action_dim, latent_dim,
                             weight_dtype=weight_dtype)
        state = jax.random.normal(k_state, (batch, state_dim), jnp.float32)
        action = jax.random.normal(k_action, (batch, action_dim), jnp.float32)
        # torch drew np.random.normal at runtime; here it is a deterministic input
        noise = jax.random.normal(k_noise, (batch, latent_dim), jnp.float32)

        out = jax.block_until_ready(
            vae_forward(params, state, action, noise, max_action))
        ref = vae_reference(params, state, action, noise, max_action)
        for got, want in zip(out, ref):
            np.testing.assert_allclose(np.asarray(got), np.asarray(want),
                                       rtol=rtol, atol=atol)

    # exact-math check (f32 weights), tiny batch
    run_case(batch=2, weight_dtype=jnp.float32, rtol=1e-4, atol=1e-5)
    # bf16 weights: the HBM-traffic-optimized path (MXU accumulates in f32)
    run_case(batch=2, weight_dtype=jnp.bfloat16, rtol=1e-2, atol=1e-2)
    # multi-tile grid: 1024 rows -> 2 batch tiles of 512, weights stay resident
    run_case(batch=1024, weight_dtype=jnp.bfloat16, rtol=1e-2, atol=1e-2)

    print("KERNEL_OK")
</pallas_src>

<mosaic_0001>
module attributes {stable_mosaic.version = 11 : i64} {
  func.func @_vae_kernel(%arg0: i32, %arg1: memref<8x8xf32, #tpu.memory_space<vmem>>, %arg2: memref<8x4xf32, #tpu.memory_space<vmem>>, %arg3: memref<8x8xf32, #tpu.memory_space<vmem>>, %arg4: memref<8x768xf32, #tpu.memory_space<vmem>>, %arg5: memref<4x768xf32, #tpu.memory_space<vmem>>, %arg6: memref<1x768xf32, #tpu.memory_space<vmem>>, %arg7: memref<768x768xf32, #tpu.memory_space<vmem>>, %arg8: memref<1x768xf32, #tpu.memory_space<vmem>>, %arg9: memref<768x128xf32, #tpu.memory_space<vmem>>, %arg10: memref<1x128xf32, #tpu.memory_space<vmem>>, %arg11: memref<8x768xf32, #tpu.memory_space<vmem>>, %arg12: memref<8x768xf32, #tpu.memory_space<vmem>>, %arg13: memref<1x768xf32, #tpu.memory_space<vmem>>, %arg14: memref<768x768xf32, #tpu.memory_space<vmem>>, %arg15: memref<1x768xf32, #tpu.memory_space<vmem>>, %arg16: memref<768x128xf32, #tpu.memory_space<vmem>>, %arg17: memref<1x128xf32, #tpu.memory_space<vmem>>, %arg18: memref<8x128xf32, #tpu.memory_space<vmem>>, %arg19: memref<8x128xf32, #tpu.memory_space<vmem>>, %arg20: memref<8x128xf32, #tpu.memory_space<vmem>>) attributes {dimension_semantics = [#tpu.dimension_semantics<parallel>], iteration_bounds = array<i64: 1>, scalar_prefetch = 0 : i64, scratch_operands = 0 : i64, tpu.core_type = #tpu.core_type<tc>, window_params = [{transform_indices = @transform_0, window_bounds = array<i64: 8, 8>}, {transform_indices = @transform_1, window_bounds = array<i64: 8, 4>}, {transform_indices = @transform_2, window_bounds = array<i64: 8, 8>}, {pipeline_mode = #tpu.pipeline_mode<synchronous>, transform_indices = @transform_3, window_bounds = array<i64: 8, 768>}, {pipeline_mode = #tpu.pipeline_mode<synchronous>, transform_indices = @transform_4, window_bounds = array<i64: 4, 768>}, {pipeline_mode = #tpu.pipeline_mode<synchronous>, transform_indices = @transform_5, window_bounds = array<i64: 1, 768>}, {pipeline_mode = #tpu.pipeline_mode<synchronous>, transform_indices = @transform_6, window_bounds = array<i64: 768, 768>}, {pipeline_mode = #tpu.pipeline_mode<synchronous>, transform_indices = @transform_7, window_bounds = array<i64: 1, 768>}, {pipeline_mode = #tpu.pipeline_mode<synchronous>, transform_indices = @transform_8, window_bounds = array<i64: 768, 128>}, {pipeline_mode = #tpu.pipeline_mode<synchronous>, transform_indices = @transform_9, window_bounds = array<i64: 1, 128>}, {pipeline_mode = #tpu.pipeline_mode<synchronous>, transform_indices = @transform_10, window_bounds = array<i64: 8, 768>}, {pipeline_mode = #tpu.pipeline_mode<synchronous>, transform_indices = @transform_11, window_bounds = array<i64: 8, 768>}, {pipeline_mode = #tpu.pipeline_mode<synchronous>, transform_indices = @transform_12, window_bounds = array<i64: 1, 768>}, {pipeline_mode = #tpu.pipeline_mode<synchronous>, transform_indices = @transform_13, window_bounds = array<i64: 768, 768>}, {pipeline_mode = #tpu.pipeline_mode<synchronous>, transform_indices = @transform_14, window_bounds = array<i64: 1, 768>}, {pipeline_mode = #tpu.pipeline_mode<synchronous>, transform_indices = @transform_15, window_bounds = array<i64: 768, 128>}, {pipeline_mode = #tpu.pipeline_mode<synchronous>, transform_indices = @transform_16, window_bounds = array<i64: 1, 128>}, {transform_indices = @transform_17, window_bounds = array<i64: 8, 128>}, {transform_indices = @transform_18, window_bounds = array<i64: 8, 128>}, {transform_indices = @transform_19, window_bounds = array<i64: 8, 128>}]} {
    %c0 = arith.constant 0 : index
    %c0_0 = arith.constant 0 : index
    %0 = vector.load %arg1[%c0, %c0_0] : memref<8x8xf32, #tpu.memory_space<vmem>>, vector<8x8xf32>
    %c0_1 = arith.constant 0 : index
    %c0_2 = arith.constant 0 : index
    %1 = vector.load %arg2[%c0_1, %c0_2] : memref<8x4xf32, #tpu.memory_space<vmem>>, vector<8x4xf32>
    %c0_3 = arith.constant 0 : index
    %c0_4 = arith.constant 0 : index
    %2 = vector.load %arg3[%c0_3, %c0_4] : memref<8x8xf32, #tpu.memory_space<vmem>>, vector<8x8xf32>
    %c0_5 = arith.constant 0 : index
    %c0_6 = arith.constant 0 : index
    %3 = vector.load %arg4[%c0_5, %c0_6] : memref<8x768xf32, #tpu.memory_space<vmem>>, vector<8x768xf32>
    %cst = arith.constant dense<0.000000e+00> : vector<8x768xf32>
    %4 = tpu.matmul %0, %3, %cst {dimension_numbers = #tpu.dot_dimension_numbers<[1], [0], [0], [1], [0, 0, 1, 1], [], []>} : vector<8x8xf32>, vector<8x768xf32>, vector<8x768xf32> -> vector<8x768xf32>
    %c0_7 = arith.constant 0 : index
    %c0_8 = arith.constant 0 : index
    %5 = vector.load %arg5[%c0_7, %c0_8] : memref<4x768xf32, #tpu.memory_space<vmem>>, vector<4x768xf32>
    %cst_9 = arith.constant dense<0.000000e+00> : vector<8x768xf32>
    %6 = tpu.matmul %1, %5, %cst_9 {dimension_numbers = #tpu.dot_dimension_numbers<[1], [0], [0], [1], [0, 0, 1, 1], [], []>} : vector<8x4xf32>, vector<4x768xf32>, vector<8x768xf32> -> vector<8x768xf32>
    %7 = arith.addf %4, %6 : vector<8x768xf32>
    %c0_10 = arith.constant 0 : index
    %c0_11 = arith.constant 0 : index
    %8 = vector.load %arg6[%c0_10, %c0_11] : memref<1x768xf32, #tpu.memory_space<vmem>>, vector<1x768xf32>
    %9 = vector.broadcast %8 : vector<1x768xf32> to vector<8x768xf32>
    %10 = arith.addf %7, %9 : vector<8x768xf32>
    %cst_12 = arith.constant 0.000000e+00 : f32
    %11 = vector.broadcast %cst_12 : f32 to vector<8x768xf32>
    %12 = arith.maximumf %10, %11 : vector<8x768xf32>
    %c0_13 = arith.constant 0 : index
    %c0_14 = arith.constant 0 : index
    %13 = vector.load %arg7[%c0_13, %c0_14] : memref<768x768xf32, #tpu.memory_space<vmem>>, vector<768x768xf32>
    %cst_15 = arith.constant dense<0.000000e+00> : vector<8x768xf32>
    %14 = tpu.matmul %12, %13, %cst_15 {dimension_numbers = #tpu.dot_dimension_numbers<[1], [0], [0], [1], [0, 0, 1, 1], [], []>} : vector<8x768xf32>, vector<768x768xf32>, vector<8x768xf32> -> vector<8x768xf32>
    %c0_16 = arith.constant 0 : index
    %c0_17 = arith.constant 0 : index
    %15 = vector.load %arg8[%c0_16, %c0_17] : memref<1x768xf32, #tpu.memory_space<vmem>>, vector<1x768xf32>
    %16 = vector.broadcast %15 : vector<1x768xf32> to vector<8x768xf32>
    %17 = arith.addf %14, %16 : vector<8x768xf32>
    %cst_18 = arith.constant 0.000000e+00 : f32
    %18 = vector.broadcast %cst_18 : f32 to vector<8x768xf32>
    %19 = arith.maximumf %17, %18 : vector<8x768xf32>
    %c0_19 = arith.constant 0 : index
    %c0_20 = arith.constant 0 : index
    %20 = vector.load %arg9[%c0_19, %c0_20] : memref<768x128xf32, #tpu.memory_space<vmem>>, vector<768x128xf32>
    %cst_21 = arith.constant dense<0.000000e+00> : vector<8x128xf32>
    %21 = tpu.matmul %19, %20, %cst_21 {dimension_numbers = #tpu.dot_dimension_numbers<[1], [0], [0], [1], [0, 0, 1, 1], [], []>} : vector<8x768xf32>, vector<768x128xf32>, vector<8x128xf32> -> vector<8x128xf32>
    %c0_22 = arith.constant 0 : index
    %c0_23 = arith.constant 0 : index
    %22 = vector.load %arg10[%c0_22, %c0_23] : memref<1x128xf32, #tpu.memory_space<vmem>>, vector<1x128xf32>
    %23 = vector.broadcast %22 : vector<1x128xf32> to vector<8x128xf32>
    %24 = arith.addf %21, %23 : vector<8x128xf32>
    %cst_24 = arith.constant -4.000000e+00 : f32
    %cst_25 = arith.constant 1.500000e+01 : f32
    %25 = vector.broadcast %cst_24 : f32 to vector<8x128xf32>
    %26 = arith.maximumf %25, %24 : vector<8x128xf32>
    %27 = vector.broadcast %cst_25 : f32 to vector<8x128xf32>
    %28 = arith.minimumf %27, %26 : vector<8x128xf32>
    %29 = math.exp %28 : vector<8x128xf32>
    %30 = vector.extract_strided_slice %24 {offsets = [0, 0], sizes = [8, 8], strides = [1, 1]} : vector<8x128xf32> to vector<8x8xf32>
    %31 = vector.extract_strided_slice %29 {offsets = [0, 8], sizes = [8, 8], strides = [1, 1]} : vector<8x128xf32> to vector<8x8xf32>
    %32 = arith.mulf %31, %2 : vector<8x8xf32>
    %33 = arith.addf %30, %32 : vector<8x8xf32>
    %c0_26 = arith.constant 0 : index
    %c0_27 = arith.constant 0 : index
    %34 = vector.load %arg11[%c0_26, %c0_27] : memref<8x768xf32, #tpu.memory_space<vmem>>, vector<8x768xf32>
    %cst_28 = arith.constant dense<0.000000e+00> : vector<8x768xf32>
    %35 = tpu.matmul %0, %34, %cst_28 {dimension_numbers = #tpu.dot_dimension_numbers<[1], [0], [0], [1], [0, 0, 1, 1], [], []>} : vector<8x8xf32>, vector<8x768xf32>, vector<8x768xf32> -> vector<8x768xf32>
    %c0_29 = arith.constant 0 : index
    %c0_30 = arith.constant 0 : index
    %36 = vector.load %arg12[%c0_29, %c0_30] : memref<8x768xf32, #tpu.memory_space<vmem>>, vector<8x768xf32>
    %cst_31 = arith.constant dense<0.000000e+00> : vector<8x768xf32>
    %37 = tpu.matmul %33, %36, %cst_31 {dimension_numbers = #tpu.dot_dimension_numbers<[1], [0], [0], [1], [0, 0, 1, 1], [], []>} : vector<8x8xf32>, vector<8x768xf32>, vector<8x768xf32> -> vector<8x768xf32>
    %38 = arith.addf %35, %37 : vector<8x768xf32>
    %c0_32 = arith.constant 0 : index
    %c0_33 = arith.constant 0 : index
    %39 = vector.load %arg13[%c0_32, %c0_33] : memref<1x768xf32, #tpu.memory_space<vmem>>, vector<1x768xf32>
    %40 = vector.broadcast %39 : vector<1x768xf32> to vector<8x768xf32>
    %41 = arith.addf %38, %40 : vector<8x768xf32>
    %cst_34 = arith.constant 0.000000e+00 : f32
    %42 = vector.broadcast %cst_34 : f32 to vector<8x768xf32>
    %43 = arith.maximumf %41, %42 : vector<8x768xf32>
    %c0_35 = arith.constant 0 : index
    %c0_36 = arith.constant 0 : index
    %44 = vector.load %arg14[%c0_35, %c0_36] : memref<768x768xf32, #tpu.memory_space<vmem>>, vector<768x768xf32>
    %cst_37 = arith.constant dense<0.000000e+00> : vector<8x768xf32>
    %45 = tpu.matmul %43, %44, %cst_37 {dimension_numbers = #tpu.dot_dimension_numbers<[1], [0], [0], [1], [0, 0, 1, 1], [], []>} : vector<8x768xf32>, vector<768x768xf32>, vector<8x768xf32> -> vector<8x768xf32>
    %c0_38 = arith.constant 0 : index
    %c0_39 = arith.constant 0 : index
    %46 = vector.load %arg15[%c0_38, %c0_39] : memref<1x768xf32, #tpu.memory_space<vmem>>, vector<1x768xf32>
    %47 = vector.broadcast %46 : vector<1x768xf32> to vector<8x768xf32>
    %48 = arith.addf %45, %47 : vector<8x768xf32>
    %cst_40 = arith.constant 0.000000e+00 : f32
    %49 = vector.broadcast %cst_40 : f32 to vector<8x768xf32>
    %50 = arith.maximumf %48, %49 : vector<8x768xf32>
    %c0_41 = arith.constant 0 : index
    %c0_42 = arith.constant 0 : index
    %51 = vector.load %arg16[%c0_41, %c0_42] : memref<768x128xf32, #tpu.memory_space<vmem>>, vector<768x128xf32>
    %cst_43 = arith.constant dense<0.000000e+00> : vector<8x128xf32>
    %52 = tpu.matmul %50, %51, %cst_43 {dimension_numbers = #tpu.dot_dimension_numbers<[1], [0], [0], [1], [0, 0, 1, 1], [], []>} : vector<8x768xf32>, vector<768x128xf32>, vector<8x128xf32> -> vector<8x128xf32>
    %c0_44 = arith.constant 0 : index
    %c0_45 = arith.constant 0 : index
    %53 = vector.load %arg17[%c0_44, %c0_45] : memref<1x128xf32, #tpu.memory_space<vmem>>, vector<1x128xf32>
    %54 = vector.broadcast %53 : vector<1x128xf32> to vector<8x128xf32>
    %55 = arith.addf %52, %54 : vector<8x128xf32>
    %56 = math.tanh %55 : vector<8x128xf32>
    %cst_46 = arith.constant 1.000000e+00 : f32
    %57 = vector.broadcast %cst_46 : f32 to vector<8x128xf32>
    %58 = arith.mulf %57, %56 : vector<8x128xf32>
    %c0_47 = arith.constant 0 : index
    %c0_48 = arith.constant 0 : index
    %59 = vector.load %arg18[%c0_47, %c0_48] : memref<8x128xf32, #tpu.memory_space<vmem>>, vector<8x128xf32>
    tpu.vector_store %arg18[%c0_47, %c0_48], %58 {strides = array<i32>} : memref<8x128xf32, #tpu.memory_space<vmem>>, vector<8x128xf32>,
    %c0_49 = arith.constant 0 : index
    %c0_50 = arith.constant 0 : index
    %60 = vector.load %arg19[%c0_49, %c0_50] : memref<8x128xf32, #tpu.memory_space<vmem>>, vector<8x128xf32>
    tpu.vector_store %arg19[%c0_49, %c0_50], %24 {strides = array<i32>} : memref<8x128xf32, #tpu.memory_space<vmem>>, vector<8x128xf32>,
    %c0_51 = arith.constant 0 : index
    %c0_52 = arith.constant 0 : index
    %61 = vector.load %arg20[%c0_51, %c0_52] : memref<8x128xf32, #tpu.memory_space<vmem>>, vector<8x128xf32>
    tpu.vector_store %arg20[%c0_51, %c0_52], %29 {strides = array<i32>} : memref<8x128xf32, #tpu.memory_space<vmem>>, vector<8x128xf32>,
    return
  }
  func.func @transform_0(%arg0: i32) -> (i32, i32) {
    %c0_i32 = arith.constant 0 : i32
    %c0_i32_0 = arith.constant 0 : i32
    return %arg0, %c0_i32 : i32, i32
  }
  func.func @transform_1(%arg0: i32) -> (i32, i32) {
    %c0_i32 = arith.constant 0 : i32
    %c0_i32_0 = arith.constant 0 : i32
    return %arg0, %c0_i32 : i32, i32
  }
  func.func @transform_2(%arg0: i32) -> (i32, i32) {
    %c0_i32 = arith.constant 0 : i32
    %c0_i32_0 = arith.constant 0 : i32
    return %arg0, %c0_i32 : i32, i32
  }
  func.func @transform_3(%arg0: i32) -> (i32, i32) {
    %c0_i32 = arith.constant 0 : i32
    %c0_i32_0 = arith.constant 0 : i32
    %c0_i32_1 = arith.constant 0 : i32
    return %c0_i32, %c0_i32_0 : i32, i32
  }
  func.func @transform_4(%arg0: i32) -> (i32, i32) {
    %c0_i32 = arith.constant 0 : i32
    %c0_i32_0 = arith.constant 0 : i32
    %c0_i32_1 = arith.constant 0 : i32
    return %c0_i32, %c0_i32_0 : i32, i32
  }
  func.func @transform_5(%arg0: i32) -> (i32, i32) {
    %c0_i32 = arith.constant 0 : i32
    %c0_i32_0 = arith.constant 0 : i32
    %c0_i32_1 = arith.constant 0 : i32
    return %c0_i32, %c0_i32_0 : i32, i32
  }
  func.func @transform_6(%arg0: i32) -> (i32, i32) {
    %c0_i32 = arith.constant 0 : i32
    %c0_i32_0 = arith.constant 0 : i32
    %c0_i32_1 = arith.constant 0 : i32
    return %c0_i32, %c0_i32_0 : i32, i32
  }
  func.func @transform_7(%arg0: i32) -> (i32, i32) {
    %c0_i32 = arith.constant 0 : i32
    %c0_i32_0 = arith.constant 0 : i32
    %c0_i32_1 = arith.constant 0 : i32
    return %c0_i32, %c0_i32_0 : i32, i32
  }
  func.func @transform_8(%arg0: i32) -> (i32, i32) {
    %c0_i32 = arith.constant 0 : i32
    %c0_i32_0 = arith.constant 0 : i32
    %c0_i32_1 = arith.constant 0 : i32
    return %c0_i32, %c0_i32_0 : i32, i32
  }
  func.func @transform_9(%arg0: i32) -> (i32, i32) {
    %c0_i32 = arith.constant 0 : i32
    %c0_i32_0 = arith.constant 0 : i32
    %c0_i32_1 = arith.constant 0 : i32
    return %c0_i32, %c0_i32_0 : i32, i32
  }
  func.func @transform_10(%arg0: i32) -> (i32, i32) {
    %c0_i32 = arith.constant 0 : i32
    %c0_i32_0 = arith.constant 0 : i32
    %c0_i32_1 = arith.constant 0 : i32
    return %c0_i32, %c0_i32_0 : i32, i32
  }
  func.func @transform_11(%arg0: i32) -> (i32, i32) {
    %c0_i32 = arith.constant 0 : i32
    %c0_i32_0 = arith.constant 0 : i32
    %c0_i32_1 = arith.constant 0 : i32
    return %c0_i32, %c0_i32_0 : i32, i32
  }
  func.func @transform_12(%arg0: i32) -> (i32, i32) {
    %c0_i32 = arith.constant 0 : i32
    %c0_i32_0 = arith.constant 0 : i32
    %c0_i32_1 = arith.constant 0 : i32
    return %c0_i32, %c0_i32_0 : i32, i32
  }
  func.func @transform_13(%arg0: i32) -> (i32, i32) {
    %c0_i32 = arith.constant 0 : i32
    %c0_i32_0 = arith.constant 0 : i32
    %c0_i32_1 = arith.constant 0 : i32
    return %c0_i32, %c0_i32_0 : i32, i32
  }
  func.func @transform_14(%arg0: i32) -> (i32, i32) {
    %c0_i32 = arith.constant 0 : i32
    %c0_i32_0 = arith.constant 0 : i32
    %c0_i32_1 = arith.constant 0 : i32
    return %c0_i32, %c0_i32_0 : i32, i32
  }
  func.func @transform_15(%arg0: i32) -> (i32, i32) {
    %c0_i32 = arith.constant 0 : i32
    %c0_i32_0 = arith.constant 0 : i32
    %c0_i32_1 = arith.constant 0 : i32
    return %c0_i32, %c0_i32_0 : i32, i32
  }
  func.func @transform_16(%arg0: i32) -> (i32, i32) {
    %c0_i32 = arith.constant 0 : i32
    %c0_i32_0 = arith.constant 0 : i32
    %c0_i32_1 = arith.constant 0 : i32
    return %c0_i32, %c0_i32_0 : i32, i32
  }
  func.func @transform_17(%arg0: i32) -> (i32, i32) {
    %c0_i32 = arith.constant 0 : i32
    %c0_i32_0 = arith.constant 0 : i32
    return %arg0, %c0_i32 : i32, i32
  }
  func.func @transform_18(%arg0: i32) -> (i32, i32) {
    %c0_i32 = arith.constant 0 : i32
    %c0_i32_0 = arith.constant 0 : i32
    return %arg0, %c0_i32 : i32, i32
  }
  func.func @transform_19(%arg0: i32) -> (i32, i32) {
    %c0_i32 = arith.constant 0 : i32
    %c0_i32_0 = arith.constant 0 : i32
    return %arg0, %c0_i32 : i32, i32
  }
}

</mosaic_0001>

<llo_original>
// kernel: tpu_custom_call.1
$region0: #{tpu_custom_call.1}
  #allocation0 [shape = 'u32[]', space=smem, size = 0x4, offset = 0x4, fixed_abs, tag = 'smem constant byte address 0x4 - core index']
  #allocation1 [shape = 'u32[144,128]{1,0:T(1,128)}', space=vmem, size = 0x12000, scoped, tag = 'internal scratch']
  %s0 = inlined_call_operand.hbm [shape: f32[8,8], index: 0, kind: input, shape index: {}]
  %s1 = inlined_call_operand.vmem [shape: f32[8,4], index: 1, kind: input, shape index: {}]
  %s2 = inlined_call_operand.hbm [shape: f32[8,8], index: 2, kind: input, shape index: {}]
  %s3 = inlined_call_operand.hbm [shape: f32[8,768], index: 3, kind: input, shape index: {}]
  %s4 = inlined_call_operand.hbm [shape: f32[4,768], index: 4, kind: input, shape index: {}]
  %s5 = inlined_call_operand.hbm [shape: f32[1,768], index: 5, kind: input, shape index: {}]
  %s6 = inlined_call_operand.hbm [shape: f32[768,768], index: 6, kind: input, shape index: {}]
  %s7 = inlined_call_operand.hbm [shape: f32[1,768], index: 7, kind: input, shape index: {}]
  %s8 = inlined_call_operand.hbm [shape: f32[768,128], index: 8, kind: input, shape index: {}]
  %s9 = inlined_call_operand.hbm [shape: f32[1,128], index: 9, kind: input, shape index: {}]
  %s10 = inlined_call_operand.hbm [shape: f32[8,768], index: 10, kind: input, shape index: {}]
  %s11 = inlined_call_operand.hbm [shape: f32[8,768], index: 11, kind: input, shape index: {}]
  %s12 = inlined_call_operand.hbm [shape: f32[1,768], index: 12, kind: input, shape index: {}]
  %s13 = inlined_call_operand.hbm [shape: f32[768,768], index: 13, kind: input, shape index: {}]
  %s14 = inlined_call_operand.hbm [shape: f32[1,768], index: 14, kind: input, shape index: {}]
  %s15 = inlined_call_operand.hbm [shape: f32[768,128], index: 15, kind: input, shape index: {}]
  %s16 = inlined_call_operand.hbm [shape: f32[1,128], index: 16, kind: input, shape index: {}]
  %s17 = inlined_call_operand.hbm [shape: f32[8,128], index: 17, kind: output, shape index: {0}]
  %s18 = inlined_call_operand.hbm [shape: f32[8,128], index: 18, kind: output, shape index: {1}]
  %s19 = inlined_call_operand.hbm [shape: f32[8,128], index: 19, kind: output, shape index: {2}]
  %20 = xla_tuple %s17, %s18, %s19
  %s21 = sld [smem:[#allocation0]]
  $region158: #{tpu_custom_call.1} parent=0
    _
  %s23 = ssub.s32 1, %s21
  %s24 = scalar_select 0, %s23, %s21
  $region1: #{tpu_custom_call.1} parent=0
    #allocation2 [shape = 'u8[4096]{0}', space=vmem, size = 0x1000, scoped, tag = 'input window, operand 0, single buffered']
    #allocation3 [shape = 's32[1]{0}', space=sflag, size = 0x4, scoped, tag = 'scoped memory for tpu_custom_call.1']
    #allocation4 [shape = 's32[1]{0}', space=sflag, size = 0x4, scoped, tag = 'scoped memory for tpu_custom_call.1']
    #allocation5 [shape = 'u8[4096]{0}', space=vmem, size = 0x1000, scoped, tag = 'input window, operand 2, single buffered']
    #allocation6 [shape = 's32[1]{0}', space=sflag, size = 0x4, scoped, tag = 'scoped memory for tpu_custom_call.1']
    #allocation7 [shape = 'u8[24576]{0}', space=vmem, size = 0x6000, scoped, tag = 'input window, operand 3, single buffered']
    #allocation8 [shape = 'u8[12288]{0}', space=vmem, size = 0x3000, scoped, tag = 'input window, operand 4, single buffered']
    #allocation9 [shape = 's32[1]{0}', space=sflag, size = 0x4, scoped, tag = 'scoped memory for tpu_custom_call.1']
    #allocation10 [shape = 'u8[3072]{0}', space=vmem, size = 0xc00, scoped, tag = 'input window, operand 5, single buffered']
    #allocation11 [shape = 'u8[2359296]{0}', space=vmem, size = 0x240000, scoped, tag = 'input window, operand 6, single buffered']
    #allocation12 [shape = 's32[1]{0}', space=sflag, size = 0x4, scoped, tag = 'scoped memory for tpu_custom_call.1']
    #allocation13 [shape = 'u8[3072]{0}', space=vmem, size = 0xc00, scoped, tag = 'input window, operand 7, single buffered']
    #allocation14 [shape = 'u8[393216]{0}', space=vmem, size = 0x60000, scoped, tag = 'input window, operand 8, single buffered']
    #allocation15 [shape = 's32[1]{0}', space=sflag, size = 0x4, scoped, tag = 'scoped memory for tpu_custom_call.1']
    #allocation16 [shape = 'u8[512]{0}', space=vmem, size = 0x400, scoped, tag = 'input window, operand 9, single buffered']
    #allocation17 [shape = 'u8[24576]{0}', space=vmem, size = 0x6000, scoped, tag = 'input window, operand 10, single buffered']
    #allocation18 [shape = 's32[1]{0}', space=sflag, size = 0x4, scoped, tag = 'scoped memory for tpu_custom_call.1']
    #allocation19 [shape = 'u8[24576]{0}', space=vmem, size = 0x6000, scoped, tag = 'input window, operand 11, single buffered']
    #allocation20 [shape = 'u8[3072]{0}', space=vmem, size = 0xc00, scoped, tag = 'input window, operand 12, single buffered']
    #allocation21 [shape = 's32[1]{0}', space=sflag, size = 0x4, scoped, tag = 'scoped memory for tpu_custom_call.1']
    #allocation22 [shape = 'u8[2359296]{0}', space=vmem, size = 0x240000, scoped, tag = 'input window, operand 13, single buffered']
    #allocation23 [shape = 'u8[3072]{0}', space=vmem, size = 0xc00, scoped, tag = 'input window, operand 14, single buffered']
    #allocation24 [shape = 's32[1]{0}', space=sflag, size = 0x4, scoped, tag = 'scoped memory for tpu_custom_call.1']
    #allocation25 [shape = 'u8[393216]{0}', space=vmem, size = 0x60000, scoped, tag = 'input window, operand 15, single buffered']
    #allocation26 [shape = 'u8[512]{0}', space=vmem, size = 0x400, scoped, tag = 'input window, operand 16, single buffered']
    #allocation27 [shape = 's32[1]{0}', space=sflag, size = 0x4, scoped, tag = 'scoped memory for tpu_custom_call.1']
    #allocation28 [shape = 'u8[4096]{0}', space=vmem, size = 0x1000, scoped, tag = 'output window, operand 0, single buffered']
    #allocation29 [shape = 'u8[4096]{0}', space=vmem, size = 0x1000, scoped, tag = 'output window, operand 1, single buffered']
    #allocation30 [shape = 's32[1]{0}', space=sflag, size = 0x4, scoped, tag = 'scoped memory for tpu_custom_call.1']
    #allocation31 [shape = 'u8[4096]{0}', space=vmem, size = 0x1000, scoped, tag = 'output window, operand 2, single buffered']
    %25 = vsyncpa [#allocation3], 0
    %26 = vsyncpa [#allocation6], 0
    %27 = vsyncpa [#allocation9], 0
    %28 = vsyncpa [#allocation12], 0
    %29 = vsyncpa [#allocation15], 0
    %30 = vsyncpa [#allocation18], 0
    %31 = vsyncpa [#allocation21], 0
    %32 = vsyncpa [#allocation24], 0
    %33 = vsyncpa [#allocation27], 0
    %34 = vsyncpa [#allocation4], 0
    %35 = vsyncpa [#allocation30], 0
    // Predicated region
    $region2: #{tpu_custom_call.1} parent=1 // pred_check
      _
    $region3: #{tpu_custom_call.1} parent=1 // pred_check_branch
      %37 = sbr.rel (0) target = $region5
    $region4: #{tpu_custom_call.1} parent=1 // pred_region
      %s39 = ssub.s32 128, 128
      %40 = vsyncadd [#allocation3], %s39
      %s42 = sshll.u32 [#allocation2], 4
      %s43 = int_to_ptr.vmem [resolvable:$true] %s42
      %45 = dma.hbm_to_vmem [thread:$0]  %s0, 128, %s43, [#allocation3]
    $region5: #{tpu_custom_call.1} parent=1 // pred_fallthru
      _
    // Predicated region
    $region6: #{tpu_custom_call.1} parent=1 // pred_check
      _
    $region7: #{tpu_custom_call.1} parent=1 // pred_check_branch
      %47 = sbr.rel (0) target = $region9
    $region8: #{tpu_custom_call.1} parent=1 // pred_region
      _
    $region9: #{tpu_custom_call.1} parent=1 // pred_fallthru
      _
    // Predicated region
    $region10: #{tpu_custom_call.1} parent=1 // pred_check
      _
    $region11: #{tpu_custom_call.1} parent=1 // pred_check_branch
      %49 = sbr.rel (0) target = $region13
    $region12: #{tpu_custom_call.1} parent=1 // pred_region
      %s51 = ssub.s32 128, 128
      %52 = vsyncadd [#allocation6], %s51
      %s54 = sshll.u32 [#allocation5], 4
      %s55 = int_to_ptr.vmem [resolvable:$true] %s54
      %57 = dma.hbm_to_vmem [thread:$0]  %s2, 128, %s55, [#allocation6]
    $region13: #{tpu_custom_call.1} parent=1 // pred_fallthru
      _
    // Predicated region
    $region14: #{tpu_custom_call.1} parent=1 // pred_check
      _
    $region15: #{tpu_custom_call.1} parent=1 // pred_check_branch
      %59 = sbr.rel (0) target = $region17
    $region16: #{tpu_custom_call.1} parent=1 // pred_region
      %s61 = ssub.s32 768, 768
      %62 = vsyncadd [#allocation6], %s61
      %s64 = sshll.u32 [#allocation7], 4
      %s65 = int_to_ptr.vmem [resolvable:$true] %s64
      %67 = dma.hbm_to_vmem [thread:$0]  %s3, 768, %s65, [#allocation6]
    $region17: #{tpu_custom_call.1} parent=1 // pred_fallthru
      _
    // Predicated region
    $region18: #{tpu_custom_call.1} parent=1 // pred_check
      _
    $region19: #{tpu_custom_call.1} parent=1 // pred_check_branch
      %69 = sbr.rel (0) target = $region21
    $region20: #{tpu_custom_call.1} parent=1 // pred_region
      %s71 = ssub.s32 384, 384
      %72 = vsyncadd [#allocation9], %s71
      %s74 = sshll.u32 [#allocation8], 4
      %s75 = int_to_ptr.vmem [resolvable:$true] %s74
      %77 = dma.hbm_to_vmem [thread:$0]  %s4, 384, %s75, [#allocation9]
    $region21: #{tpu_custom_call.1} parent=1 // pred_fallthru
      _
    // Predicated region
    $region22: #{tpu_custom_call.1} parent=1 // pred_check
      _
    $region23: #{tpu_custom_call.1} parent=1 // pred_check_branch
      %79 = sbr.rel (0) target = $region25
    $region24: #{tpu_custom_call.1} parent=1 // pred_region
      %s81 = ssub.s32 96, 96
      %82 = vsyncadd [#allocation9], %s81
      %s84 = sshll.u32 [#allocation10], 4
      %s85 = int_to_ptr.vmem [resolvable:$true] %s84
      %87 = dma.hbm_to_vmem [thread:$0]  %s5, 96, %s85, [#allocation9]
    $region25: #{tpu_custom_call.1} parent=1 // pred_fallthru
      _
    // Predicated region
    $region26: #{tpu_custom_call.1} parent=1 // pred_check
      _
    $region27: #{tpu_custom_call.1} parent=1 // pred_check_branch
      %89 = sbr.rel (0) target = $region29
    $region28: #{tpu_custom_call.1} parent=1 // pred_region
      %s91 = ssub.s32 73728, 73728
      %92 = vsyncadd [#allocation12], %s91
      %s93 = sshll.u32 [#allocation11], 4
      %s94 = int_to_ptr.vmem [resolvable:$true] %s93
      %99 = dma.hbm_to_vmem [thread:$0]  %s6, 73728, %s94, [#allocation12], 768, 768, 48
    $region29: #{tpu_custom_call.1} parent=1 // pred_fallthru
      _
    // Predicated region
    $region30: #{tpu_custom_call.1} parent=1 // pred_check
      _
    $region31: #{tpu_custom_call.1} parent=1 // pred_check_branch
      %101 = sbr.rel (0) target = $region33
    $region32: #{tpu_custom_call.1} parent=1 // pred_region
      %s103 = ssub.s32 96, 96
      %104 = vsyncadd [#allocation12], %s103
      %s106 = sshll.u32 [#allocation13], 4
      %s107 = int_to_ptr.vmem [resolvable:$true] %s106
      %109 = dma.hbm_to_vmem [thread:$0]  %s7, 96, %s107, [#allocation12]
    $region33: #{tpu_custom_call.1} parent=1 // pred_fallthru
      _
    // Predicated region
    $region34: #{tpu_custom_call.1} parent=1 // pred_check
      _
    $region35: #{tpu_custom_call.1} parent=1 // pred_check_branch
      %111 = sbr.rel (0) target = $region37
    $region36: #{tpu_custom_call.1} parent=1 // pred_region
      %s113 = ssub.s32 12288, 12288
      %114 = vsyncadd [#allocation15], %s113
      %s115 = sshll.u32 [#allocation14], 4
      %s116 = int_to_ptr.vmem [resolvable:$true] %s115
      %121 = dma.hbm_to_vmem [thread:$0]  %s8, 12288, %s116, [#allocation15], 128, 128, 8
    $region37: #{tpu_custom_call.1} parent=1 // pred_fallthru
      _
    // Predicated region
    $region38: #{tpu_custom_call.1} parent=1 // pred_check
      _
    $region39: #{tpu_custom_call.1} parent=1 // pred_check_branch
      %123 = sbr.rel (0) target = $region41
    $region40: #{tpu_custom_call.1} parent=1 // pred_region
      %s125 = ssub.s32 16, 16
      %126 = vsyncadd [#allocation15], %s125
      %s128 = sshll.u32 [#allocation16], 4
      %s129 = int_to_ptr.vmem [resolvable:$true] %s128
      %131 = dma.hbm_to_vmem [thread:$0]  %s9, 16, %s129, [#allocation15]
    $region41: #{tpu_custom_call.1} parent=1 // pred_fallthru
      _
    // Predicated region
    $region42: #{tpu_custom_call.1} parent=1 // pred_check
      _
    $region43: #{tpu_custom_call.1} parent=1 // pred_check_branch
      %133 = sbr.rel (0) target = $region45
    $region44: #{tpu_custom_call.1} parent=1 // pred_region
      %s135 = ssub.s32 768, 768
      %136 = vsyncadd [#allocation18], %s135
      %s138 = sshll.u32 [#allocation17], 4
      %s139 = int_to_ptr.vmem [resolvable:$true] %s138
      %141 = dma.hbm_to_vmem [thread:$0]  %s10, 768, %s139, [#allocation18]
    $region45: #{tpu_custom_call.1} parent=1 // pred_fallthru
      _
    // Predicated region
    $region46: #{tpu_custom_call.1} parent=1 // pred_check
      _
    $region47: #{tpu_custom_call.1} parent=1 // pred_check_branch
      %143 = sbr.rel (0) target = $region49
    $region48: #{tpu_custom_call.1} parent=1 // pred_region
      %s145 = ssub.s32 768, 768
      %146 = vsyncadd [#allocation18], %s145
      %s148 = sshll.u32 [#allocation19], 4
      %s149 = int_to_ptr.vmem [resolvable:$true] %s148
      %151 = dma.hbm_to_vmem [thread:$0]  %s11, 768, %s149, [#allocation18]
    $region49: #{tpu_custom_call.1} parent=1 // pred_fallthru
      _
    // Predicated region
    $region50: #{tpu_custom_call.1} parent=1 // pred_check
      _
    $region51: #{tpu_custom_call.1} parent=1 // pred_check_branch
      %153 = sbr.rel (0) target = $region53
    $region52: #{tpu_custom_call.1} parent=1 // pred_region
      %s155 = ssub.s32 96, 96
      %156 = vsyncadd [#allocation21], %s155
      %s158 = sshll.u32 [#allocation20], 4
      %s159 = int_to_ptr.vmem [resolvable:$true] %s158
      %161 = dma.hbm_to_vmem [thread:$0]  %s12, 96, %s159, [#allocation21]
    $region53: #{tpu_custom_call.1} parent=1 // pred_fallthru
      _
    // Predicated region
    $region54: #{tpu_custom_call.1} parent=1 // pred_check
      _
    $region55: #{tpu_custom_call.1} parent=1 // pred_check_branch
      %163 = sbr.rel (0) target = $region57
    $region56: #{tpu_custom_call.1} parent=1 // pred_region
      %s165 = ssub.s32 73728, 73728
      %166 = vsyncadd [#allocation21], %s165
      %s167 = sshll.u32 [#allocation22], 4
      %s168 = int_to_ptr.vmem [resolvable:$true] %s167
      %173 = dma.hbm_to_vmem [thread:$0]  %s13, 73728, %s168, [#allocation21], 768, 768, 48
    $region57: #{tpu_custom_call.1} parent=1 // pred_fallthru
      _
    // Predicated region
    $region58: #{tpu_custom_call.1} parent=1 // pred_check
      _
    $region59: #{tpu_custom_call.1} parent=1 // pred_check_branch
      %175 = sbr.rel (0) target = $region61
    $region60: #{tpu_custom_call.1} parent=1 // pred_region
      %s177 = ssub.s32 96, 96
      %178 = vsyncadd [#allocation24], %s177
      %s180 = sshll.u32 [#allocation23], 4
      %s181 = int_to_ptr.vmem [resolvable:$true] %s180
      %183 = dma.hbm_to_vmem [thread:$0]  %s14, 96, %s181, [#allocation24]
    $region61: #{tpu_custom_call.1} parent=1 // pred_fallthru
      _
    // Predicated region
    $region62: #{tpu_custom_call.1} parent=1 // pred_check
      _
    $region63: #{tpu_custom_call.1} parent=1 // pred_check_branch
      %185 = sbr.rel (0) target = $region65
    $region64: #{tpu_custom_call.1} parent=1 // pred_region
      %s187 = ssub.s32 12288, 12288
      %188 = vsyncadd [#allocation24], %s187
      %s189 = sshll.u32 [#allocation25], 4
      %s190 = int_to_ptr.vmem [resolvable:$true] %s189
      %195 = dma.hbm_to_vmem [thread:$0]  %s15, 12288, %s190, [#allocation24], 128, 128, 8
    $region65: #{tpu_custom_call.1} parent=1 // pred_fallthru
      _
    // Predicated region
    $region66: #{tpu_custom_call.1} parent=1 // pred_check
      _
    $region67: #{tpu_custom_call.1} parent=1 // pred_check_branch
      %197 = sbr.rel (0) target = $region69
    $region68: #{tpu_custom_call.1} parent=1 // pred_region
      %s199 = ssub.s32 16, 16
      %200 = vsyncadd [#allocation27], %s199
      %s202 = sshll.u32 [#allocation26], 4
      %s203 = int_to_ptr.vmem [resolvable:$true] %s202
      %205 = dma.hbm_to_vmem [thread:$0]  %s16, 16, %s203, [#allocation27]
    $region69: #{tpu_custom_call.1} parent=1 // pred_fallthru
      _
    // Predicated region
    $region70: #{tpu_custom_call.1} parent=1 // pred_check
      _
    $region71: #{tpu_custom_call.1} parent=1 // pred_check_branch
      %207 = sbr.rel (0) target = $region73
    $region72: #{tpu_custom_call.1} parent=1 // pred_region
      %208 = dma.done [#allocation3], 128
    $region73: #{tpu_custom_call.1} parent=1 // pred_fallthru
      _
    // Predicated region
    $region74: #{tpu_custom_call.1} parent=1 // pred_check
      _
    $region75: #{tpu_custom_call.1} parent=1 // pred_check_branch
      %210 = sbr.rel (0) target = $region77
    $region76: #{tpu_custom_call.1} parent=1 // pred_region
      %211 = dma.done [#allocation6], 128
    $region77: #{tpu_custom_call.1} parent=1 // pred_fallthru
      _
    // Predicated region
    $region78: #{tpu_custom_call.1} parent=1 // pred_check
      _
    $region79: #{tpu_custom_call.1} parent=1 // pred_check_branch
      %213 = sbr.rel (0) target = $region81
    $region80: #{tpu_custom_call.1} parent=1 // pred_region
      %214 = dma.done [#allocation6], 768
    $region81: #{tpu_custom_call.1} parent=1 // pred_fallthru
      _
    // Predicated region
    $region82: #{tpu_custom_call.1} parent=1 // pred_check
      _
    $region83: #{tpu_custom_call.1} parent=1 // pred_check_branch
      %216 = sbr.rel (0) target = $region85
    $region84: #{tpu_custom_call.1} parent=1 // pred_region
      %217 = dma.done [#allocation9], 384
    $region85: #{tpu_custom_call.1} parent=1 // pred_fallthru
      _
    // Predicated region
    $region86: #{tpu_custom_call.1} parent=1 // pred_check
      _
    $region87: #{tpu_custom_call.1} parent=1 // pred_check_branch
      %219 = sbr.rel (0) target = $region89
    $region88: #{tpu_custom_call.1} parent=1 // pred_region
      %220 = dma.done [#allocation9], 96
    $region89: #{tpu_custom_call.1} parent=1 // pred_fallthru
      _
    // Predicated region
    $region90: #{tpu_custom_call.1} parent=1 // pred_check
      _
    $region91: #{tpu_custom_call.1} parent=1 // pred_check_branch
      %222 = sbr.rel (0) target = $region93
    $region92: #{tpu_custom_call.1} parent=1 // pred_region
      %223 = dma.done [#allocation12], 73728
    $region93: #{tpu_custom_call.1} parent=1 // pred_fallthru
      _
    // Predicated region
    $region94: #{tpu_custom_call.1} parent=1 // pred_check
      _
    $region95: #{tpu_custom_call.1} parent=1 // pred_check_branch
      %225 = sbr.rel (0) target = $region97
    $region96: #{tpu_custom_call.1} parent=1 // pred_region
      %226 = dma.done [#allocation12], 96
    $region97: #{tpu_custom_call.1} parent=1 // pred_fallthru
      _
    // Predicated region
    $region98: #{tpu_custom_call.1} parent=1 // pred_check
      _
    $region99: #{tpu_custom_call.1} parent=1 // pred_check_branch
      %228 = sbr.rel (0) target = $region101
    $region100: #{tpu_custom_call.1} parent=1 // pred_region
      %229 = dma.done [#allocation15], 12288
    $region101: #{tpu_custom_call.1} parent=1 // pred_fallthru
      _
    // Predicated region
    $region102: #{tpu_custom_call.1} parent=1 // pred_check
      _
    $region103: #{tpu_custom_call.1} parent=1 // pred_check_branch
      %231 = sbr.rel (0) target = $region105
    $region104: #{tpu_custom_call.1} parent=1 // pred_region
      %232 = dma.done [#allocation15], 16
    $region105: #{tpu_custom_call.1} parent=1 // pred_fallthru
      _
    // Predicated region
    $region106: #{tpu_custom_call.1} parent=1 // pred_check
      _
    $region107: #{tpu_custom_call.1} parent=1 // pred_check_branch
      %234 = sbr.rel (0) target = $region109
    $region108: #{tpu_custom_call.1} parent=1 // pred_region
      %235 = dma.done [#allocation18], 768
    $region109: #{tpu_custom_call.1} parent=1 // pred_fallthru
      _
    // Predicated region
    $region110: #{tpu_custom_call.1} parent=1 // pred_check
      _
    $region111: #{tpu_custom_call.1} parent=1 // pred_check_branch
      %237 = sbr.rel (0) target = $region113
    $region112: #{tpu_custom_call.1} parent=1 // pred_region
      %238 = dma.done [#allocation18], 768
    $region113: #{tpu_custom_call.1} parent=1 // pred_fallthru
      _
    // Predicated region
    $region114: #{tpu_custom_call.1} parent=1 // pred_check
      _
    $region115: #{tpu_custom_call.1} parent=1 // pred_check_branch
      %240 = sbr.rel (0) target = $region117
    $region116: #{tpu_custom_call.1} parent=1 // pred_region
      %241 = dma.done [#allocation21], 96
    $region117: #{tpu_custom_call.1} parent=1 // pred_fallthru
      _
    // Predicated region
    $region118: #{tpu_custom_call.1} parent=1 // pred_check
      _
    $region119: #{tpu_custom_call.1} parent=1 // pred_check_branch
      %243 = sbr.rel (0) target = $region121
    $region120: #{tpu_custom_call.1} parent=1 // pred_region
      %244 = dma.done [#allocation21], 73728
    $region121: #{tpu_custom_call.1} parent=1 // pred_fallthru
      _
    // Predicated region
    $region122: #{tpu_custom_call.1} parent=1 // pred_check
      _
    $region123: #{tpu_custom_call.1} parent=1 // pred_check_branch
      %246 = sbr.rel (0) target = $region125
    $region124: #{tpu_custom_call.1} parent=1 // pred_region
      %247 = dma.done [#allocation24], 96
    $region125: #{tpu_custom_call.1} parent=1 // pred_fallthru
      _
    // Predicated region
    $region126: #{tpu_custom_call.1} parent=1 // pred_check
      _
    $region127: #{tpu_custom_call.1} parent=1 // pred_check_branch
      %249 = sbr.rel (0) target = $region129
    $region128: #{tpu_custom_call.1} parent=1 // pred_region
      %250 = dma.done [#allocation24], 12288
    $region129: #{tpu_custom_call.1} parent=1 // pred_fallthru
      _
    // Predicated region
    $region130: #{tpu_custom_call.1} parent=1 // pred_check
      _
    $region131: #{tpu_custom_call.1} parent=1 // pred_check_branch
      %252 = sbr.rel (0) target = $region133
    $region132: #{tpu_custom_call.1} parent=1 // pred_region
      %253 = dma.done [#allocation27], 16
    $region133: #{tpu_custom_call.1} parent=1 // pred_fallthru
      _
    %v254 = vld [vmem:[#allocation2] sm:$0xff]
    %v255 = vld [vmem:[%s1] sm:$0xff]
    %v256 = vld [vmem:[#allocation5] sm:$0xff]
    %v257 = vld [vmem:[#allocation7] sm:$0xff]
    %v258 = vld [vmem:[#allocation7 + $0x8] sm:$0xff]
    %v259 = vld [vmem:[#allocation7 + $0x10] sm:$0xff]
    %v260 = vld [vmem:[#allocation7 + $0x18] sm:$0xff]
    %v261 = vld [vmem:[#allocation7 + $0x20] sm:$0xff]
    %v262 = vld [vmem:[#allocation7 + $0x28] sm:$0xff]
    %v263 = vld [vmem:[#allocation8] sm:$0xff]
    %v264 = vld [vmem:[#allocation8 + $0x8] sm:$0xff]
    %v265 = vld [vmem:[#allocation8 + $0x10] sm:$0xff]
    %v269 = vcombine.high %v263, %v263
    %v270 = vcombine.high %v264, %v264
    %v271 = vcombine.high %v265, %v265
    %vm272 = vcmask 31744
    %v274 = vsel %vm272, %v255, 0
    %vm276 = vcmask 1043456
    %v277 = vsel %vm276, %v263, 0
    %v279 = vsel %vm276, %v269, 0
    %v281 = vsel %vm276, %v264, 0
    %v283 = vsel %vm276, %v270, 0
    %v285 = vsel %vm276, %v265, 0
    %v287 = vsel %vm276, %v271, 0
    %289 = vmatprep.subr.mxu0 %v279
    %290 = vmatpush1.msra.mxu0 %v277
    %291 = vmatprep.subr.mxu0 0.0
    %292 = vmatpush1.msra.mxu0 0.0
    %293 = vmatprep.subr.mxu0 0.0
    %294 = vmatpush1.msra.mxu0 0.0
    %295 = vmatprep.subr.mxu0 0.0
    %296 = vmatpush1.msra.mxu0 0.0
    %297 = vmatprep.subr.mxu0 0.0
    %298 = vmatpush1.msra.mxu0 0.0
    %299 = vmatprep.subr.mxu0 0.0
    %300 = vmatpush1.msra.mxu0 0.0
    %301 = vmatprep.subr.mxu0 0.0
    %302 = vmatpush1.msra.mxu0 0.0
    %303 = vmatprep.subr.mxu0 0.0
    %304 = vmatpush1.msra.mxu0 0.0
    %305 = vmatprep.subr.mxu0 0.0
    %306 = vmatpush1.msra.mxu0 0.0
    %307 = vmatprep.subr.mxu0 0.0
    %308 = vmatpush1.msra.mxu0 0.0
    %309 = vmatprep.subr.mxu0 0.0
    %310 = vmatpush1.msra.mxu0 0.0
    %311 = vmatprep.subr.mxu0 0.0
    %312 = vmatpush1.msra.mxu0 0.0
    %313 = vmatprep.subr.mxu0 0.0
    %314 = vmatpush1.msra.mxu0 0.0
    %315 = vmatprep.subr.mxu0 0.0
    %316 = vmatpush1.msra.mxu0 0.0
    %317 = vmatprep.subr.mxu0 0.0
    %318 = vmatpush1.msra.mxu0 0.0
    %319 = vmatprep.subr.mxu0 0.0
    %320 = vmatpush1.msra.mxu0 0.0
    %321 = vmatprep.subr.mxu0 0.0
    %322 = vmatpush1.msra.mxu0 0.0
    %323 = vmatprep.subr.mxu0 0.0
    %324 = vmatpush1.msra.mxu0 0.0
    %325 = vmatprep.subr.mxu0 0.0
    %326 = vmatpush1.msra.mxu0 0.0
    %327 = vmatprep.subr.mxu0 0.0
    %328 = vmatpush1.msra.mxu0 0.0
    %329 = vmatprep.subr.mxu0 0.0
    %330 = vmatpush1.msra.mxu0 0.0
    %331 = vmatprep.subr.mxu0 0.0
    %332 = vmatpush1.msra.mxu0 0.0
    %333 = vmatprep.subr.mxu0 0.0
    %334 = vmatpush1.msra.mxu0 0.0
    %335 = vmatprep.subr.mxu0 0.0
    %336 = vmatpush1.msra.mxu0 0.0
    %337 = vmatprep.subr.mxu0 0.0
    %338 = vmatpush1.msra.mxu0 0.0
    %339 = vmatprep.subr.mxu0 0.0
    %340 = vmatpush1.msra.mxu0 0.0
    %341 = vmatprep.subr.mxu0 0.0
    %342 = vmatpush1.msra.mxu0 0.0
    %343 = vmatprep.subr.mxu0 0.0
    %344 = vmatpush1.msra.mxu0 0.0
    %345 = vmatprep.subr.mxu0 0.0
    %346 = vmatpush1.msra.mxu0 0.0
    %347 = vmatprep.subr.mxu0 0.0
    %348 = vmatpush1.msra.mxu0 0.0
    %349 = vmatprep.subr.mxu0 0.0
    %350 = vmatpush1.msra.mxu0 0.0
    %351 = vmatprep.subr.mxu0 0.0
    %352 = vmatpush1.msra.mxu0 0.0
    %353 = vmatprep.mubr.f32.mxu0 0.0
    %354 = vmatmul.mubr.f32.gmra.mrb[0].mxu0 %v274
    %v355 = vpop.f32.mrb[0].mxu0
    %v356 = vadd.f32 0.0, %v355
    %v357 = vpop.f32.mrb[0].mxu0
    %v358 = vadd.f32 0.0, %v357
    %359 = vdwg.mxu0
    %360 = vmatprep.subr.mxu0 %v283
    %361 = vmatpush1.msra.mxu0 %v281
    %362 = vmatprep.subr.mxu0 0.0
    %363 = vmatpush1.msra.mxu0 0.0
    %364 = vmatprep.subr.mxu0 0.0
    %365 = vmatpush1.msra.mxu0 0.0
    %366 = vmatprep.subr.mxu0 0.0
    %367 = vmatpush1.msra.mxu0 0.0
    %368 = vmatprep.subr.mxu0 0.0
    %369 = vmatpush1.msra.mxu0 0.0
    %370 = vmatprep.subr.mxu0 0.0
    %371 = vmatpush1.msra.mxu0 0.0
    %372 = vmatprep.subr.mxu0 0.0
    %373 = vmatpush1.msra.mxu0 0.0
    %374 = vmatprep.subr.mxu0 0.0
    %375 = vmatpush1.msra.mxu0 0.0
    %376 = vmatprep.subr.mxu0 0.0
    %377 = vmatpush1.msra.mxu0 0.0
    %378 = vmatprep.subr.mxu0 0.0
    %379 = vmatpush1.msra.mxu0 0.0
    %380 = vmatprep.subr.mxu0 0.0
    %381 = vmatpush1.msra.mxu0 0.0
    %382 = vmatprep.subr.mxu0 0.0
    %383 = vmatpush1.msra.mxu0 0.0
    %384 = vmatprep.subr.mxu0 0.0
    %385 = vmatpush1.msra.mxu0 0.0
    %386 = vmatprep.subr.mxu0 0.0
    %387 = vmatpush1.msra.mxu0 0.0
    %388 = vmatprep.subr.mxu0 0.0
    %389 = vmatpush1.msra.mxu0 0.0
    %390 = vmatprep.subr.mxu0 0.0
    %391 = vmatpush1.msra.mxu0 0.0
    %392 = vmatprep.subr.mxu0 0.0
    %393 = vmatpush1.msra.mxu0 0.0
    %394 = vmatprep.subr.mxu0 0.0
    %395 = vmatpush1.msra.mxu0 0.0
    %396 = vmatprep.subr.mxu0 0.0
    %397 = vmatpush1.msra.mxu0 0.0
    %398 = vmatprep.subr.mxu0 0.0
    %399 = vmatpush1.msra.mxu0 0.0
    %400 = vmatprep.subr.mxu0 0.0
    %401 = vmatpush1.msra.mxu0 0.0
    %402 = vmatprep.subr.mxu0 0.0
    %403 = vmatpush1.msra.mxu0 0.0
    %404 = vmatprep.subr.mxu0 0.0
    %405 = vmatpush1.msra.mxu0 0.0
    %406 = vmatprep.subr.mxu0 0.0
    %407 = vmatpush1.msra.mxu0 0.0
    %408 = vmatprep.subr.mxu0 0.0
    %409 = vmatpush1.msra.mxu0 0.0
    %410 = vmatprep.subr.mxu0 0.0
    %411 = vmatpush1.msra.mxu0 0.0
    %412 = vmatprep.subr.mxu0 0.0
    %413 = vmatpush1.msra.mxu0 0.0
    %414 = vmatprep.subr.mxu0 0.0
    %415 = vmatpush1.msra.mxu0 0.0
    %416 = vmatprep.subr.mxu0 0.0
    %417 = vmatpush1.msra.mxu0 0.0
    %418 = vmatprep.subr.mxu0 0.0
    %419 = vmatpush1.msra.mxu0 0.0
    %420 = vmatprep.subr.mxu0 0.0
    %421 = vmatpush1.msra.mxu0 0.0
    %422 = vmatprep.subr.mxu0 0.0
    %423 = vmatpush1.msra.mxu0 0.0
    %424 = vmatprep.mubr.f32.mxu0 0.0
    %425 = vmatmul.mubr.f32.gmra.mrb[0].mxu0 %v274
    %v426 = vpop.f32.mrb[0].mxu0
    %v427 = vadd.f32 0.0, %v426
    %v428 = vpop.f32.mrb[0].mxu0
    %v429 = vadd.f32 0.0, %v428
    %430 = vdwg.mxu0
    %431 = vmatprep.subr.mxu0 %v287
    %432 = vmatpush1.msra.mxu0 %v285
    %433 = vmatprep.subr.mxu0 0.0
    %434 = vmatpush1.msra.mxu0 0.0
    %435 = vmatprep.subr.mxu0 0.0
    %436 = vmatpush1.msra.mxu0 0.0
    %437 = vmatprep.subr.mxu0 0.0
    %438 = vmatpush1.msra.mxu0 0.0
    %439 = vmatprep.subr.mxu0 0.0
    %440 = vmatpush1.msra.mxu0 0.0
    %441 = vmatprep.subr.mxu0 0.0
    %442 = vmatpush1.msra.mxu0 0.0
    %443 = vmatprep.subr.mxu0 0.0
    %444 = vmatpush1.msra.mxu0 0.0
    %445 = vmatprep.subr.mxu0 0.0
    %446 = vmatpush1.msra.mxu0 0.0
    %447 = vmatprep.subr.mxu0 0.0
    %448 = vmatpush1.msra.mxu0 0.0
    %449 = vmatprep.subr.mxu0 0.0
    %450 = vmatpush1.msra.mxu0 0.0
    %451 = vmatprep.subr.mxu0 0.0
    %452 = vmatpush1.msra.mxu0 0.0
    %453 = vmatprep.subr.mxu0 0.0
    %454 = vmatpush1.msra.mxu0 0.0
    %455 = vmatprep.subr.mxu0 0.0
    %456 = vmatpush1.msra.mxu0 0.0
    %457 = vmatprep.subr.mxu0 0.0
    %458 = vmatpush1.msra.mxu0 0.0
    %459 = vmatprep.subr.mxu0 0.0
    %460 = vmatpush1.msra.mxu0 0.0
    %461 = vmatprep.subr.mxu0 0.0
    %462 = vmatpush1.msra.mxu0 0.0
    %463 = vmatprep.subr.mxu0 0.0
    %464 = vmatpush1.msra.mxu0 0.0
    %465 = vmatprep.subr.mxu0 0.0
    %466 = vmatpush1.msra.mxu0 0.0
    %467 = vmatprep.subr.mxu0 0.0
    %468 = vmatpush1.msra.mxu0 0.0
    %469 = vmatprep.subr.mxu0 0.0
    %470 = vmatpush1.msra.mxu0 0.0
    %471 = vmatprep.subr.mxu0 0.0
    %472 = vmatpush1.msra.mxu0 0.0
    %473 = vmatprep.subr.mxu0 0.0
    %474 = vmatpush1.msra.mxu0 0.0
    %475 = vmatprep.subr.mxu0 0.0
    %476 = vmatpush1.msra.mxu0 0.0
    %477 = vmatprep.subr.mxu0 0.0
    %478 = vmatpush1.msra.mxu0 0.0
    %479 = vmatprep.subr.mxu0 0.0
    %480 = vmatpush1.msra.mxu0 0.0
    %481 = vmatprep.subr.mxu0 0.0
    %482 = vmatpush1.msra.mxu0 0.0
    %483 = vmatprep.subr.mxu0 0.0
    %484 = vmatpush1.msra.mxu0 0.0
    %485 = vmatprep.subr.mxu0 0.0
    %486 = vmatpush1.msra.mxu0 0.0
    %487 = vmatprep.subr.mxu0 0.0
    %488 = vmatpush1.msra.mxu0 0.0
    %489 = vmatprep.subr.mxu0 0.0
    %490 = vmatpush1.msra.mxu0 0.0
    %491 = vmatprep.subr.mxu0 0.0
    %492 = vmatpush1.msra.mxu0 0.0
    %493 = vmatprep.subr.mxu0 0.0
    %494 = vmatpush1.msra.mxu0 0.0
    %495 = vmatprep.mubr.f32.mxu0 0.0
    %496 = vmatmul.mubr.f32.gmra.mrb[0].mxu0 %v274
    %v497 = vpop.f32.mrb[0].mxu0
    %v498 = vadd.f32 0.0, %v497
    %v499 = vpop.f32.mrb[0].mxu0
    %v500 = vadd.f32 0.0, %v499
    %501 = vdwg.mxu0
    %vm502 = vcmask 64512
    %v504 = vsel %vm502, %v254, 0
    %506 = vmatprep.subr.mxu0 %v258
    %507 = vmatpush1.msra.mxu0 %v257
    %508 = vmatprep.subr.mxu0 0.0
    %509 = vmatpush1.msra.mxu0 0.0
    %510 = vmatprep.subr.mxu0 0.0
    %511 = vmatpush1.msra.mxu0 0.0
    %512 = vmatprep.subr.mxu0 0.0
    %513 = vmatpush1.msra.mxu0 0.0
    %514 = vmatprep.subr.mxu0 0.0
    %515 = vmatpush1.msra.mxu0 0.0
    %516 = vmatprep.subr.mxu0 0.0
    %517 = vmatpush1.msra.mxu0 0.0
    %518 = vmatprep.subr.mxu0 0.0
    %519 = vmatpush1.msra.mxu0 0.0
    %520 = vmatprep.subr.mxu0 0.0
    %521 = vmatpush1.msra.mxu0 0.0
    %522 = vmatprep.subr.mxu0 0.0
    %523 = vmatpush1.msra.mxu0 0.0
    %524 = vmatprep.subr.mxu0 0.0
    %525 = vmatpush1.msra.mxu0 0.0
    %526 = vmatprep.subr.mxu0 0.0
    %527 = vmatpush1.msra.mxu0 0.0
    %528 = vmatprep.subr.mxu0 0.0
    %529 = vmatpush1.msra.mxu0 0.0
    %530 = vmatprep.subr.mxu0 0.0
    %531 = vmatpush1.msra.mxu0 0.0
    %532 = vmatprep.subr.mxu0 0.0
    %533 = vmatpush1.msra.mxu0 0.0
    %534 = vmatprep.subr.mxu0 0.0
    %535 = vmatpush1.msra.mxu0 0.0
    %536 = vmatprep.subr.mxu0 0.0
    %537 = vmatpush1.msra.mxu0 0.0
    %538 = vmatprep.subr.mxu0 0.0
    %539 = vmatpush1.msra.mxu0 0.0
    %540 = vmatprep.subr.mxu0 0.0
    %541 = vmatpush1.msra.mxu0 0.0
    %542 = vmatprep.subr.mxu0 0.0
    %543 = vmatpush1.msra.mxu0 0.0
    %544 = vmatprep.subr.mxu0 0.0
    %545 = vmatpush1.msra.mxu0 0.0
    %546 = vmatprep.subr.mxu0 0.0
    %547 = vmatpush1.msra.mxu0 0.0
    %548 = vmatprep.subr.mxu0 0.0
    %549 = vmatpush1.msra.mxu0 0.0
    %550 = vmatprep.subr.mxu0 0.0
    %551 = vmatpush1.msra.mxu0 0.0
    %552 = vmatprep.subr.mxu0 0.0
    %553 = vmatpush1.msra.mxu0 0.0
    %554 = vmatprep.subr.mxu0 0.0
    %555 = vmatpush1.msra.mxu0 0.0
    %556 = vmatprep.subr.mxu0 0.0
    %557 = vmatpush1.msra.mxu0 0.0
    %558 = vmatprep.subr.mxu0 0.0
    %559 = vmatpush1.msra.mxu0 0.0
    %560 = vmatprep.subr.mxu0 0.0
    %561 = vmatpush1.msra.mxu0 0.0
    %562 = vmatprep.subr.mxu0 0.0
    %563 = vmatpush1.msra.mxu0 0.0
    %564 = vmatprep.subr.mxu0 0.0
    %565 = vmatpush1.msra.mxu0 0.0
    %566 = vmatprep.subr.mxu0 0.0
    %567 = vmatpush1.msra.mxu0 0.0
    %568 = vmatprep.subr.mxu0 0.0
    %569 = vmatpush1.msra.mxu0 0.0
    %570 = vmatprep.mubr.f32.mxu0 0.0
    %571 = vmatmul.mubr.f32.gmra.mrb[0].mxu0 %v504
    %v572 = vpop.f32.mrb[0].mxu0
    %v573 = vadd.f32 %v356, %v572
    %v574 = vpop.f32.mrb[0].mxu0
    %v575 = vadd.f32 %v358, %v574
    %576 = vdwg.mxu0
    %577 = vmatprep.subr.mxu0 %v260
    %578 = vmatpush1.msra.mxu0 %v259
    %579 = vmatprep.subr.mxu0 0.0
    %580 = vmatpush1.msra.mxu0 0.0
    %581 = vmatprep.subr.mxu0 0.0
    %582 = vmatpush1.msra.mxu0 0.0
    %583 = vmatprep.subr.mxu0 0.0
    %584 = vmatpush1.msra.mxu0 0.0
    %585 = vmatprep.subr.mxu0 0.0
    %586 = vmatpush1.msra.mxu0 0.0
    %587 = vmatprep.subr.mxu0 0.0
    %588 = vmatpush1.msra.mxu0 0.0
    %589 = vmatprep.subr.mxu0 0.0
    %590 = vmatpush1.msra.mxu0 0.0
    %591 = vmatprep.subr.mxu0 0.0
    %592 = vmatpush1.msra.mxu0 0.0
    %593 = vmatprep.subr.mxu0 0.0
    %594 = vmatpush1.msra.mxu0 0.0
    %595 = vmatprep.subr.mxu0 0.0
    %596 = vmatpush1.msra.mxu0 0.0
    %597 = vmatprep.subr.mxu0 0.0
    %598 = vmatpush1.msra.mxu0 0.0
    %599 = vmatprep.subr.mxu0 0.0
    %600 = vmatpush1.msra.mxu0 0.0
    %601 = vmatprep.subr.mxu0 0.0
    %602 = vmatpush1.msra.mxu0 0.0
    %603 = vmatprep.subr.mxu0 0.0
    %604 = vmatpush1.msra.mxu0 0.0
    %605 = vmatprep.subr.mxu0 0.0
    %606 = vmatpush1.msra.mxu0 0.0
    %607 = vmatprep.subr.mxu0 0.0
    %608 = vmatpush1.msra.mxu0 0.0
    %609 = vmatprep.subr.mxu0 0.0
    %610 = vmatpush1.msra.mxu0 0.0
    %611 = vmatprep.subr.mxu0 0.0
    %612 = vmatpush1.msra.mxu0 0.0
    %613 = vmatprep.subr.mxu0 0.0
    %614 = vmatpush1.msra.mxu0 0.0
    %615 = vmatprep.subr.mxu0 0.0
    %616 = vmatpush1.msra.mxu0 0.0
    %617 = vmatprep.subr.mxu0 0.0
    %618 = vmatpush1.msra.mxu0 0.0
    %619 = vmatprep.subr.mxu0 0.0
    %620 = vmatpush1.msra.mxu0 0.0
    %621 = vmatprep.subr.mxu0 0.0
    %622 = vmatpush1.msra.mxu0 0.0
    %623 = vmatprep.subr.mxu0 0.0
    %624 = vmatpush1.msra.mxu0 0.0
    %625 = vmatprep.subr.mxu0 0.0
    %626 = vmatpush1.msra.mxu0 0.0
    %627 = vmatprep.subr.mxu0 0.0
    %628 = vmatpush1.msra.mxu0 0.0
    %629 = vmatprep.subr.mxu0 0.0
    %630 = vmatpush1.msra.mxu0 0.0
    %631 = vmatprep.subr.mxu0 0.0
    %632 = vmatpush1.msra.mxu0 0.0
    %633 = vmatprep.subr.mxu0 0.0
    %634 = vmatpush1.msra.mxu0 0.0
    %635 = vmatprep.subr.mxu0 0.0
    %636 = vmatpush1.msra.mxu0 0.0
    %637 = vmatprep.subr.mxu0 0.0
    %638 = vmatpush1.msra.mxu0 0.0
    %639 = vmatprep.subr.mxu0 0.0
    %640 = vmatpush1.msra.mxu0 0.0
    %641 = vmatprep.mubr.f32.mxu0 0.0
    %642 = vmatmul.mubr.f32.gmra.mrb[0].mxu0 %v504
    %v643 = vpop.f32.mrb[0].mxu0
    %v644 = vadd.f32 %v427, %v643
    %v645 = vpop.f32.mrb[0].mxu0
    %v646 = vadd.f32 %v429, %v645
    %647 = vdwg.mxu0
    %648 = vmatprep.subr.mxu0 %v262
    %649 = vmatpush1.msra.mxu0 %v261
    %650 = vmatprep.subr.mxu0 0.0
    %651 = vmatpush1.msra.mxu0 0.0
    %652 = vmatprep.subr.mxu0 0.0
    %653 = vmatpush1.msra.mxu0 0.0
    %654 = vmatprep.subr.mxu0 0.0
    %655 = vmatpush1.msra.mxu0 0.0
    %656 = vmatprep.subr.mxu0 0.0
    %657 = vmatpush1.msra.mxu0 0.0
    %658 = vmatprep.subr.mxu0 0.0
    %659 = vmatpush1.msra.mxu0 0.0
    %660 = vmatprep.subr.mxu0 0.0
    %661 = vmatpush1.msra.mxu0 0.0
    %662 = vmatprep.subr.mxu0 0.0
    %663 = vmatpush1.msra.mxu0 0.0
    %664 = vmatprep.subr.mxu0 0.0
    %665 = vmatpush1.msra.mxu0 0.0
    %666 = vmatprep.subr.mxu0 0.0
    %667 = vmatpush1.msra.mxu0 0.0
    %668 = vmatprep.subr.mxu0 0.0
    %669 = vmatpush1.msra.mxu0 0.0
    %670 = vmatprep.subr.mxu0 0.0
    %671 = vmatpush1.msra.mxu0 0.0
    %672 = vmatprep.subr.mxu0 0.0
    %673 = vmatpush1.msra.mxu0 0.0
    %674 = vmatprep.subr.mxu0 0.0
    %675 = vmatpush1.msra.mxu0 0.0
    %676 = vmatprep.subr.mxu0 0.0
    %677 = vmatpush1.msra.mxu0 0.0
    %678 = vmatprep.subr.mxu0 0.0
    %679 = vmatpush1.msra.mxu0 0.0
    %680 = vmatprep.subr.mxu0 0.0
    %681 = vmatpush1.msra.mxu0 0.0
    %682 = vmatprep.subr.mxu0 0.0
    %683 = vmatpush1.msra.mxu0 0.0
    %684 = vmatprep.subr.mxu0 0.0
    %685 = vmatpush1.msra.mxu0 0.0
    %686 = vmatprep.subr.mxu0 0.0
    %687 = vmatpush1.msra.mxu0 0.0
    %688 = vmatprep.subr.mxu0 0.0
    %689 = vmatpush1.msra.mxu0 0.0
    %690 = vmatprep.subr.mxu0 0.0
    %691 = vmatpush1.msra.mxu0 0.0
    %692 = vmatprep.subr.mxu0 0.0
    %693 = vmatpush1.msra.mxu0 0.0
    %694 = vmatprep.subr.mxu0 0.0
    %695 = vmatpush1.msra.mxu0 0.0
    %696 = vmatprep.subr.mxu0 0.0
    %697 = vmatpush1.msra.mxu0 0.0
    %698 = vmatprep.subr.mxu0 0.0
    %699 = vmatpush1.msra.mxu0 0.0
    %700 = vmatprep.subr.mxu0 0.0
    %701 = vmatpush1.msra.mxu0 0.0
    %702 = vmatprep.subr.mxu0 0.0
    %703 = vmatpush1.msra.mxu0 0.0
    %704 = vmatprep.subr.mxu0 0.0
    %705 = vmatpush1.msra.mxu0 0.0
    %706 = vmatprep.subr.mxu0 0.0
    %707 = vmatpush1.msra.mxu0 0.0
    %708 = vmatprep.subr.mxu0 0.0
    %709 = vmatpush1.msra.mxu0 0.0
    %710 = vmatprep.subr.mxu0 0.0
    %711 = vmatpush1.msra.mxu0 0.0
    %712 = vmatprep.mubr.f32.mxu0 0.0
    %713 = vmatmul.mubr.f32.gmra.mrb[0].mxu0 %v504
    %v714 = vpop.f32.mrb[0].mxu0
    %v715 = vadd.f32 %v498, %v714
    %v716 = vpop.f32.mrb[0].mxu0
    %v717 = vadd.f32 %v500, %v716
    %718 = vdwg.mxu0
    %v719 = vld [vmem:[#allocation10] sm:$0x3f]
    %v721 = vlaneseq
    %v722 = vshrl.u32 %v721, 7
    %v723 = vsub.s32 0, %v722
    %v724 = vrot.slane %v719, %v723
    %v725 = vlaneseq
    %v726 = vshrl.u32 %v725, 7
    %v727 = vsub.s32 1, %v726
    %v728 = vrot.slane %v719, %v727
    %v729 = vlaneseq
    %v730 = vshrl.u32 %v729, 7
    %v731 = vsub.s32 2, %v730
    %v732 = vrot.slane %v719, %v731
    %v733 = vlaneseq
    %v734 = vshrl.u32 %v733, 7
    %v735 = vsub.s32 3, %v734
    %v736 = vrot.slane %v719, %v735
    %v737 = vlaneseq
    %v738 = vshrl.u32 %v737, 7
    %v739 = vsub.s32 4, %v738
    %v740 = vrot.slane %v719, %v739
    %v741 = vlaneseq
    %v742 = vshrl.u32 %v741, 7
    %v743 = vsub.s32 5, %v742
    %v744 = vrot.slane %v719, %v743
    %v751 = vadd.f32 %v573, %v724
    %v752 = vadd.f32 %v575, %v728
    %v753 = vadd.f32 %v644, %v732
    %v754 = vadd.f32 %v646, %v736
    %v755 = vadd.f32 %v715, %v740
    %v756 = vadd.f32 %v717, %v744
    %v757 = vmax.f32 %v751, 0.0
    %v758 = vmax.f32 %v752, 0.0
    %v759 = vmax.f32 %v753, 0.0
    %v760 = vmax.f32 %v754, 0.0
    %v761 = vmax.f32 %v755, 0.0
    %v762 = vmax.f32 %v756, 0.0
    %v763 = vld [vmem:[#allocation11] sm:$0xff]
    %v764 = vld [vmem:[#allocation11 + $0x8] sm:$0xff]
    %v765 = vld [vmem:[#allocation11 + $0x10] sm:$0xff]
    %v766 = vld [vmem:[#allocation11 + $0x18] sm:$0xff]
    %v767 = vld [vmem:[#allocation11 + $0x20] sm:$0xff]
    %v768 = vld [vmem:[#allocation11 + $0x28] sm:$0xff]
    %v769 = vld [vmem:[#allocation11 + $0x30] sm:$0xff]
    %v770 = vld [vmem:[#allocation11 + $0x38] sm:$0xff]
    %v771 = vld [vmem:[#allocation11 + $0x40] sm:$0xff]
    %v772 = vld [vmem:[#allocation11 + $0x48] sm:$0xff]
    %v773 = vld [vmem:[#allocation11 + $0x50] sm:$0xff]
    %v774 = vld [vmem:[#allocation11 + $0x58] sm:$0xff]
    %v775 = vld [vmem:[#allocation11 + $0x60] sm:$0xff]
    %v776 = vld [vmem:[#allocation11 + $0x68] sm:$0xff]
    %v777 = vld [vmem:[#allocation11 + $0x70] sm:$0xff]
    %v778 = vld [vmem:[#allocation11 + $0x78] sm:$0xff]
    %v779 = vld [vmem:[#allocation11 + $0x80] sm:$0xff]
    %v780 = vld [vmem:[#allocation11 + $0x88] sm:$0xff]
    %v781 = vld [vmem:[#allocation11 + $0x90] sm:$0xff]
    %v782 = vld [vmem:[#allocation11 + $0x98] sm:$0xff]
    %v783 = vld [vmem:[#allocation11 + $0xa0] sm:$0xff]
    %v784 = vld [vmem:[#allocation11 + $0xa8] sm:$0xff]
    %v785 = vld [vmem:[#allocation11 + $0xb0] sm:$0xff]
    %v786 = vld [vmem:[#allocation11 + $0xb8] sm:$0xff]
    %v787 = vld [vmem:[#allocation11 + $0xc0] sm:$0xff]
    %v788 = vld [vmem:[#allocation11 + $0xc8] sm:$0xff]
    %v789 = vld [vmem:[#allocation11 + $0xd0] sm:$0xff]
    %v790 = vld [vmem:[#allocation11 + $0xd8] sm:$0xff]
    %v791 = vld [vmem:[#allocation11 + $0xe0] sm:$0xff]
    %v792 = vld [vmem:[#allocation11 + $0xe8] sm:$0xff]
    %v793 = vld [vmem:[#allocation11 + $0xf0] sm:$0xff]
    %v794 = vld [vmem:[#allocation11 + $0xf8] sm:$0xff]
    %v795 = vld [vmem:[#allocation11 + $0x100] sm:$0xff]
    %v796 = vld [vmem:[#allocation11 + $0x108] sm:$0xff]
    %v797 = vld [vmem:[#allocation11 + $0x110] sm:$0xff]
    %v798 = vld [vmem:[#allocation11 + $0x118] sm:$0xff]
    %v799 = vld [vmem:[#allocation11 + $0x120] sm:$0xff]
    %v800 = vld [vmem:[#allocation11 + $0x128] sm:$0xff]
    %v801 = vld [vmem:[#allocation11 + $0x130] sm:$0xff]
    %v802 = vld [vmem:[#allocation11 + $0x138] sm:$0xff]
    %v803 = vld [vmem:[#allocation11 + $0x140] sm:$0xff]
    %v804 = vld [vmem:[#allocation11 + $0x148] sm:$0xff]
    %v805 = vld [vmem:[#allocation11 + $0x150] sm:$0xff]
    %v806 = vld [vmem:[#allocation11 + $0x158] sm:$0xff]
    %v807 = vld [vmem:[#allocation11 + $0x160] sm:$0xff]
    %v808 = vld [vmem:[#allocation11 + $0x168] sm:$0xff]
    %v809 = vld [vmem:[#allocation11 + $0x170] sm:$0xff]
    %v810 = vld [vmem:[#allocation11 + $0x178] sm:$0xff]
    %v811 = vld [vmem:[#allocation11 + $0x180] sm:$0xff]
    %v812 = vld [vmem:[#allocation11 + $0x188] sm:$0xff]
    %v813 = vld [vmem:[#allocation11 + $0x190] sm:$0xff]
    %v814 = vld [vmem:[#allocation11 + $0x198] sm:$0xff]
    %v815 = vld [vmem:[#allocation11 + $0x1a0] sm:$0xff]
    %v816 = vld [vmem:[#allocation11 + $0x1a8] sm:$0xff]
    %v817 = vld [vmem:[#allocation11 + $0x1b0] sm:$0xff]
    %v818 = vld [vmem:[#allocation11 + $0x1b8] sm:$0xff]
    %v819 = vld [vmem:[#allocation11 + $0x1c0] sm:$0xff]
    %v820 = vld [vmem:[#allocation11 + $0x1c8] sm:$0xff]
    %v821 = vld [vmem:[#allocation11 + $0x1d0] sm:$0xff]
    %v822 = vld [vmem:[#allocation11 + $0x1d8] sm:$0xff]
    %v823 = vld [vmem:[#allocation11 + $0x1e0] sm:$0xff]
    %v824 = vld [vmem:[#allocation11 + $0x1e8] sm:$0xff]
    %v825 = vld [vmem:[#allocation11 + $0x1f0] sm:$0xff]
    %v826 = vld [vmem:[#allocation11 + $0x1f8] sm:$0xff]
    %v827 = vld [vmem:[#allocation11 + $0x200] sm:$0xff]
    %v828 = vld [vmem:[#allocation11 + $0x208] sm:$0xff]
    %v829 = vld [vmem:[#allocation11 + $0x210] sm:$0xff]
    %v830 = vld [vmem:[#allocation11 + $0x218] sm:$0xff]
    %v831 = vld [vmem:[#allocation11 + $0x220] sm:$0xff]
    %v832 = vld [vmem:[#allocation11 + $0x228] sm:$0xff]
    %v833 = vld [vmem:[#allocation11 + $0x230] sm:$0xff]
    %v834 = vld [vmem:[#allocation11 + $0x238] sm:$0xff]
    %v835 = vld [vmem:[#allocation11 + $0x240] sm:$0xff]
    %v836 = vld [vmem:[#allocation11 + $0x248] sm:$0xff]
    %v837 = vld [vmem:[#allocation11 + $0x250] sm:$0xff]
    %v838 = vld [vmem:[#allocation11 + $0x258] sm:$0xff]
    %v839 = vld [vmem:[#allocation11 + $0x260] sm:$0xff]
    %v840 = vld [vmem:[#allocation11 + $0x268] sm:$0xff]
    %v841 = vld [vmem:[#allocation11 + $0x270] sm:$0xff]
    %v842 = vld [vmem:[#allocation11 + $0x278] sm:$0xff]
    %v843 = vld [vmem:[#allocation11 + $0x280] sm:$0xff]
    %v844 = vld [vmem:[#allocation11 + $0x288] sm:$0xff]
    %v845 = vld [vmem:[#allocation11 + $0x290] sm:$0xff]
    %v846 = vld [vmem:[#allocation11 + $0x298] sm:$0xff]
    %v847 = vld [vmem:[#allocation11 + $0x2a0] sm:$0xff]
    %v848 = vld [vmem:[#allocation11 + $0x2a8] sm:$0xff]
    %v849 = vld [vmem:[#allocation11 + $0x2b0] sm:$0xff]
    %v850 = vld [vmem:[#allocation11 + $0x2b8] sm:$0xff]
    %v851 = vld [vmem:[#allocation11 + $0x2c0] sm:$0xff]
    %v852 = vld [vmem:[#allocation11 + $0x2c8] sm:$0xff]
    %v853 = vld [vmem:[#allocation11 + $0x2d0] sm:$0xff]
    %v854 = vld [vmem:[#allocation11 + $0x2d8] sm:$0xff]
    %v855 = vld [vmem:[#allocation11 + $0x2e0] sm:$0xff]
    %v856 = vld [vmem:[#allocation11 + $0x2e8] sm:$0xff]
    %v857 = vld [vmem:[#allocation11 + $0x2f0] sm:$0xff]
    %v858 = vld [vmem:[#allocation11 + $0x2f8] sm:$0xff]
    %v859 = vld [vmem:[#allocation11 + $0x300] sm:$0xff]
    %v860 = vld [vmem:[#allocation11 + $0x308] sm:$0xff]
    %v861 = vld [vmem:[#allocation11 + $0x310] sm:$0xff]
    %v862 = vld [vmem:[#allocation11 + $0x318] sm:$0xff]
    %v863 = vld [vmem:[#allocation11 + $0x320] sm:$0xff]
    %v864 = vld [vmem:[#allocation11 + $0x328] sm:$0xff]
    %v865 = vld [vmem:[#allocation11 + $0x330] sm:$0xff]
    %v866 = vld [vmem:[#allocation11 + $0x338] sm:$0xff]
    %v867 = vld [vmem:[#allocation11 + $0x340] sm:$0xff]
    %v868 = vld [vmem:[#allocation11 + $0x348] sm:$0xff]
    %v869 = vld [vmem:[#allocation11 + $0x350] sm:$0xff]
    %v870 = vld [vmem:[#allocation11 + $0x358] sm:$0xff]
    %v871 = vld [vmem:[#allocation11 + $0x360] sm:$0xff]
    %v872 = vld [vmem:[#allocation11 + $0x368] sm:$0xff]
    %v873 = vld [vmem:[#allocation11 + $0x370] sm:$0xff]
    %v874 = vld [vmem:[#allocation11 + $0x378] sm:$0xff]
    %v875 = vld [vmem:[#allocation11 + $0x380] sm:$0xff]
    %v876 = vld [vmem:[#allocation11 + $0x388] sm:$0xff]
    %v877 = vld [vmem:[#allocation11 + $0x390] sm:$0xff]
    %v878 = vld [vmem:[#allocation11 + $0x398] sm:$0xff]
    %v879 = vld [vmem:[#allocation11 + $0x3a0] sm:$0xff]
    %v880 = vld [vmem:[#allocation11 + $0x3a8] sm:$0xff]
    %v881 = vld [vmem:[#allocation11 + $0x3b0] sm:$0xff]
    %v882 = vld [vmem:[#allocation11 + $0x3b8] sm:$0xff]
    %v883 = vld [vmem:[#allocation11 + $0x3c0] sm:$0xff]
    %v884 = vld [vmem:[#allocation11 + $0x3c8] sm:$0xff]
    %v885 = vld [vmem:[#allocation11 + $0x3d0] sm:$0xff]
    %v886 = vld [vmem:[#allocation11 + $0x3d8] sm:$0xff]
    %v887 = vld [vmem:[#allocation11 + $0x3e0] sm:$0xff]
    %v888 = vld [vmem:[#allocation11 + $0x3e8] sm:$0xff]
    %v889 = vld [vmem:[#allocation11 + $0x3f0] sm:$0xff]
    %v890 = vld [vmem:[#allocation11 + $0x3f8] sm:$0xff]
    %v891 = vld [vmem:[#allocation11 + $0x400] sm:$0xff]
    %v892 = vld [vmem:[#allocation11 + $0x408] sm:$0xff]
    %v893 = vld [vmem:[#allocation11 + $0x410] sm:$0xff]
    %v894 = vld [vmem:[#allocation11 + $0x418] sm:$0xff]
    %v895 = vld [vmem:[#allocation11 + $0x420] sm:$0xff]
    %v896 = vld [vmem:[#allocation11 + $0x428] sm:$0xff]
    %v897 = vld [vmem:[#allocation11 + $0x430] sm:$0xff]
    %v898 = vld [vmem:[#allocation11 + $0x438] sm:$0xff]
    %v899 = vld [vmem:[#allocation11 + $0x440] sm:$0xff]
    %v900 = vld [vmem:[#allocation11 + $0x448] sm:$0xff]
    %v901 = vld [vmem:[#allocation11 + $0x450] sm:$0xff]
    %v902 = vld [vmem:[#allocation11 + $0x458] sm:$0xff]
    %v903 = vld [vmem:[#allocation11 + $0x460] sm:$0xff]
    %v904 = vld [vmem:[#allocation11 + $0x468] sm:$0xff]
    %v905 = vld [vmem:[#allocation11 + $0x470] sm:$0xff]
    %v906 = vld [vmem:[#allocation11 + $0x478] sm:$0xff]
    %v907 = vld [vmem:[#allocation11 + $0x480] sm:$0xff]
    %v908 = vld [vmem:[#allocation11 + $0x488] sm:$0xff]
    %v909 = vld [vmem:[#allocation11 + $0x490] sm:$0xff]
    %v910 = vld [vmem:[#allocation11 + $0x498] sm:$0xff]
    %v911 = vld [vmem:[#allocation11 + $0x4a0] sm:$0xff]
    %v912 = vld [vmem:[#allocation11 + $0x4a8] sm:$0xff]
    %v913 = vld [vmem:[#allocation11 + $0x4b0] sm:$0xff]
    %v914 = vld [vmem:[#allocation11 + $0x4b8] sm:$0xff]
    %v915 = vld [vmem:[#allocation11 + $0x4c0] sm:$0xff]
    %v916 = vld [vmem:[#allocation11 + $0x4c8] sm:$0xff]
    %v917 = vld [vmem:[#allocation11 + $0x4d0] sm:$0xff]
    %v918 = vld [vmem:[#allocation11 + $0x4d8] sm:$0xff]
    %v919 = vld [vmem:[#allocation11 + $0x4e0] sm:$0xff]
    %v920 = vld [vmem:[#allocation11 + $0x4e8] sm:$0xff]
    %v921 = vld [vmem:[#allocation11 + $0x4f0] sm:$0xff]
    %v922 = vld [vmem:[#allocation11 + $0x4f8] sm:$0xff]
    %v923 = vld [vmem:[#allocation11 + $0x500] sm:$0xff]
    %v924 = vld [vmem:[#allocation11 + $0x508] sm:$0xff]
    %v925 = vld [vmem:[#allocation11 + $0x510] sm:$0xff]
    %v926 = vld [vmem:[#allocation11 + $0x518] sm:$0xff]
    %v927 = vld [vmem:[#allocation11 + $0x520] sm:$0xff]
    %v928 = vld [vmem:[#allocation11 + $0x528] sm:$0xff]
    %v929 = vld [vmem:[#allocation11 + $0x530] sm:$0xff]
    %v930 = vld [vmem:[#allocation11 + $0x538] sm:$0xff]
    %v931 = vld [vmem:[#allocation11 + $0x540] sm:$0xff]
    %v932 = vld [vmem:[#allocation11 + $0x548] sm:$0xff]
    %v933 = vld [vmem:[#allocation11 + $0x550] sm:$0xff]
    %v934 = vld [vmem:[#allocation11 + $0x558] sm:$0xff]
    %v935 = vld [vmem:[#allocation11 + $0x560] sm:$0xff]
    %v936 = vld [vmem:[#allocation11 + $0x568] sm:$0xff]
    %v937 = vld [vmem:[#allocation11 + $0x570] sm:$0xff]
    %v938 = vld [vmem:[#allocation11 + $0x578] sm:$0xff]
    %v939 = vld [vmem:[#allocation11 + $0x580] sm:$0xff]
    %v940 = vld [vmem:[#allocation11 + $0x588] sm:$0xff]
    %v941 = vld [vmem:[#allocation11 + $0x590] sm:$0xff]
    %v942 = vld [vmem:[#allocation11 + $0x598] sm:$0xff]
    %v943 = vld [vmem:[#allocation11 + $0x5a0] sm:$0xff]
    %v944 = vld [vmem:[#allocation11 + $0x5a8] sm:$0xff]
    %v945 = vld [vmem:[#allocation11 + $0x5b0] sm:$0xff]
    %v946 = vld [vmem:[#allocation11 + $0x5b8] sm:$0xff]
    %v947 = vld [vmem:[#allocation11 + $0x5c0] sm:$0xff]
    %v948 = vld [vmem:[#allocation11 + $0x5c8] sm:$0xff]
    %v949 = vld [vmem:[#allocation11 + $0x5d0] sm:$0xff]
    %v950 = vld [vmem:[#allocation11 + $0x5d8] sm:$0xff]
    %v951 = vld [vmem:[#allocation11 + $0x5e0] sm:$0xff]
    %v952 = vld [vmem:[#allocation11 + $0x5e8] sm:$0xff]
    %v953 = vld [vmem:[#allocation11 + $0x5f0] sm:$0xff]
    %v954 = vld [vmem:[#allocation11 + $0x5f8] sm:$0xff]
    %v955 = vld [vmem:[#allocation11 + $0x600] sm:$0xff]
    %v956 = vld [vmem:[#allocation11 + $0x608] sm:$0xff]
    %v957 = vld [vmem:[#allocation11 + $0x610] sm:$0xff]
    %v958 = vld [vmem:[#allocation11 + $0x618] sm:$0xff]
    %v959 = vld [vmem:[#allocation11 + $0x620] sm:$0xff]
    %v960 = vld [vmem:[#allocation11 + $0x628] sm:$0xff]
    %v961 = vld [vmem:[#allocation11 + $0x630] sm:$0xff]
    %v962 = vld [vmem:[#allocation11 + $0x638] sm:$0xff]
    %v963 = vld [vmem:[#allocation11 + $0x640] sm:$0xff]
    %v964 = vld [vmem:[#allocation11 + $0x648] sm:$0xff]
    %v965 = vld [vmem:[#allocation11 + $0x650] sm:$0xff]
    %v966 = vld [vmem:[#allocation11 + $0x658] sm:$0xff]
    %v967 = vld [vmem:[#allocation11 + $0x660] sm:$0xff]
    %v968 = vld [vmem:[#allocation11 + $0x668] sm:$0xff]
    %v969 = vld [vmem:[#allocation11 + $0x670] sm:$0xff]
    %v970 = vld [vmem:[#allocation11 + $0x678] sm:$0xff]
    %v971 = vld [vmem:[#allocation11 + $0x680] sm:$0xff]
    %v972 = vld [vmem:[#allocation11 + $0x688] sm:$0xff]
    %v973 = vld [vmem:[#allocation11 + $0x690] sm:$0xff]
    %v974 = vld [vmem:[#allocation11 + $0x698] sm:$0xff]
    %v975 = vld [vmem:[#allocation11 + $0x6a0] sm:$0xff]
    %v976 = vld [vmem:[#allocation11 + $0x6a8] sm:$0xff]
    %v977 = vld [vmem:[#allocation11 + $0x6b0] sm:$0xff]
    %v978 = vld [vmem:[#allocation11 + $0x6b8] sm:$0xff]
    %v979 = vld [vmem:[#allocation11 + $0x6c0] sm:$0xff]
    %v980 = vld [vmem:[#allocation11 + $0x6c8] sm:$0xff]
    %v981 = vld [vmem:[#allocation11 + $0x6d0] sm:$0xff]
    %v982 = vld [vmem:[#allocation11 + $0x6d8] sm:$0xff]
    %v983 = vld [vmem:[#allocation11 + $0x6e0] sm:$0xff]
    %v984 = vld [vmem:[#allocation11 + $0x6e8] sm:$0xff]
    %v985 = vld [vmem:[#allocation11 + $0x6f0] sm:$0xff]
    %v986 = vld [vmem:[#allocation11 + $0x6f8] sm:$0xff]
    %v987 = vld [vmem:[#allocation11 + $0x700] sm:$0xff]
    %v988 = vld [vmem:[#allocation11 + $0x708] sm:$0xff]
    %v989 = vld [vmem:[#allocation11 + $0x710] sm:$0xff]
    %v990 = vld [vmem:[#allocation11 + $0x718] sm:$0xff]
    %v991 = vld [vmem:[#allocation11 + $0x720] sm:$0xff]
    %v992 = vld [vmem:[#allocation11 + $0x728] sm:$0xff]
    %v993 = vld [vmem:[#allocation11 + $0x730] sm:$0xff]
    %v994 = vld [vmem:[#allocation11 + $0x738] sm:$0xff]
    %v995 = vld [vmem:[#allocation11 + $0x740] sm:$0xff]
    %v996 = vld [vmem:[#allocation11 + $0x748] sm:$0xff]
    %v997 = vld [vmem:[#allocation11 + $0x750] sm:$0xff]
    %v998 = vld [vmem:[#allocation11 + $0x758] sm:$0xff]
    %v999 = vld [vmem:[#allocation11 + $0x760] sm:$0xff]
    %v1000 = vld [vmem:[#allocation11 + $0x768] sm:$0xff]
    %v1001 = vld [vmem:[#allocation11 + $0x770] sm:$0xff]
    %v1002 = vld [vmem:[#allocation11 + $0x778] sm:$0xff]
    %v1003 = vld [vmem:[#allocation11 + $0x780] sm:$0xff]
    %v1004 = vld [vmem:[#allocation11 + $0x788] sm:$0xff]
    %v1005 = vld [vmem:[#allocation11 + $0x790] sm:$0xff]
    %v1006 = vld [vmem:[#allocation11 + $0x798] sm:$0xff]
    %v1007 = vld [vmem:[#allocation11 + $0x7a0] sm:$0xff]
    %v1008 = vld [vmem:[#allocation11 + $0x7a8] sm:$0xff]
    %v1009 = vld [vmem:[#allocation11 + $0x7b0] sm:$0xff]
    %v1010 = vld [vmem:[#allocation11 + $0x7b8] sm:$0xff]
    %v1011 = vld [vmem:[#allocation11 + $0x7c0] sm:$0xff]
    %v1012 = vld [vmem:[#allocation11 + $0x7c8] sm:$0xff]
    %v1013 = vld [vmem:[#allocation11 + $0x7d0] sm:$0xff]
    %v1014 = vld [vmem:[#allocation11 + $0x7d8] sm:$0xff]
    %v1015 = vld [vmem:[#allocation11 + $0x7e0] sm:$0xff]
    %v1016 = vld [vmem:[#allocation11 + $0x7e8] sm:$0xff]
    %v1017 = vld [vmem:[#allocation11 + $0x7f0] sm:$0xff]
    %v1018 = vld [vmem:[#allocation11 + $0x7f8] sm:$0xff]
    %v1019 = vld [vmem:[#allocation11 + $0x800] sm:$0xff]
    %v1020 = vld [vmem:[#allocation11 + $0x808] sm:$0xff]
    %v1021 = vld [vmem:[#allocation11 + $0x810] sm:$0xff]
    %v1022 = vld [vmem:[#allocation11 + $0x818] sm:$0xff]
    %v1023 = vld [vmem:[#allocation11 + $0x820] sm:$0xff]
    %v1024 = vld [vmem:[#allocation11 + $0x828] sm:$0xff]
    %v1025 = vld [vmem:[#allocation11 + $0x830] sm:$0xff]
    %v1026 = vld [vmem:[#allocation11 + $0x838] sm:$0xff]
    %v1027 = vld [vmem:[#allocation11 + $0x840] sm:$0xff]
    %v1028 = vld [vmem:[#allocation11 + $0x848] sm:$0xff]
    %v1029 = vld [vmem:[#allocation11 + $0x850] sm:$0xff]
    %v1030 = vld [vmem:[#allocation11 + $0x858] sm:$0xff]
    %v1031 = vld [vmem:[#allocation11 + $0x860] sm:$0xff]
    %v1032 = vld [vmem:[#allocation11 + $0x868] sm:$0xff]
    %v1033 = vld [vmem:[#allocation11 + $0x870] sm:$0xff]
    %v1034 = vld [vmem:[#allocation11 + $0x878] sm:$0xff]
    %v1035 = vld [vmem:[#allocation11 + $0x880] sm:$0xff]
    %v1036 = vld [vmem:[#allocation11 + $0x888] sm:$0xff]
    %v1037 = vld [vmem:[#allocation11 + $0x890] sm:$0xff]
    %v1038 = vld [vmem:[#allocation11 + $0x898] sm:$0xff]
    %v1039 = vld [vmem:[#allocation11 + $0x8a0] sm:$0xff]
    %v1040 = vld [vmem:[#allocation11 + $0x8a8] sm:$0xff]
    %v1041 = vld [vmem:[#allocation11 + $0x8b0] sm:$0xff]
    %v1042 = vld [vmem:[#allocation11 + $0x8b8] sm:$0xff]
    %v1043 = vld [vmem:[#allocation11 + $0x8c0] sm:$0xff]
    %v1044 = vld [vmem:[#allocation11 + $0x8c8] sm:$0xff]
    %v1045 = vld [vmem:[#allocation11 + $0x8d0] sm:$0xff]
    %v1046 = vld [vmem:[#allocation11 + $0x8d8] sm:$0xff]
    %v1047 = vld [vmem:[#allocation11 + $0x8e0] sm:$0xff]
    %v1048 = vld [vmem:[#allocation11 + $0x8e8] sm:$0xff]
    %v1049 = vld [vmem:[#allocation11 + $0x8f0] sm:$0xff]
    %v1050 = vld [vmem:[#allocation11 + $0x8f8] sm:$0xff]
    %v1051 = vld [vmem:[#allocation11 + $0x900] sm:$0xff]
    %v1052 = vld [vmem:[#allocation11 + $0x908] sm:$0xff]
    %v1053 = vld [vmem:[#allocation11 + $0x910] sm:$0xff]
    %v1054 = vld [vmem:[#allocation11 + $0x918] sm:$0xff]
    %v1055 = vld [vmem:[#allocation11 + $0x920] sm:$0xff]
    %v1056 = vld [vmem:[#allocation11 + $0x928] sm:$0xff]
    %v1057 = vld [vmem:[#allocation11 + $0x930] sm:$0xff]
    %v1058 = vld [vmem:[#allocation11 + $0x938] sm:$0xff]
    %v1059 = vld [vmem:[#allocation11 + $0x940] sm:$0xff]
    %v1060 = vld [vmem:[#allocation11 + $0x948] sm:$0xff]
    %v1061 = vld [vmem:[#allocation11 + $0x950] sm:$0xff]
    %v1062 = vld [vmem:[#allocation11 + $0x958] sm:$0xff]
    %v1063 = vld [vmem:[#allocation11 + $0x960] sm:$0xff]
    %v1064 = vld [vmem:[#allocation11 + $0x968] sm:$0xff]
    %v1065 = vld [vmem:[#allocation11 + $0x970] sm:$0xff]
    %v1066 = vld [vmem:[#allocation11 + $0x978] sm:$0xff]
    %v1067 = vld [vmem:[#allocation11 + $0x980] sm:$0xff]
    %v1068 = vld [vmem:[#allocation11 + $0x988] sm:$0xff]
    %v1069 = vld [vmem:[#allocation11 + $0x990] sm:$0xff]
    %v1070 = vld [vmem:[#allocation11 + $0x998] sm:$0xff]
    %v1071 = vld [vmem:[#allocation11 + $0x9a0] sm:$0xff]
    %v1072 = vld [vmem:[#allocation11 + $0x9a8] sm:$0xff]
    %v1073 = vld [vmem:[#allocation11 + $0x9b0] sm:$0xff]
    %v1074 = vld [vmem:[#allocation11 + $0x9b8] sm:$0xff]
    %v1075 = vld [vmem:[#allocation11 + $0x9c0] sm:$0xff]
    %v1076 = vld [vmem:[#allocation11 + $0x9c8] sm:$0xff]
    %v1077 = vld [vmem:[#allocation11 + $0x9d0] sm:$0xff]
    %v1078 = vld [vmem:[#allocation11 + $0x9d8] sm:$0xff]
    %v1079 = vld [vmem:[#allocation11 + $0x9e0] sm:$0xff]
    %v1080 = vld [vmem:[#allocation11 + $0x9e8] sm:$0xff]
    %v1081 = vld [vmem:[#allocation11 + $0x9f0] sm:$0xff]
    %v1082 = vld [vmem:[#allocation11 + $0x9f8] sm:$0xff]
    %v1083 = vld [vmem:[#allocation11 + $0xa00] sm:$0xff]
    %v1084 = vld [vmem:[#allocation11 + $0xa08] sm:$0xff]
    %v1085 = vld [vmem:[#allocation11 + $0xa10] sm:$0xff]
    %v1086 = vld [vmem:[#allocation11 + $0xa18] sm:$0xff]
    %v1087 = vld [vmem:[#allocation11 + $0xa20] sm:$0xff]
    %v1088 = vld [vmem:[#allocation11 + $0xa28] sm:$0xff]
    %v1089 = vld [vmem:[#allocation11 + $0xa30] sm:$0xff]
    %v1090 = vld [vmem:[#allocation11 + $0xa38] sm:$0xff]
    %v1091 = vld [vmem:[#allocation11 + $0xa40] sm:$0xff]
    %v1092 = vld [vmem:[#allocation11 + $0xa48] sm:$0xff]
    %v1093 = vld [vmem:[#allocation11 + $0xa50] sm:$0xff]
    %v1094 = vld [vmem:[#allocation11 + $0xa58] sm:$0xff]
    %v1095 = vld [vmem:[#allocation11 + $0xa60] sm:$0xff]
    %v1096 = vld [vmem:[#allocation11 + $0xa68] sm:$0xff]
    %v1097 = vld [vmem:[#allocation11 + $0xa70] sm:$0xff]
    %v1098 = vld [vmem:[#allocation11 + $0xa78] sm:$0xff]
    %v1099 = vld [vmem:[#allocation11 + $0xa80] sm:$0xff]
    %v1100 = vld [vmem:[#allocation11 + $0xa88] sm:$0xff]
    %v1101 = vld [vmem:[#allocation11 + $0xa90] sm:$0xff]
    %v1102 = vld [vmem:[#allocation11 + $0xa98] sm:$0xff]
    %v1103 = vld [vmem:[#allocation11 + $0xaa0] sm:$0xff]
    %v1104 = vld [vmem:[#allocation11 + $0xaa8] sm:$0xff]
    %v1105 = vld [vmem:[#allocation11 + $0xab0] sm:$0xff]
    %v1106 = vld [vmem:[#allocation11 + $0xab8] sm:$0xff]
    %v1107 = vld [vmem:[#allocation11 + $0xac0] sm:$0xff]
    %v1108 = vld [vmem:[#allocation11 + $0xac8] sm:$0xff]
    %v1109 = vld [vmem:[#allocation11 + $0xad0] sm:$0xff]
    %v1110 = vld [vmem:[#allocation11 + $0xad8] sm:$0xff]
    %v1111 = vld [vmem:[#allocation11 + $0xae0] sm:$0xff]
    %v1112 = vld [vmem:[#allocation11 + $0xae8] sm:$0xff]
    %v1113 = vld [vmem:[#allocation11 + $0xaf0] sm:$0xff]
    %v1114 = vld [vmem:[#allocation11 + $0xaf8] sm:$0xff]
    %v1115 = vld [vmem:[#allocation11 + $0xb00] sm:$0xff]
    %v1116 = vld [vmem:[#allocation11 + $0xb08] sm:$0xff]
    %v1117 = vld [vmem:[#allocation11 + $0xb10] sm:$0xff]
    %v1118 = vld [vmem:[#allocation11 + $0xb18] sm:$0xff]
    %v1119 = vld [vmem:[#allocation11 + $0xb20] sm:$0xff]
    %v1120 = vld [vmem:[#allocation11 + $0xb28] sm:$0xff]
    %v1121 = vld [vmem:[#allocation11 + $0xb30] sm:$0xff]
    %v1122 = vld [vmem:[#allocation11 + $0xb38] sm:$0xff]
    %v1123 = vld [vmem:[#allocation11 + $0xb40] sm:$0xff]
    %v1124 = vld [vmem:[#allocation11 + $0xb48] sm:$0xff]
    %v1125 = vld [vmem:[#allocation11 + $0xb50] sm:$0xff]
    %v1126 = vld [vmem:[#allocation11 + $0xb58] sm:$0xff]
    %v1127 = vld [vmem:[#allocation11 + $0xb60] sm:$0xff]
    %v1128 = vld [vmem:[#allocation11 + $0xb68] sm:$0xff]
    %v1129 = vld [vmem:[#allocation11 + $0xb70] sm:$0xff]
    %v1130 = vld [vmem:[#allocation11 + $0xb78] sm:$0xff]
    %v1131 = vld [vmem:[#allocation11 + $0xb80] sm:$0xff]
    %v1132 = vld [vmem:[#allocation11 + $0xb88] sm:$0xff]
    %v1133 = vld [vmem:[#allocation11 + $0xb90] sm:$0xff]
    %v1134 = vld [vmem:[#allocation11 + $0xb98] sm:$0xff]
    %v1135 = vld [vmem:[#allocation11 + $0xba0] sm:$0xff]
    %v1136 = vld [vmem:[#allocation11 + $0xba8] sm:$0xff]
    %v1137 = vld [vmem:[#allocation11 + $0xbb0] sm:$0xff]
    %v1138 = vld [vmem:[#allocation11 + $0xbb8] sm:$0xff]
    %v1139 = vld [vmem:[#allocation11 + $0xbc0] sm:$0xff]
    %v1140 = vld [vmem:[#allocation11 + $0xbc8] sm:$0xff]
    %v1141 = vld [vmem:[#allocation11 + $0xbd0] sm:$0xff]
    %v1142 = vld [vmem:[#allocation11 + $0xbd8] sm:$0xff]
    %v1143 = vld [vmem:[#allocation11 + $0xbe0] sm:$0xff]
    %v1144 = vld [vmem:[#allocation11 + $0xbe8] sm:$0xff]
    %v1145 = vld [vmem:[#allocation11 + $0xbf0] sm:$0xff]
    %v1146 = vld [vmem:[#allocation11 + $0xbf8] sm:$0xff]
    %v1147 = vld [vmem:[#allocation11 + $0xc00] sm:$0xff]
    %v1148 = vld [vmem:[#allocation11 + $0xc08] sm:$0xff]
    %v1149 = vld [vmem:[#allocation11 + $0xc10] sm:$0xff]
    %v1150 = vld [vmem:[#allocation11 + $0xc18] sm:$0xff]
    %v1151 = vld [vmem:[#allocation11 + $0xc20] sm:$0xff]
    %v1152 = vld [vmem:[#allocation11 + $0xc28] sm:$0xff]
    %v1153 = vld [vmem:[#allocation11 + $0xc30] sm:$0xff]
    %v1154 = vld [vmem:[#allocation11 + $0xc38] sm:$0xff]
    %v1155 = vld [vmem:[#allocation11 + $0xc40] sm:$0xff]
    %v1156 = vld [vmem:[#allocation11 + $0xc48] sm:$0xff]
    %v1157 = vld [vmem:[#allocation11 + $0xc50] sm:$0xff]
    %v1158 = vld [vmem:[#allocation11 + $0xc58] sm:$0xff]
    %v1159 = vld [vmem:[#allocation11 + $0xc60] sm:$0xff]
    %v1160 = vld [vmem:[#allocation11 + $0xc68] sm:$0xff]
    %v1161 = vld [vmem:[#allocation11 + $0xc70] sm:$0xff]
    %v1162 = vld [vmem:[#allocation11 + $0xc78] sm:$0xff]
    %v1163 = vld [vmem:[#allocation11 + $0xc80] sm:$0xff]
    %v1164 = vld [vmem:[#allocation11 + $0xc88] sm:$0xff]
    %v1165 = vld [vmem:[#allocation11 + $0xc90] sm:$0xff]
    %v1166 = vld [vmem:[#allocation11 + $0xc98] sm:$0xff]
    %v1167 = vld [vmem:[#allocation11 + $0xca0] sm:$0xff]
    %v1168 = vld [vmem:[#allocation11 + $0xca8] sm:$0xff]
    %v1169 = vld [vmem:[#allocation11 + $0xcb0] sm:$0xff]
    %v1170 = vld [vmem:[#allocation11 + $0xcb8] sm:$0xff]
    %v1171 = vld [vmem:[#allocation11 + $0xcc0] sm:$0xff]
    %v1172 = vld [vmem:[#allocation11 + $0xcc8] sm:$0xff]
    %v1173 = vld [vmem:[#allocation11 + $0xcd0] sm:$0xff]
    %v1174 = vld [vmem:[#allocation11 + $0xcd8] sm:$0xff]
    %v1175 = vld [vmem:[#allocation11 + $0xce0] sm:$0xff]
    %v1176 = vld [vmem:[#allocation11 + $0xce8] sm:$0xff]
    %v1177 = vld [vmem:[#allocation11 + $0xcf0] sm:$0xff]
    %v1178 = vld [vmem:[#allocation11 + $0xcf8] sm:$0xff]
    %v1179 = vld [vmem:[#allocation11 + $0xd00] sm:$0xff]
    %v1180 = vld [vmem:[#allocation11 + $0xd08] sm:$0xff]
    %v1181 = vld [vmem:[#allocation11 + $0xd10] sm:$0xff]
    %v1182 = vld [vmem:[#allocation11 + $0xd18] sm:$0xff]
    %v1183 = vld [vmem:[#allocation11 + $0xd20] sm:$0xff]
    %v1184 = vld [vmem:[#allocation11 + $0xd28] sm:$0xff]
    %v1185 = vld [vmem:[#allocation11 + $0xd30] sm:$0xff]
    %v1186 = vld [vmem:[#allocation11 + $0xd38] sm:$0xff]
    %v1187 = vld [vmem:[#allocation11 + $0xd40] sm:$0xff]
    %v1188 = vld [vmem:[#allocation11 + $0xd48] sm:$0xff]
    %v1189 = vld [vmem:[#allocation11 + $0xd50] sm:$0xff]
    %v1190 = vld [vmem:[#allocation11 + $0xd58] sm:$0xff]
    %v1191 = vld [vmem:[#allocation11 + $0xd60] sm:$0xff]
    %v1192 = vld [vmem:[#allocation11 + $0xd68] sm:$0xff]
    %v1193 = vld [vmem:[#allocation11 + $0xd70] sm:$0xff]
    %v1194 = vld [vmem:[#allocation11 + $0xd78] sm:$0xff]
    %v1195 = vld [vmem:[#allocation11 + $0xd80] sm:$0xff]
    %v1196 = vld [vmem:[#allocation11 + $0xd88] sm:$0xff]
    %v1197 = vld [vmem:[#allocation11 + $0xd90] sm:$0xff]
    %v1198 = vld [vmem:[#allocation11 + $0xd98] sm:$0xff]
    %v1199 = vld [vmem:[#allocation11 + $0xda0] sm:$0xff]
    %v1200 = vld [vmem:[#allocation11 + $0xda8] sm:$0xff]
    %v1201 = vld [vmem:[#allocation11 + $0xdb0] sm:$0xff]
    %v1202 = vld [vmem:[#allocation11 + $0xdb8] sm:$0xff]
    %v1203 = vld [vmem:[#allocation11 + $0xdc0] sm:$0xff]
    %v1204 = vld [vmem:[#allocation11 + $0xdc8] sm:$0xff]
    %v1205 = vld [vmem:[#allocation11 + $0xdd0] sm:$0xff]
    %v1206 = vld [vmem:[#allocation11 + $0xdd8] sm:$0xff]
    %v1207 = vld [vmem:[#allocation11 + $0xde0] sm:$0xff]
    %v1208 = vld [vmem:[#allocation11 + $0xde8] sm:$0xff]
    %v1209 = vld [vmem:[#allocation11 + $0xdf0] sm:$0xff]
    %v1210 = vld [vmem:[#allocation11 + $0xdf8] sm:$0xff]
    %v1211 = vld [vmem:[#allocation11 + $0xe00] sm:$0xff]
    %v1212 = vld [vmem:[#allocation11 + $0xe08] sm:$0xff]
    %v1213 = vld [vmem:[#allocation11 + $0xe10] sm:$0xff]
    %v1214 = vld [vmem:[#allocation11 + $0xe18] sm:$0xff]
    %v1215 = vld [vmem:[#allocation11 + $0xe20] sm:$0xff]
    %v1216 = vld [vmem:[#allocation11 + $0xe28] sm:$0xff]
    %v1217 = vld [vmem:[#allocation11 + $0xe30] sm:$0xff]
    %v1218 = vld [vmem:[#allocation11 + $0xe38] sm:$0xff]
    %v1219 = vld [vmem:[#allocation11 + $0xe40] sm:$0xff]
    %v1220 = vld [vmem:[#allocation11 + $0xe48] sm:$0xff]
    %v1221 = vld [vmem:[#allocation11 + $0xe50] sm:$0xff]
    %v1222 = vld [vmem:[#allocation11 + $0xe58] sm:$0xff]
    %v1223 = vld [vmem:[#allocation11 + $0xe60] sm:$0xff]
    %v1224 = vld [vmem:[#allocation11 + $0xe68] sm:$0xff]
    %v1225 = vld [vmem:[#allocation11 + $0xe70] sm:$0xff]
    %v1226 = vld [vmem:[#allocation11 + $0xe78] sm:$0xff]
    %v1227 = vld [vmem:[#allocation11 + $0xe80] sm:$0xff]
    %v1228 = vld [vmem:[#allocation11 + $0xe88] sm:$0xff]
    %v1229 = vld [vmem:[#allocation11 + $0xe90] sm:$0xff]
    %v1230 = vld [vmem:[#allocation11 + $0xe98] sm:$0xff]
    %v1231 = vld [vmem:[#allocation11 + $0xea0] sm:$0xff]
    %v1232 = vld [vmem:[#allocation11 + $0xea8] sm:$0xff]
    %v1233 = vld [vmem:[#allocation11 + $0xeb0] sm:$0xff]
    %v1234 = vld [vmem:[#allocation11 + $0xeb8] sm:$0xff]
    %v1235 = vld [vmem:[#allocation11 + $0xec0] sm:$0xff]
    %v1236 = vld [vmem:[#allocation11 + $0xec8] sm:$0xff]
    %v1237 = vld [vmem:[#allocation11 + $0xed0] sm:$0xff]
    %v1238 = vld [vmem:[#allocation11 + $0xed8] sm:$0xff]
    %v1239 = vld [vmem:[#allocation11 + $0xee0] sm:$0xff]
    %v1240 = vld [vmem:[#allocation11 + $0xee8] sm:$0xff]
    %v1241 = vld [vmem:[#allocation11 + $0xef0] sm:$0xff]
    %v1242 = vld [vmem:[#allocation11 + $0xef8] sm:$0xff]
    %v1243 = vld [vmem:[#allocation11 + $0xf00] sm:$0xff]
    %v1244 = vld [vmem:[#allocation11 + $0xf08] sm:$0xff]
    %v1245 = vld [vmem:[#allocation11 + $0xf10] sm:$0xff]
    %v1246 = vld [vmem:[#allocation11 + $0xf18] sm:$0xff]
    %v1247 = vld [vmem:[#allocation11 + $0xf20] sm:$0xff]
    %v1248 = vld [vmem:[#allocation11 + $0xf28] sm:$0xff]
    %v1249 = vld [vmem:[#allocation11 + $0xf30] sm:$0xff]
    %v1250 = vld [vmem:[#allocation11 + $0xf38] sm:$0xff]
    %v1251 = vld [vmem:[#allocation11 + $0xf40] sm:$0xff]
    %v1252 = vld [vmem:[#allocation11 + $0xf48] sm:$0xff]
    %v1253 = vld [vmem:[#allocation11 + $0xf50] sm:$0xff]
    %v1254 = vld [vmem:[#allocation11 + $0xf58] sm:$0xff]
    %v1255 = vld [vmem:[#allocation11 + $0xf60] sm:$0xff]
    %v1256 = vld [vmem:[#allocation11 + $0xf68] sm:$0xff]
    %v1257 = vld [vmem:[#allocation11 + $0xf70] sm:$0xff]
    %v1258 = vld [vmem:[#allocation11 + $0xf78] sm:$0xff]
    %v1259 = vld [vmem:[#allocation11 + $0xf80] sm:$0xff]
    %v1260 = vld [vmem:[#allocation11 + $0xf88] sm:$0xff]
    %v1261 = vld [vmem:[#allocation11 + $0xf90] sm:$0xff]
    %v1262 = vld [vmem:[#allocation11 + $0xf98] sm:$0xff]
    %v1263 = vld [vmem:[#allocation11 + $0xfa0] sm:$0xff]
    %v1264 = vld [vmem:[#allocation11 + $0xfa8] sm:$0xff]
    %v1265 = vld [vmem:[#allocation11 + $0xfb0] sm:$0xff]
    %v1266 = vld [vmem:[#allocation11 + $0xfb8] sm:$0xff]
    %v1267 = vld [vmem:[#allocation11 + $0xfc0] sm:$0xff]
    %v1268 = vld [vmem:[#allocation11 + $0xfc8] sm:$0xff]
    %v1269 = vld [vmem:[#allocation11 + $0xfd0] sm:$0xff]
    %v1270 = vld [vmem:[#allocation11 + $0xfd8] sm:$0xff]
    %v1271 = vld [vmem:[#allocation11 + $0xfe0] sm:$0xff]
    %v1272 = vld [vmem:[#allocation11 + $0xfe8] sm:$0xff]
    %v1273 = vld [vmem:[#allocation11 + $0xff0] sm:$0xff]
    %v1274 = vld [vmem:[#allocation11 + $0xff8] sm:$0xff]
    %v1275 = vld [vmem:[#allocation11 + $0x1000] sm:$0xff]
    %v1276 = vld [vmem:[#allocation11 + $0x1008] sm:$0xff]
    %v1277 = vld [vmem:[#allocation11 + $0x1010] sm:$0xff]
    %v1278 = vld [vmem:[#allocation11 + $0x1018] sm:$0xff]
    %v1279 = vld [vmem:[#allocation11 + $0x1020] sm:$0xff]
    %v1280 = vld [vmem:[#allocation11 + $0x1028] sm:$0xff]
    %v1281 = vld [vmem:[#allocation11 + $0x1030] sm:$0xff]
    %v1282 = vld [vmem:[#allocation11 + $0x1038] sm:$0xff]
    %v1283 = vld [vmem:[#allocation11 + $0x1040] sm:$0xff]
    %v1284 = vld [vmem:[#allocation11 + $0x1048] sm:$0xff]
    %v1285 = vld [vmem:[#allocation11 + $0x1050] sm:$0xff]
    %v1286 = vld [vmem:[#allocation11 + $0x1058] sm:$0xff]
    %v1287 = vld [vmem:[#allocation11 + $0x1060] sm:$0xff]
    %v1288 = vld [vmem:[#allocation11 + $0x1068] sm:$0xff]
    %v1289 = vld [vmem:[#allocation11 + $0x1070] sm:$0xff]
    %v1290 = vld [vmem:[#allocation11 + $0x1078] sm:$0xff]
    %v1291 = vld [vmem:[#allocation11 + $0x1080] sm:$0xff]
    %v1292 = vld [vmem:[#allocation11 + $0x1088] sm:$0xff]
    %v1293 = vld [vmem:[#allocation11 + $0x1090] sm:$0xff]
    %v1294 = vld [vmem:[#allocation11 + $0x1098] sm:$0xff]
    %v1295 = vld [vmem:[#allocation11 + $0x10a0] sm:$0xff]
    %v1296 = vld [vmem:[#allocation11 + $0x10a8] sm:$0xff]
    %v1297 = vld [vmem:[#allocation11 + $0x10b0] sm:$0xff]
    %v1298 = vld [vmem:[#allocation11 + $0x10b8] sm:$0xff]
    %v1299 = vld [vmem:[#allocation11 + $0x10c0] sm:$0xff]
    %v1300 = vld [vmem:[#allocation11 + $0x10c8] sm:$0xff]
    %v1301 = vld [vmem:[#allocation11 + $0x10d0] sm:$0xff]
    %v1302 = vld [vmem:[#allocation11 + $0x10d8] sm:$0xff]
    %v1303 = vld [vmem:[#allocation11 + $0x10e0] sm:$0xff]
    %v1304 = vld [vmem:[#allocation11 + $0x10e8] sm:$0xff]
    %v1305 = vld [vmem:[#allocation11 + $0x10f0] sm:$0xff]
    %v1306 = vld [vmem:[#allocation11 + $0x10f8] sm:$0xff]
    %v1307 = vld [vmem:[#allocation11 + $0x1100] sm:$0xff]
    %v1308 = vld [vmem:[#allocation11 + $0x1108] sm:$0xff]
    %v1309 = vld [vmem:[#allocation11 + $0x1110] sm:$0xff]
    %v1310 = vld [vmem:[#allocation11 + $0x1118] sm:$0xff]
    %v1311 = vld [vmem:[#allocation11 + $0x1120] sm:$0xff]
    %v1312 = vld [vmem:[#allocation11 + $0x1128] sm:$0xff]
    %v1313 = vld [vmem:[#allocation11 + $0x1130] sm:$0xff]
    %v1314 = vld [vmem:[#allocation11 + $0x1138] sm:$0xff]
    %v1315 = vld [vmem:[#allocation11 + $0x1140] sm:$0xff]
    %v1316 = vld [vmem:[#allocation11 + $0x1148] sm:$0xff]
    %v1317 = vld [vmem:[#allocation11 + $0x1150] sm:$0xff]
    %v1318 = vld [vmem:[#allocation11 + $0x1158] sm:$0xff]
    %v1319 = vld [vmem:[#allocation11 + $0x1160] sm:$0xff]
    %v1320 = vld [vmem:[#allocation11 + $0x1168] sm:$0xff]
    %v1321 = vld [vmem:[#allocation11 + $0x1170] sm:$0xff]
    %v1322 = vld [vmem:[#allocation11 + $0x1178] sm:$0xff]
    %v1323 = vld [vmem:[#allocation11 + $0x1180] sm:$0xff]
    %v1324 = vld [vmem:[#allocation11 + $0x1188] sm:$0xff]
    %v1325 = vld [vmem:[#allocation11 + $0x1190] sm:$0xff]
    %v1326 = vld [vmem:[#allocation11 + $0x1198] sm:$0xff]
    %v1327 = vld [vmem:[#allocation11 + $0x11a0] sm:$0xff]
    %v1328 = vld [vmem:[#allocation11 + $0x11a8] sm:$0xff]
    %v1329 = vld [vmem:[#allocation11 + $0x11b0] sm:$0xff]
    %v1330 = vld [vmem:[#allocation11 + $0x11b8] sm:$0xff]
    %v1331 = vld [vmem:[#allocation11 + $0x11c0] sm:$0xff]
    %v1332 = vld [vmem:[#allocation11 + $0x11c8] sm:$0xff]
    %v1333 = vld [vmem:[#allocation11 + $0x11d0] sm:$0xff]
    %v1334 = vld [vmem:[#allocation11 + $0x11d8] sm:$0xff]
    %v1335 = vld [vmem:[#allocation11 + $0x11e0] sm:$0xff]
    %v1336 = vld [vmem:[#allocation11 + $0x11e8] sm:$0xff]
    %v1337 = vld [vmem:[#allocation11 + $0x11f0] sm:$0xff]
    %v1338 = vld [vmem:[#allocation11 + $0x11f8] sm:$0xff]
    %v1339 = vld [vmem:[#allocation13] sm:$0x3f]
    %v1341 = vlaneseq
    %v1342 = vshrl.u32 %v1341, 7
    %v1343 = vsub.s32 0, %v1342
    %v1344 = vrot.slane %v1339, %v1343
    %v1345 = vlaneseq
    %v1346 = vshrl.u32 %v1345, 7
    %v1347 = vsub.s32 1, %v1346
    %v1348 = vrot.slane %v1339, %v1347
    %v1349 = vlaneseq
    %v1350 = vshrl.u32 %v1349, 7
    %v1351 = vsub.s32 2, %v1350
    %v1352 = vrot.slane %v1339, %v1351
    %v1353 = vlaneseq
    %v1354 = vshrl.u32 %v1353, 7
    %v1355 = vsub.s32 3, %v1354
    %v1356 = vrot.slane %v1339, %v1355
    %v1357 = vlaneseq
    %v1358 = vshrl.u32 %v1357, 7
    %v1359 = vsub.s32 4, %v1358
    %v1360 = vrot.slane %v1339, %v1359
    %v1361 = vlaneseq
    %v1362 = vshrl.u32 %v1361, 7
    %v1363 = vsub.s32 5, %v1362
    %v1364 = vrot.slane %v1339, %v1363
    %1371 = vmatprep.subr.mxu0 %v764
    %1372 = vmatpush1.msra.mxu0 %v763
    %1373 = vmatprep.subr.mxu0 %v770
    %1374 = vmatpush1.msra.mxu0 %v769
    %1375 = vmatprep.subr.mxu0 %v776
    %1376 = vmatpush1.msra.mxu0 %v775
    %1377 = vmatprep.subr.mxu0 %v782
    %1378 = vmatpush1.msra.mxu0 %v781
    %1379 = vmatprep.subr.mxu0 %v788
    %1380 = vmatpush1.msra.mxu0 %v787
    %1381 = vmatprep.subr.mxu0 %v794
    %1382 = vmatpush1.msra.mxu0 %v793
    %1383 = vmatprep.subr.mxu0 %v800
    %1384 = vmatpush1.msra.mxu0 %v799
    %1385 = vmatprep.subr.mxu0 %v806
    %1386 = vmatpush1.msra.mxu0 %v805
    %1387 = vmatprep.subr.mxu0 %v812
    %1388 = vmatpush1.msra.mxu0 %v811
    %1389 = vmatprep.subr.mxu0 %v818
    %1390 = vmatpush1.msra.mxu0 %v817
    %1391 = vmatprep.subr.mxu0 %v824
    %1392 = vmatpush1.msra.mxu0 %v823
    %1393 = vmatprep.subr.mxu0 %v830
    %1394 = vmatpush1.msra.mxu0 %v829
    %1395 = vmatprep.subr.mxu0 %v836
    %1396 = vmatpush1.msra.mxu0 %v835
    %1397 = vmatprep.subr.mxu0 %v842
    %1398 = vmatpush1.msra.mxu0 %v841
    %1399 = vmatprep.subr.mxu0 %v848
    %1400 = vmatpush1.msra.mxu0 %v847
    %1401 = vmatprep.subr.mxu0 %v854
    %1402 = vmatpush1.msra.mxu0 %v853
    %1403 = vmatprep.subr.mxu0 %v860
    %1404 = vmatpush1.msra.mxu0 %v859
    %1405 = vmatprep.subr.mxu0 %v866
    %1406 = vmatpush1.msra.mxu0 %v865
    %1407 = vmatprep.subr.mxu0 %v872
    %1408 = vmatpush1.msra.mxu0 %v871
    %1409 = vmatprep.subr.mxu0 %v878
    %1410 = vmatpush1.msra.mxu0 %v877
    %1411 = vmatprep.subr.mxu0 %v884
    %1412 = vmatpush1.msra.mxu0 %v883
    %1413 = vmatprep.subr.mxu0 %v890
    %1414 = vmatpush1.msra.mxu0 %v889
    %1415 = vmatprep.subr.mxu0 %v896
    %1416 = vmatpush1.msra.mxu0 %v895
    %1417 = vmatprep.subr.mxu0 %v902
    %1418 = vmatpush1.msra.mxu0 %v901
    %1419 = vmatprep.subr.mxu0 %v908
    %1420 = vmatpush1.msra.mxu0 %v907
    %1421 = vmatprep.subr.mxu0 %v914
    %1422 = vmatpush1.msra.mxu0 %v913
    %1423 = vmatprep.subr.mxu0 %v920
    %1424 = vmatpush1.msra.mxu0 %v919
    %1425 = vmatprep.subr.mxu0 %v926
    %1426 = vmatpush1.msra.mxu0 %v925
    %1427 = vmatprep.subr.mxu0 %v932
    %1428 = vmatpush1.msra.mxu0 %v931
    %1429 = vmatprep.subr.mxu0 %v938
    %1430 = vmatpush1.msra.mxu0 %v937
    %1431 = vmatprep.subr.mxu0 %v944
    %1432 = vmatpush1.msra.mxu0 %v943
    %1433 = vmatprep.subr.mxu0 %v950
    %1434 = vmatpush1.msra.mxu0 %v949
    %1435 = vmatprep.mubr.f32.mxu0 %v758
    %1436 = vmatmul.mubr.f32.gmra.mrb[0].mxu0 %v757
    %v1437 = vpop.f32.mrb[0].mxu0
    %v1438 = vadd.f32 %v1344, %v1437
    %v1439 = vpop.f32.mrb[0].mxu0
    %v1440 = vadd.f32 %v1348, %v1439
    %1441 = vdwg.mxu0
    %1442 = vmatprep.subr.mxu0 %v956
    %1443 = vmatpush1.msra.mxu0 %v955
    %1444 = vmatprep.subr.mxu0 %v962
    %1445 = vmatpush1.msra.mxu0 %v961
    %1446 = vmatprep.subr.mxu0 %v968
    %1447 = vmatpush1.msra.mxu0 %v967
    %1448 = vmatprep.subr.mxu0 %v974
    %1449 = vmatpush1.msra.mxu0 %v973
    %1450 = vmatprep.subr.mxu0 %v980
    %1451 = vmatpush1.msra.mxu0 %v979
    %1452 = vmatprep.subr.mxu0 %v986
    %1453 = vmatpush1.msra.mxu0 %v985
    %1454 = vmatprep.subr.mxu0 %v992
    %1455 = vmatpush1.msra.mxu0 %v991
    %1456 = vmatprep.subr.mxu0 %v998
    %1457 = vmatpush1.msra.mxu0 %v997
    %1458 = vmatprep.subr.mxu0 %v1004
    %1459 = vmatpush1.msra.mxu0 %v1003
    %1460 = vmatprep.subr.mxu0 %v1010
    %1461 = vmatpush1.msra.mxu0 %v1009
    %1462 = vmatprep.subr.mxu0 %v1016
    %1463 = vmatpush1.msra.mxu0 %v1015
    %1464 = vmatprep.subr.mxu0 %v1022
    %1465 = vmatpush1.msra.mxu0 %v1021
    %1466 = vmatprep.subr.mxu0 %v1028
    %1467 = vmatpush1.msra.mxu0 %v1027
    %1468 = vmatprep.subr.mxu0 %v1034
    %1469 = vmatpush1.msra.mxu0 %v1033
    %1470 = vmatprep.subr.mxu0 %v1040
    %1471 = vmatpush1.msra.mxu0 %v1039
    %1472 = vmatprep.subr.mxu0 %v1046
    %1473 = vmatpush1.msra.mxu0 %v1045
    %1474 = vmatprep.subr.mxu0 %v1052
    %1475 = vmatpush1.msra.mxu0 %v1051
    %1476 = vmatprep.subr.mxu0 %v1058
    %1477 = vmatpush1.msra.mxu0 %v1057
    %1478 = vmatprep.subr.mxu0 %v1064
    %1479 = vmatpush1.msra.mxu0 %v1063
    %1480 = vmatprep.subr.mxu0 %v1070
    %1481 = vmatpush1.msra.mxu0 %v1069
    %1482 = vmatprep.subr.mxu0 %v1076
    %1483 = vmatpush1.msra.mxu0 %v1075
    %1484 = vmatprep.subr.mxu0 %v1082
    %1485 = vmatpush1.msra.mxu0 %v1081
    %1486 = vmatprep.subr.mxu0 %v1088
    %1487 = vmatpush1.msra.mxu0 %v1087
    %1488 = vmatprep.subr.mxu0 %v1094
    %1489 = vmatpush1.msra.mxu0 %v1093
    %1490 = vmatprep.subr.mxu0 %v1100
    %1491 = vmatpush1.msra.mxu0 %v1099
    %1492 = vmatprep.subr.mxu0 %v1106
    %1493 = vmatpush1.msra.mxu0 %v1105
    %1494 = vmatprep.subr.mxu0 %v1112
    %1495 = vmatpush1.msra.mxu0 %v1111
    %1496 = vmatprep.subr.mxu0 %v1118
    %1497 = vmatpush1.msra.mxu0 %v1117
    %1498 = vmatprep.subr.mxu0 %v1124
    %1499 = vmatpush1.msra.mxu0 %v1123
    %1500 = vmatprep.subr.mxu0 %v1130
    %1501 = vmatpush1.msra.mxu0 %v1129
    %1502 = vmatprep.subr.mxu0 %v1136
    %1503 = vmatpush1.msra.mxu0 %v1135
    %1504 = vmatprep.subr.mxu0 %v1142
    %1505 = vmatpush1.msra.mxu0 %v1141
    %1506 = vmatprep.mubr.f32.mxu0 %v760
    %1507 = vmatmul.mubr.f32.gmra.mrb[0].mxu0 %v759
    %v1508 = vpop.f32.mrb[0].mxu0
    %v1509 = vadd.f32 %v1438, %v1508
    %v1510 = vpop.f32.mrb[0].mxu0
    %v1511 = vadd.f32 %v1440, %v1510
    %1512 = vdwg.mxu0
    %1513 = vmatprep.subr.mxu0 %v1148
    %1514 = vmatpush1.msra.mxu0 %v1147
    %1515 = vmatprep.subr.mxu0 %v1154
    %1516 = vmatpush1.msra.mxu0 %v1153
    %1517 = vmatprep.subr.mxu0 %v1160
    %1518 = vmatpush1.msra.mxu0 %v1159
    %1519 = vmatprep.subr.mxu0 %v1166
    %1520 = vmatpush1.msra.mxu0 %v1165
    %1521 = vmatprep.subr.mxu0 %v1172
    %1522 = vmatpush1.msra.mxu0 %v1171
    %1523 = vmatprep.subr.mxu0 %v1178
    %1524 = vmatpush1.msra.mxu0 %v1177
    %1525 = vmatprep.subr.mxu0 %v1184
    %1526 = vmatpush1.msra.mxu0 %v1183
    %1527 = vmatprep.subr.mxu0 %v1190
    %1528 = vmatpush1.msra.mxu0 %v1189
    %1529 = vmatprep.subr.mxu0 %v1196
    %1530 = vmatpush1.msra.mxu0 %v1195
    %1531 = vmatprep.subr.mxu0 %v1202
    %1532 = vmatpush1.msra.mxu0 %v1201
    %1533 = vmatprep.subr.mxu0 %v1208
    %1534 = vmatpush1.msra.mxu0 %v1207
    %1535 = vmatprep.subr.mxu0 %v1214
    %1536 = vmatpush1.msra.mxu0 %v1213
    %1537 = vmatprep.subr.mxu0 %v1220
    %1538 = vmatpush1.msra.mxu0 %v1219
    %1539 = vmatprep.subr.mxu0 %v1226
    %1540 = vmatpush1.msra.mxu0 %v1225
    %1541 = vmatprep.subr.mxu0 %v1232
    %1542 = vmatpush1.msra.mxu0 %v1231
    %1543 = vmatprep.subr.mxu0 %v1238
    %1544 = vmatpush1.msra.mxu0 %v1237
    %1545 = vmatprep.subr.mxu0 %v1244
    %1546 = vmatpush1.msra.mxu0 %v1243
    %1547 = vmatprep.subr.mxu0 %v1250
    %1548 = vmatpush1.msra.mxu0 %v1249
    %1549 = vmatprep.subr.mxu0 %v1256
    %1550 = vmatpush1.msra.mxu0 %v1255
    %1551 = vmatprep.subr.mxu0 %v1262
    %1552 = vmatpush1.msra.mxu0 %v1261
    %1553 = vmatprep.subr.mxu0 %v1268
    %1554 = vmatpush1.msra.mxu0 %v1267
    %1555 = vmatprep.subr.mxu0 %v1274
    %1556 = vmatpush1.msra.mxu0 %v1273
    %1557 = vmatprep.subr.mxu0 %v1280
    %1558 = vmatpush1.msra.mxu0 %v1279
    %1559 = vmatprep.subr.mxu0 %v1286
    %1560 = vmatpush1.msra.mxu0 %v1285
    %1561 = vmatprep.subr.mxu0 %v1292
    %1562 = vmatpush1.msra.mxu0 %v1291
    %1563 = vmatprep.subr.mxu0 %v1298
    %1564 = vmatpush1.msra.mxu0 %v1297
    %1565 = vmatprep.subr.mxu0 %v1304
    %1566 = vmatpush1.msra.mxu0 %v1303
    %1567 = vmatprep.subr.mxu0 %v1310
    %1568 = vmatpush1.msra.mxu0 %v1309
    %1569 = vmatprep.subr.mxu0 %v1316
    %1570 = vmatpush1.msra.mxu0 %v1315
    %1571 = vmatprep.subr.mxu0 %v1322
    %1572 = vmatpush1.msra.mxu0 %v1321
    %1573 = vmatprep.subr.mxu0 %v1328
    %1574 = vmatpush1.msra.mxu0 %v1327
    %1575 = vmatprep.subr.mxu0 %v1334
    %1576 = vmatpush1.msra.mxu0 %v1333
    %1577 = vmatprep.mubr.f32.mxu0 %v762
    %1578 = vmatmul.mubr.f32.gmra.mrb[0].mxu0 %v761
    %v1579 = vpop.f32.mrb[0].mxu0
    %v1580 = vadd.f32 %v1509, %v1579
    %v1581 = vpop.f32.mrb[0].mxu0
    %v1582 = vadd.f32 %v1511, %v1581
    %1583 = vdwg.mxu0
    %1584 = vmatprep.subr.mxu0 %v766
    %1585 = vmatpush1.msra.mxu0 %v765
    %1586 = vmatprep.subr.mxu0 %v772
    %1587 = vmatpush1.msra.mxu0 %v771
    %1588 = vmatprep.subr.mxu0 %v778
    %1589 = vmatpush1.msra.mxu0 %v777
    %1590 = vmatprep.subr.mxu0 %v784
    %1591 = vmatpush1.msra.mxu0 %v783
    %1592 = vmatprep.subr.mxu0 %v790
    %1593 = vmatpush1.msra.mxu0 %v789
    %1594 = vmatprep.subr.mxu0 %v796
    %1595 = vmatpush1.msra.mxu0 %v795
    %1596 = vmatprep.subr.mxu0 %v802
    %1597 = vmatpush1.msra.mxu0 %v801
    %1598 = vmatprep.subr.mxu0 %v808
    %1599 = vmatpush1.msra.mxu0 %v807
    %1600 = vmatprep.subr.mxu0 %v814
    %1601 = vmatpush1.msra.mxu0 %v813
    %1602 = vmatprep.subr.mxu0 %v820
    %1603 = vmatpush1.msra.mxu0 %v819
    %1604 = vmatprep.subr.mxu0 %v826
    %1605 = vmatpush1.msra.mxu0 %v825
    %1606 = vmatprep.subr.mxu0 %v832
    %1607 = vmatpush1.msra.mxu0 %v831
    %1608 = vmatprep.subr.mxu0 %v838
    %1609 = vmatpush1.msra.mxu0 %v837
    %1610 = vmatprep.subr.mxu0 %v844
    %1611 = vmatpush1.msra.mxu0 %v843
    %1612 = vmatprep.subr.mxu0 %v850
    %1613 = vmatpush1.msra.mxu0 %v849
    %1614 = vmatprep.subr.mxu0 %v856
    %1615 = vmatpush1.msra.mxu0 %v855
    %1616 = vmatprep.subr.mxu0 %v862
    %1617 = vmatpush1.msra.mxu0 %v861
    %1618 = vmatprep.subr.mxu0 %v868
    %1619 = vmatpush1.msra.mxu0 %v867
    %1620 = vmatprep.subr.mxu0 %v874
    %1621 = vmatpush1.msra.mxu0 %v873
    %1622 = vmatprep.subr.mxu0 %v880
    %1623 = vmatpush1.msra.mxu0 %v879
    %1624 = vmatprep.subr.mxu0 %v886
    %1625 = vmatpush1.msra.mxu0 %v885
    %1626 = vmatprep.subr.mxu0 %v892
    %1627 = vmatpush1.msra.mxu0 %v891
    %1628 = vmatprep.subr.mxu0 %v898
    %1629 = vmatpush1.msra.mxu0 %v897
    %1630 = vmatprep.subr.mxu0 %v904
    %1631 = vmatpush1.msra.mxu0 %v903
    %1632 = vmatprep.subr.mxu0 %v910
    %1633 = vmatpush1.msra.mxu0 %v909
    %1634 = vmatprep.subr.mxu0 %v916
    %1635 = vmatpush1.msra.mxu0 %v915
    %1636 = vmatprep.subr.mxu0 %v922
    %1637 = vmatpush1.msra.mxu0 %v921
    %1638 = vmatprep.subr.mxu0 %v928
    %1639 = vmatpush1.msra.mxu0 %v927
    %1640 = vmatprep.subr.mxu0 %v934
    %1641 = vmatpush1.msra.mxu0 %v933
    %1642 = vmatprep.subr.mxu0 %v940
    %1643 = vmatpush1.msra.mxu0 %v939
    %1644 = vmatprep.subr.mxu0 %v946
    %1645 = vmatpush1.msra.mxu0 %v945
    %1646 = vmatprep.subr.mxu0 %v952
    %1647 = vmatpush1.msra.mxu0 %v951
    %1648 = vmatprep.mubr.f32.mxu0 %v758
    %1649 = vmatmul.mubr.f32.gmra.mrb[0].mxu0 %v757
    %v1650 = vpop.f32.mrb[0].mxu0
    %v1651 = vadd.f32 %v1352, %v1650
    %v1652 = vpop.f32.mrb[0].mxu0
    %v1653 = vadd.f32 %v1356, %v1652
    %1654 = vdwg.mxu0
    %1655 = vmatprep.subr.mxu0 %v958
    %1656 = vmatpush1.msra.mxu0 %v957
    %1657 = vmatprep.subr.mxu0 %v964
    %1658 = vmatpush1.msra.mxu0 %v963
    %1659 = vmatprep.subr.mxu0 %v970
    %1660 = vmatpush1.msra.mxu0 %v969
    %1661 = vmatprep.subr.mxu0 %v976
    %1662 = vmatpush1.msra.mxu0 %v975
    %1663 = vmatprep.subr.mxu0 %v982
    %1664 = vmatpush1.msra.mxu0 %v981
    %1665 = vmatprep.subr.mxu0 %v988
    %1666 = vmatpush1.msra.mxu0 %v987
    %1667 = vmatprep.subr.mxu0 %v994
    %1668 = vmatpush1.msra.mxu0 %v993
    %1669 = vmatprep.subr.mxu0 %v1000
    %1670 = vmatpush1.msra.mxu0 %v999
    %1671 = vmatprep.subr.mxu0 %v1006
    %1672 = vmatpush1.msra.mxu0 %v1005
    %1673 = vmatprep.subr.mxu0 %v1012
    %1674 = vmatpush1.msra.mxu0 %v1011
    %1675 = vmatprep.subr.mxu0 %v1018
    %1676 = vmatpush1.msra.mxu0 %v1017
    %1677 = vmatprep.subr.mxu0 %v1024
    %1678 = vmatpush1.msra.mxu0 %v1023
    %1679 = vmatprep.subr.mxu0 %v1030
    %1680 = vmatpush1.msra.mxu0 %v1029
    %1681 = vmatprep.subr.mxu0 %v1036
    %1682 = vmatpush1.msra.mxu0 %v1035
    %1683 = vmatprep.subr.mxu0 %v1042
    %1684 = vmatpush1.msra.mxu0 %v1041
    %1685 = vmatprep.subr.mxu0 %v1048
    %1686 = vmatpush1.msra.mxu0 %v1047
    %1687 = vmatprep.subr.mxu0 %v1054
    %1688 = vmatpush1.msra.mxu0 %v1053
    %1689 = vmatprep.subr.mxu0 %v1060
    %1690 = vmatpush1.msra.mxu0 %v1059
    %1691 = vmatprep.subr.mxu0 %v1066
    %1692 = vmatpush1.msra.mxu0 %v1065
    %1693 = vmatprep.subr.mxu0 %v1072
    %1694 = vmatpush1.msra.mxu0 %v1071
    %1695 = vmatprep.subr.mxu0 %v1078
    %1696 = vmatpush1.msra.mxu0 %v1077
    %1697 = vmatprep.subr.mxu0 %v1084
    %1698 = vmatpush1.msra.mxu0 %v1083
    %1699 = vmatprep.subr.mxu0 %v1090
    %1700 = vmatpush1.msra.mxu0 %v1089
    %1701 = vmatprep.subr.mxu0 %v1096
    %1702 = vmatpush1.msra.mxu0 %v1095
    %1703 = vmatprep.subr.mxu0 %v1102
    %1704 = vmatpush1.msra.mxu0 %v1101
    %1705 = vmatprep.subr.mxu0 %v1108
    %1706 = vmatpush1.msra.mxu0 %v1107
    %1707 = vmatprep.subr.mxu0 %v1114
    %1708 = vmatpush1.msra.mxu0 %v1113
    %1709 = vmatprep.subr.mxu0 %v1120
    %1710 = vmatpush1.msra.mxu0 %v1119
    %1711 = vmatprep.subr.mxu0 %v1126
    %1712 = vmatpush1.msra.mxu0 %v1125
    %1713 = vmatprep.subr.mxu0 %v1132
    %1714 = vmatpush1.msra.mxu0 %v1131
    %1715 = vmatprep.subr.mxu0 %v1138
    %1716 = vmatpush1.msra.mxu0 %v1137
    %1717 = vmatprep.subr.mxu0 %v1144
    %1718 = vmatpush1.msra.mxu0 %v1143
    %1719 = vmatprep.mubr.f32.mxu0 %v760
    %1720 = vmatmul.mubr.f32.gmra.mrb[0].mxu0 %v759
    %v1721 = vpop.f32.mrb[0].mxu0
    %v1722 = vadd.f32 %v1651, %v1721
    %v1723 = vpop.f32.mrb[0].mxu0
    %v1724 = vadd.f32 %v1653, %v1723
    %1725 = vdwg.mxu0
    %1726 = vmatprep.subr.mxu0 %v1150
    %1727 = vmatpush1.msra.mxu0 %v1149
    %1728 = vmatprep.subr.mxu0 %v1156
    %1729 = vmatpush1.msra.mxu0 %v1155
    %1730 = vmatprep.subr.mxu0 %v1162
    %1731 = vmatpush1.msra.mxu0 %v1161
    %1732 = vmatprep.subr.mxu0 %v1168
    %1733 = vmatpush1.msra.mxu0 %v1167
    %1734 = vmatprep.subr.mxu0 %v1174
    %1735 = vmatpush1.msra.mxu0 %v1173
    %1736 = vmatprep.subr.mxu0 %v1180
    %1737 = vmatpush1.msra.mxu0 %v1179
    %1738 = vmatprep.subr.mxu0 %v1186
    %1739 = vmatpush1.msra.mxu0 %v1185
    %1740 = vmatprep.subr.mxu0 %v1192
    %1741 = vmatpush1.msra.mxu0 %v1191
    %1742 = vmatprep.subr.mxu0 %v1198
    %1743 = vmatpush1.msra.mxu0 %v1197
    %1744 = vmatprep.subr.mxu0 %v1204
    %1745 = vmatpush1.msra.mxu0 %v1203
    %1746 = vmatprep.subr.mxu0 %v1210
    %1747 = vmatpush1.msra.mxu0 %v1209
    %1748 = vmatprep.subr.mxu0 %v1216
    %1749 = vmatpush1.msra.mxu0 %v1215
    %1750 = vmatprep.subr.mxu0 %v1222
    %1751 = vmatpush1.msra.mxu0 %v1221
    %1752 = vmatprep.subr.mxu0 %v1228
    %1753 = vmatpush1.msra.mxu0 %v1227
    %1754 = vmatprep.subr.mxu0 %v1234
    %1755 = vmatpush1.msra.mxu0 %v1233
    %1756 = vmatprep.subr.mxu0 %v1240
    %1757 = vmatpush1.msra.mxu0 %v1239
    %1758 = vmatprep.subr.mxu0 %v1246
    %1759 = vmatpush1.msra.mxu0 %v1245
    %1760 = vmatprep.subr.mxu0 %v1252
    %1761 = vmatpush1.msra.mxu0 %v1251
    %1762 = vmatprep.subr.mxu0 %v1258
    %1763 = vmatpush1.msra.mxu0 %v1257
    %1764 = vmatprep.subr.mxu0 %v1264
    %1765 = vmatpush1.msra.mxu0 %v1263
    %1766 = vmatprep.subr.mxu0 %v1270
    %1767 = vmatpush1.msra.mxu0 %v1269
    %1768 = vmatprep.subr.mxu0 %v1276
    %1769 = vmatpush1.msra.mxu0 %v1275
    %1770 = vmatprep.subr.mxu0 %v1282
    %1771 = vmatpush1.msra.mxu0 %v1281
    %1772 = vmatprep.subr.mxu0 %v1288
    %1773 = vmatpush1.msra.mxu0 %v1287
    %1774 = vmatprep.subr.mxu0 %v1294
    %1775 = vmatpush1.msra.mxu0 %v1293
    %1776 = vmatprep.subr.mxu0 %v1300
    %1777 = vmatpush1.msra.mxu0 %v1299
    %1778 = vmatprep.subr.mxu0 %v1306
    %1779 = vmatpush1.msra.mxu0 %v1305
    %1780 = vmatprep.subr.mxu0 %v1312
    %1781 = vmatpush1.msra.mxu0 %v1311
    %1782 = vmatprep.subr.mxu0 %v1318
    %1783 = vmatpush1.msra.mxu0 %v1317
    %1784 = vmatprep.subr.mxu0 %v1324
    %1785 = vmatpush1.msra.mxu0 %v1323
    %1786 = vmatprep.subr.mxu0 %v1330
    %1787 = vmatpush1.msra.mxu0 %v1329
    %1788 = vmatprep.subr.mxu0 %v1336
    %1789 = vmatpush1.msra.mxu0 %v1335
    %1790 = vmatprep.mubr.f32.mxu0 %v762
    %1791 = vmatmul.mubr.f32.gmra.mrb[0].mxu0 %v761
    %v1792 = vpop.f32.mrb[0].mxu0
    %v1793 = vadd.f32 %v1722, %v1792
    %v1794 = vpop.f32.mrb[0].mxu0
    %v1795 = vadd.f32 %v1724, %v1794
    %1796 = vdwg.mxu0
    %1797 = vmatprep.subr.mxu0 %v768
    %1798 = vmatpush1.msra.mxu0 %v767
    %1799 = vmatprep.subr.mxu0 %v774
    %1800 = vmatpush1.msra.mxu0 %v773
    %1801 = vmatprep.subr.mxu0 %v780
    %1802 = vmatpush1.msra.mxu0 %v779
    %1803 = vmatprep.subr.mxu0 %v786
    %1804 = vmatpush1.msra.mxu0 %v785
    %1805 = vmatprep.subr.mxu0 %v792
    %1806 = vmatpush1.msra.mxu0 %v791
    %1807 = vmatprep.subr.mxu0 %v798
    %1808 = vmatpush1.msra.mxu0 %v797
    %1809 = vmatprep.subr.mxu0 %v804
    %1810 = vmatpush1.msra.mxu0 %v803
    %1811 = vmatprep.subr.mxu0 %v810
    %1812 = vmatpush1.msra.mxu0 %v809
    %1813 = vmatprep.subr.mxu0 %v816
    %1814 = vmatpush1.msra.mxu0 %v815
    %1815 = vmatprep.subr.mxu0 %v822
    %1816 = vmatpush1.msra.mxu0 %v821
    %1817 = vmatprep.subr.mxu0 %v828
    %1818 = vmatpush1.msra.mxu0 %v827
    %1819 = vmatprep.subr.mxu0 %v834
    %1820 = vmatpush1.msra.mxu0 %v833
    %1821 = vmatprep.subr.mxu0 %v840
    %1822 = vmatpush1.msra.mxu0 %v839
    %1823 = vmatprep.subr.mxu0 %v846
    %1824 = vmatpush1.msra.mxu0 %v845
    %1825 = vmatprep.subr.mxu0 %v852
    %1826 = vmatpush1.msra.mxu0 %v851
    %1827 = vmatprep.subr.mxu0 %v858
    %1828 = vmatpush1.msra.mxu0 %v857
    %1829 = vmatprep.subr.mxu0 %v864
    %1830 = vmatpush1.msra.mxu0 %v863
    %1831 = vmatprep.subr.mxu0 %v870
    %1832 = vmatpush1.msra.mxu0 %v869
    %1833 = vmatprep.subr.mxu0 %v876
    %1834 = vmatpush1.msra.mxu0 %v875
    %1835 = vmatprep.subr.mxu0 %v882
    %1836 = vmatpush1.msra.mxu0 %v881
    %1837 = vmatprep.subr.mxu0 %v888
    %1838 = vmatpush1.msra.mxu0 %v887
    %1839 = vmatprep.subr.mxu0 %v894
    %1840 = vmatpush1.msra.mxu0 %v893
    %1841 = vmatprep.subr.mxu0 %v900
    %1842 = vmatpush1.msra.mxu0 %v899
    %1843 = vmatprep.subr.mxu0 %v906
    %1844 = vmatpush1.msra.mxu0 %v905
    %1845 = vmatprep.subr.mxu0 %v912
    %1846 = vmatpush1.msra.mxu0 %v911
    %1847 = vmatprep.subr.mxu0 %v918
    %1848 = vmatpush1.msra.mxu0 %v917
    %1849 = vmatprep.subr.mxu0 %v924
    %1850 = vmatpush1.msra.mxu0 %v923
    %1851 = vmatprep.subr.mxu0 %v930
    %1852 = vmatpush1.msra.mxu0 %v929
    %1853 = vmatprep.subr.mxu0 %v936
    %1854 = vmatpush1.msra.mxu0 %v935
    %1855 = vmatprep.subr.mxu0 %v942
    %1856 = vmatpush1.msra.mxu0 %v941
    %1857 = vmatprep.subr.mxu0 %v948
    %1858 = vmatpush1.msra.mxu0 %v947
    %1859 = vmatprep.subr.mxu0 %v954
    %1860 = vmatpush1.msra.mxu0 %v953
    %1861 = vmatprep.mubr.f32.mxu0 %v758
    %1862 = vmatmul.mubr.f32.gmra.mrb[0].mxu0 %v757
    %v1863 = vpop.f32.mrb[0].mxu0
    %v1864 = vadd.f32 %v1360, %v1863
    %v1865 = vpop.f32.mrb[0].mxu0
    %v1866 = vadd.f32 %v1364, %v1865
    %1867 = vdwg.mxu0
    %1868 = vmatprep.subr.mxu0 %v960
    %1869 = vmatpush1.msra.mxu0 %v959
    %1870 = vmatprep.subr.mxu0 %v966
    %1871 = vmatpush1.msra.mxu0 %v965
    %1872 = vmatprep.subr.mxu0 %v972
    %1873 = vmatpush1.msra.mxu0 %v971
    %1874 = vmatprep.subr.mxu0 %v978
    %1875 = vmatpush1.msra.mxu0 %v977
    %1876 = vmatprep.subr.mxu0 %v984
    %1877 = vmatpush1.msra.mxu0 %v983
    %1878 = vmatprep.subr.mxu0 %v990
    %1879 = vmatpush1.msra.mxu0 %v989
    %1880 = vmatprep.subr.mxu0 %v996
    %1881 = vmatpush1.msra.mxu0 %v995
    %1882 = vmatprep.subr.mxu0 %v1002
    %1883 = vmatpush1.msra.mxu0 %v1001
    %1884 = vmatprep.subr.mxu0 %v1008
    %1885 = vmatpush1.msra.mxu0 %v1007
    %1886 = vmatprep.subr.mxu0 %v1014
    %1887 = vmatpush1.msra.mxu0 %v1013
    %1888 = vmatprep.subr.mxu0 %v1020
    %1889 = vmatpush1.msra.mxu0 %v1019
    %1890 = vmatprep.subr.mxu0 %v1026
    %1891 = vmatpush1.msra.mxu0 %v1025
    %1892 = vmatprep.subr.mxu0 %v1032
    %1893 = vmatpush1.msra.mxu0 %v1031
    %1894 = vmatprep.subr.mxu0 %v1038
    %1895 = vmatpush1.msra.mxu0 %v1037
    %1896 = vmatprep.subr.mxu0 %v1044
    %1897 = vmatpush1.msra.mxu0 %v1043
    %1898 = vmatprep.subr.mxu0 %v1050
    %1899 = vmatpush1.msra.mxu0 %v1049
    %1900 = vmatprep.subr.mxu0 %v1056
    %1901 = vmatpush1.msra.mxu0 %v1055
    %1902 = vmatprep.subr.mxu0 %v1062
    %1903 = vmatpush1.msra.mxu0 %v1061
    %1904 = vmatprep.subr.mxu0 %v1068
    %1905 = vmatpush1.msra.mxu0 %v1067
    %1906 = vmatprep.subr.mxu0 %v1074
    %1907 = vmatpush1.msra.mxu0 %v1073
    %1908 = vmatprep.subr.mxu0 %v1080
    %1909 = vmatpush1.msra.mxu0 %v1079
    %1910 = vmatprep.subr.mxu0 %v1086
    %1911 = vmatpush1.msra.mxu0 %v1085
    %1912 = vmatprep.subr.mxu0 %v1092
    %1913 = vmatpush1.msra.mxu0 %v1091
    %1914 = vmatprep.subr.mxu0 %v1098
    %1915 = vmatpush1.msra.mxu0 %v1097
    %1916 = vmatprep.subr.mxu0 %v1104
    %1917 = vmatpush1.msra.mxu0 %v1103
    %1918 = vmatprep.subr.mxu0 %v1110
    %1919 = vmatpush1.msra.mxu0 %v1109
    %1920 = vmatprep.subr.mxu0 %v1116
    %1921 = vmatpush1.msra.mxu0 %v1115
    %1922 = vmatprep.subr.mxu0 %v1122
    %1923 = vmatpush1.msra.mxu0 %v1121
    %1924 = vmatprep.subr.mxu0 %v1128
    %1925 = vmatpush1.msra.mxu0 %v1127
    %1926 = vmatprep.subr.mxu0 %v1134
    %1927 = vmatpush1.msra.mxu0 %v1133
    %1928 = vmatprep.subr.mxu0 %v1140
    %1929 = vmatpush1.msra.mxu0 %v1139
    %1930 = vmatprep.subr.mxu0 %v1146
    %1931 = vmatpush1.msra.mxu0 %v1145
    %1932 = vmatprep.mubr.f32.mxu0 %v760
    %1933 = vmatmul.mubr.f32.gmra.mrb[0].mxu0 %v759
    %v1934 = vpop.f32.mrb[0].mxu0
    %v1935 = vadd.f32 %v1864, %v1934
    %v1936 = vpop.f32.mrb[0].mxu0
    %v1937 = vadd.f32 %v1866, %v1936
    %1938 = vdwg.mxu0
    %1939 = vmatprep.subr.mxu0 %v1152
    %1940 = vmatpush1.msra.mxu0 %v1151
    %1941 = vmatprep.subr.mxu0 %v1158
    %1942 = vmatpush1.msra.mxu0 %v1157
    %1943 = vmatprep.subr.mxu0 %v1164
    %1944 = vmatpush1.msra.mxu0 %v1163
    %1945 = vmatprep.subr.mxu0 %v1170
    %1946 = vmatpush1.msra.mxu0 %v1169
    %1947 = vmatprep.subr.mxu0 %v1176
    %1948 = vmatpush1.msra.mxu0 %v1175
    %1949 = vmatprep.subr.mxu0 %v1182
    %1950 = vmatpush1.msra.mxu0 %v1181
    %1951 = vmatprep.subr.mxu0 %v1188
    %1952 = vmatpush1.msra.mxu0 %v1187
    %1953 = vmatprep.subr.mxu0 %v1194
    %1954 = vmatpush1.msra.mxu0 %v1193
    %1955 = vmatprep.subr.mxu0 %v1200
    %1956 = vmatpush1.msra.mxu0 %v1199
    %1957 = vmatprep.subr.mxu0 %v1206
    %1958 = vmatpush1.msra.mxu0 %v1205
    %1959 = vmatprep.subr.mxu0 %v1212
    %1960 = vmatpush1.msra.mxu0 %v1211
    %1961 = vmatprep.subr.mxu0 %v1218
    %1962 = vmatpush1.msra.mxu0 %v1217
    %1963 = vmatprep.subr.mxu0 %v1224
    %1964 = vmatpush1.msra.mxu0 %v1223
    %1965 = vmatprep.subr.mxu0 %v1230
    %1966 = vmatpush1.msra.mxu0 %v1229
    %1967 = vmatprep.subr.mxu0 %v1236
    %1968 = vmatpush1.msra.mxu0 %v1235
    %1969 = vmatprep.subr.mxu0 %v1242
    %1970 = vmatpush1.msra.mxu0 %v1241
    %1971 = vmatprep.subr.mxu0 %v1248
    %1972 = vmatpush1.msra.mxu0 %v1247
    %1973 = vmatprep.subr.mxu0 %v1254
    %1974 = vmatpush1.msra.mxu0 %v1253
    %1975 = vmatprep.subr.mxu0 %v1260
    %1976 = vmatpush1.msra.mxu0 %v1259
    %1977 = vmatprep.subr.mxu0 %v1266
    %1978 = vmatpush1.msra.mxu0 %v1265
    %1979 = vmatprep.subr.mxu0 %v1272
    %1980 = vmatpush1.msra.mxu0 %v1271
    %1981 = vmatprep.subr.mxu0 %v1278
    %1982 = vmatpush1.msra.mxu0 %v1277
    %1983 = vmatprep.subr.mxu0 %v1284
    %1984 = vmatpush1.msra.mxu0 %v1283
    %1985 = vmatprep.subr.mxu0 %v1290
    %1986 = vmatpush1.msra.mxu0 %v1289
    %1987 = vmatprep.subr.mxu0 %v1296
    %1988 = vmatpush1.msra.mxu0 %v1295
    %1989 = vmatprep.subr.mxu0 %v1302
    %1990 = vmatpush1.msra.mxu0 %v1301
    %1991 = vmatprep.subr.mxu0 %v1308
    %1992 = vmatpush1.msra.mxu0 %v1307
    %1993 = vmatprep.subr.mxu0 %v1314
    %1994 = vmatpush1.msra.mxu0 %v1313
    %1995 = vmatprep.subr.mxu0 %v1320
    %1996 = vmatpush1.msra.mxu0 %v1319
    %1997 = vmatprep.subr.mxu0 %v1326
    %1998 = vmatpush1.msra.mxu0 %v1325
    %1999 = vmatprep.subr.mxu0 %v1332
    %2000 = vmatpush1.msra.mxu0 %v1331
    %2001 = vmatprep.subr.mxu0 %v1338
    %2002 = vmatpush1.msra.mxu0 %v1337
    %2003 = vmatprep.mubr.f32.mxu0 %v762
    %2004 = vmatmul.mubr.f32.gmra.mrb[0].mxu0 %v761
    %v2005 = vpop.f32.mrb[0].mxu0
    %v2006 = vadd.f32 %v1935, %v2005
    %v2007 = vpop.f32.mrb[0].mxu0
    %v2008 = vadd.f32 %v1937, %v2007
    %2009 = vdwg.mxu0
    %v2010 = vmax.f32 %v1580, 0.0
    %v2011 = vmax.f32 %v1582, 0.0
    %v2012 = vmax.f32 %v1793, 0.0
    %v2013 = vmax.f32 %v1795, 0.0
    %v2014 = vmax.f32 %v2006, 0.0
    %v2015 = vmax.f32 %v2008, 0.0
    %v2016 = vld [vmem:[#allocation14] sm:$0xff]
    %v2017 = vld [vmem:[#allocation14 + $0x8] sm:$0xff]
    %v2018 = vld [vmem:[#allocation14 + $0x10] sm:$0xff]
    %v2019 = vld [vmem:[#allocation14 + $0x18] sm:$0xff]
    %v2020 = vld [vmem:[#allocation14 + $0x20] sm:$0xff]
    %v2021 = vld [vmem:[#allocation14 + $0x28] sm:$0xff]
    %v2022 = vld [vmem:[#allocation14 + $0x30] sm:$0xff]
    %v2023 = vld [vmem:[#allocation14 + $0x38] sm:$0xff]
    %v2024 = vld [vmem:[#allocation14 + $0x40] sm:$0xff]
    %v2025 = vld [vmem:[#allocation14 + $0x48] sm:$0xff]
    %v2026 = vld [vmem:[#allocation14 + $0x50] sm:$0xff]
    %v2027 = vld [vmem:[#allocation14 + $0x58] sm:$0xff]
    %v2028 = vld [vmem:[#allocation14 + $0x60] sm:$0xff]
    %v2029 = vld [vmem:[#allocation14 + $0x68] sm:$0xff]
    %v2030 = vld [vmem:[#allocation14 + $0x70] sm:$0xff]
    %v2031 = vld [vmem:[#allocation14 + $0x78] sm:$0xff]
    %v2032 = vld [vmem:[#allocation14 + $0x80] sm:$0xff]
    %v2033 = vld [vmem:[#allocation14 + $0x88] sm:$0xff]
    %v2034 = vld [vmem:[#allocation14 + $0x90] sm:$0xff]
    %v2035 = vld [vmem:[#allocation14 + $0x98] sm:$0xff]
    %v2036 = vld [vmem:[#allocation14 + $0xa0] sm:$0xff]
    %v2037 = vld [vmem:[#allocation14 + $0xa8] sm:$0xff]
    %v2038 = vld [vmem:[#allocation14 + $0xb0] sm:$0xff]
    %v2039 = vld [vmem:[#allocation14 + $0xb8] sm:$0xff]
    %v2040 = vld [vmem:[#allocation14 + $0xc0] sm:$0xff]
    %v2041 = vld [vmem:[#allocation14 + $0xc8] sm:$0xff]
    %v2042 = vld [vmem:[#allocation14 + $0xd0] sm:$0xff]
    %v2043 = vld [vmem:[#allocation14 + $0xd8] sm:$0xff]
    %v2044 = vld [vmem:[#allocation14 + $0xe0] sm:$0xff]
    %v2045 = vld [vmem:[#allocation14 + $0xe8] sm:$0xff]
    %v2046 = vld [vmem:[#allocation14 + $0xf0] sm:$0xff]
    %v2047 = vld [vmem:[#allocation14 + $0xf8] sm:$0xff]
    %v2048 = vld [vmem:[#allocation14 + $0x100] sm:$0xff]
    %v2049 = vld [vmem:[#allocation14 + $0x108] sm:$0xff]
    %v2050 = vld [vmem:[#allocation14 + $0x110] sm:$0xff]
    %v2051 = vld [vmem:[#allocation14 + $0x118] sm:$0xff]
    %v2052 = vld [vmem:[#allocation14 + $0x120] sm:$0xff]
    %v2053 = vld [vmem:[#allocation14 + $0x128] sm:$0xff]
    %v2054 = vld [vmem:[#allocation14 + $0x130] sm:$0xff]
    %v2055 = vld [vmem:[#allocation14 + $0x138] sm:$0xff]
    %v2056 = vld [vmem:[#allocation14 + $0x140] sm:$0xff]
    %v2057 = vld [vmem:[#allocation14 + $0x148] sm:$0xff]
    %v2058 = vld [vmem:[#allocation14 + $0x150] sm:$0xff]
    %v2059 = vld [vmem:[#allocation14 + $0x158] sm:$0xff]
    %v2060 = vld [vmem:[#allocation14 + $0x160] sm:$0xff]
    %v2061 = vld [vmem:[#allocation14 + $0x168] sm:$0xff]
    %v2062 = vld [vmem:[#allocation14 + $0x170] sm:$0xff]
    %v2063 = vld [vmem:[#allocation14 + $0x178] sm:$0xff]
    %v2064 = vld [vmem:[#allocation14 + $0x180] sm:$0xff]
    %v2065 = vld [vmem:[#allocation14 + $0x188] sm:$0xff]
    %v2066 = vld [vmem:[#allocation14 + $0x190] sm:$0xff]
    %v2067 = vld [vmem:[#allocation14 + $0x198] sm:$0xff]
    %v2068 = vld [vmem:[#allocation14 + $0x1a0] sm:$0xff]
    %v2069 = vld [vmem:[#allocation14 + $0x1a8] sm:$0xff]
    %v2070 = vld [vmem:[#allocation14 + $0x1b0] sm:$0xff]
    %v2071 = vld [vmem:[#allocation14 + $0x1b8] sm:$0xff]
    %v2072 = vld [vmem:[#allocation14 + $0x1c0] sm:$0xff]
    %v2073 = vld [vmem:[#allocation14 + $0x1c8] sm:$0xff]
    %v2074 = vld [vmem:[#allocation14 + $0x1d0] sm:$0xff]
    %v2075 = vld [vmem:[#allocation14 + $0x1d8] sm:$0xff]
    %v2076 = vld [vmem:[#allocation14 + $0x1e0] sm:$0xff]
    %v2077 = vld [vmem:[#allocation14 + $0x1e8] sm:$0xff]
    %v2078 = vld [vmem:[#allocation14 + $0x1f0] sm:$0xff]
    %v2079 = vld [vmem:[#allocation14 + $0x1f8] sm:$0xff]
    %v2080 = vld [vmem:[#allocation14 + $0x200] sm:$0xff]
    %v2081 = vld [vmem:[#allocation14 + $0x208] sm:$0xff]
    %v2082 = vld [vmem:[#allocation14 + $0x210] sm:$0xff]
    %v2083 = vld [vmem:[#allocation14 + $0x218] sm:$0xff]
    %v2084 = vld [vmem:[#allocation14 + $0x220] sm:$0xff]
    %v2085 = vld [vmem:[#allocation14 + $0x228] sm:$0xff]
    %v2086 = vld [vmem:[#allocation14 + $0x230] sm:$0xff]
    %v2087 = vld [vmem:[#allocation14 + $0x238] sm:$0xff]
    %v2088 = vld [vmem:[#allocation14 + $0x240] sm:$0xff]
    %v2089 = vld [vmem:[#allocation14 + $0x248] sm:$0xff]
    %v2090 = vld [vmem:[#allocation14 + $0x250] sm:$0xff]
    %v2091 = vld [vmem:[#allocation14 + $0x258] sm:$0xff]
    %v2092 = vld [vmem:[#allocation14 + $0x260] sm:$0xff]
    %v2093 = vld [vmem:[#allocation14 + $0x268] sm:$0xff]
    %v2094 = vld [vmem:[#allocation14 + $0x270] sm:$0xff]
    %v2095 = vld [vmem:[#allocation14 + $0x278] sm:$0xff]
    %v2096 = vld [vmem:[#allocation14 + $0x280] sm:$0xff]
    %v2097 = vld [vmem:[#allocation14 + $0x288] sm:$0xff]
    %v2098 = vld [vmem:[#allocation14 + $0x290] sm:$0xff]
    %v2099 = vld [vmem:[#allocation14 + $0x298] sm:$0xff]
    %v2100 = vld [vmem:[#allocation14 + $0x2a0] sm:$0xff]
    %v2101 = vld [vmem:[#allocation14 + $0x2a8] sm:$0xff]
    %v2102 = vld [vmem:[#allocation14 + $0x2b0] sm:$0xff]
    %v2103 = vld [vmem:[#allocation14 + $0x2b8] sm:$0xff]
    %v2104 = vld [vmem:[#allocation14 + $0x2c0] sm:$0xff]
    %v2105 = vld [vmem:[#allocation14 + $0x2c8] sm:$0xff]
    %v2106 = vld [vmem:[#allocation14 + $0x2d0] sm:$0xff]
    %v2107 = vld [vmem:[#allocation14 + $0x2d8] sm:$0xff]
    %v2108 = vld [vmem:[#allocation14 + $0x2e0] sm:$0xff]
    %v2109 = vld [vmem:[#allocation14 + $0x2e8] sm:$0xff]
    %v2110 = vld [vmem:[#allocation14 + $0x2f0] sm:$0xff]
    %v2111 = vld [vmem:[#allocation14 + $0x2f8] sm:$0xff]
    %v2112 = vld [vmem:[#allocation16] sm:$0x1]
    %v2114 = vlaneseq
    %v2115 = vshrl.u32 %v2114, 7
    %v2116 = vsub.s32 0, %v2115
    %v2117 = vrot.slane %v2112, %v2116
    %2119 = vmatprep.subr.mxu0 0.0
    %2120 = vmatpush1.msra.mxu0 %v2016
    %2121 = vmatprep.subr.mxu0 0.0
    %2122 = vmatpush1.msra.mxu0 %v2017
    %2123 = vmatprep.subr.mxu0 0.0
    %2124 = vmatpush1.msra.mxu0 %v2018
    %2125 = vmatprep.subr.mxu0 0.0
    %2126 = vmatpush1.msra.mxu0 %v2019
    %2127 = vmatprep.subr.mxu0 0.0
    %2128 = vmatpush1.msra.mxu0 %v2020
    %2129 = vmatprep.subr.mxu0 0.0
    %2130 = vmatpush1.msra.mxu0 %v2021
    %2131 = vmatprep.subr.mxu0 0.0
    %2132 = vmatpush1.msra.mxu0 %v2022
    %2133 = vmatprep.subr.mxu0 0.0
    %2134 = vmatpush1.msra.mxu0 %v2023
    %2135 = vmatprep.subr.mxu0 0.0
    %2136 = vmatpush1.msra.mxu0 %v2024
    %2137 = vmatprep.subr.mxu0 0.0
    %2138 = vmatpush1.msra.mxu0 %v2025
    %2139 = vmatprep.subr.mxu0 0.0
    %2140 = vmatpush1.msra.mxu0 %v2026
    %2141 = vmatprep.subr.mxu0 0.0
    %2142 = vmatpush1.msra.mxu0 %v2027
    %2143 = vmatprep.subr.mxu0 0.0
    %2144 = vmatpush1.msra.mxu0 %v2028
    %2145 = vmatprep.subr.mxu0 0.0
    %2146 = vmatpush1.msra.mxu0 %v2029
    %2147 = vmatprep.subr.mxu0 0.0
    %2148 = vmatpush1.msra.mxu0 %v2030
    %2149 = vmatprep.subr.mxu0 0.0
    %2150 = vmatpush1.msra.mxu0 %v2031
    %2151 = vmatprep.subr.mxu0 0.0
    %2152 = vmatpush1.msra.mxu0 %v2032
    %2153 = vmatprep.subr.mxu0 0.0
    %2154 = vmatpush1.msra.mxu0 %v2033
    %2155 = vmatprep.subr.mxu0 0.0
    %2156 = vmatpush1.msra.mxu0 %v2034
    %2157 = vmatprep.subr.mxu0 0.0
    %2158 = vmatpush1.msra.mxu0 %v2035
    %2159 = vmatprep.subr.mxu0 0.0
    %2160 = vmatpush1.msra.mxu0 %v2036
    %2161 = vmatprep.subr.mxu0 0.0
    %2162 = vmatpush1.msra.mxu0 %v2037
    %2163 = vmatprep.subr.mxu0 0.0
    %2164 = vmatpush1.msra.mxu0 %v2038
    %2165 = vmatprep.subr.mxu0 0.0
    %2166 = vmatpush1.msra.mxu0 %v2039
    %2167 = vmatprep.subr.mxu0 0.0
    %2168 = vmatpush1.msra.mxu0 %v2040
    %2169 = vmatprep.subr.mxu0 0.0
    %2170 = vmatpush1.msra.mxu0 %v2041
    %2171 = vmatprep.subr.mxu0 0.0
    %2172 = vmatpush1.msra.mxu0 %v2042
    %2173 = vmatprep.subr.mxu0 0.0
    %2174 = vmatpush1.msra.mxu0 %v2043
    %2175 = vmatprep.subr.mxu0 0.0
    %2176 = vmatpush1.msra.mxu0 %v2044
    %2177 = vmatprep.subr.mxu0 0.0
    %2178 = vmatpush1.msra.mxu0 %v2045
    %2179 = vmatprep.subr.mxu0 0.0
    %2180 = vmatpush1.msra.mxu0 %v2046
    %2181 = vmatprep.subr.mxu0 0.0
    %2182 = vmatpush1.msra.mxu0 %v2047
    %2183 = vmatprep.mubr.f32.mxu0 %v2011
    %2184 = vmatmul.mubr.f32.gmra.mrb[0].mxu0 %v2010
    %v2185 = vpop.f32.mrb[0].mxu0
    %v2186 = vadd.f32 %v2117, %v2185
    %v2187 = vpop.f32.mrb[0].mxu0
    %2188 = vdwg.mxu0
    %2189 = vmatprep.subr.mxu0 0.0
    %2190 = vmatpush1.msra.mxu0 %v2048
    %2191 = vmatprep.subr.mxu0 0.0
    %2192 = vmatpush1.msra.mxu0 %v2049
    %2193 = vmatprep.subr.mxu0 0.0
    %2194 = vmatpush1.msra.mxu0 %v2050
    %2195 = vmatprep.subr.mxu0 0.0
    %2196 = vmatpush1.msra.mxu0 %v2051
    %2197 = vmatprep.subr.mxu0 0.0
    %2198 = vmatpush1.msra.mxu0 %v2052
    %2199 = vmatprep.subr.mxu0 0.0
    %2200 = vmatpush1.msra.mxu0 %v2053
    %2201 = vmatprep.subr.mxu0 0.0
    %2202 = vmatpush1.msra.mxu0 %v2054
    %2203 = vmatprep.subr.mxu0 0.0
    %2204 = vmatpush1.msra.mxu0 %v2055
    %2205 = vmatprep.subr.mxu0 0.0
    %2206 = vmatpush1.msra.mxu0 %v2056
    %2207 = vmatprep.subr.mxu0 0.0
    %2208 = vmatpush1.msra.mxu0 %v2057
    %2209 = vmatprep.subr.mxu0 0.0
    %2210 = vmatpush1.msra.mxu0 %v2058
    %2211 = vmatprep.subr.mxu0 0.0
    %2212 = vmatpush1.msra.mxu0 %v2059
    %2213 = vmatprep.subr.mxu0 0.0
    %2214 = vmatpush1.msra.mxu0 %v2060
    %2215 = vmatprep.subr.mxu0 0.0
    %2216 = vmatpush1.msra.mxu0 %v2061
    %2217 = vmatprep.subr.mxu0 0.0
    %2218 = vmatpush1.msra.mxu0 %v2062
    %2219 = vmatprep.subr.mxu0 0.0
    %2220 = vmatpush1.msra.mxu0 %v2063
    %2221 = vmatprep.subr.mxu0 0.0
    %2222 = vmatpush1.msra.mxu0 %v2064
    %2223 = vmatprep.subr.mxu0 0.0
    %2224 = vmatpush1.msra.mxu0 %v2065
    %2225 = vmatprep.subr.mxu0 0.0
    %2226 = vmatpush1.msra.mxu0 %v2066
    %2227 = vmatprep.subr.mxu0 0.0
    %2228 = vmatpush1.msra.mxu0 %v2067
    %2229 = vmatprep.subr.mxu0 0.0
    %2230 = vmatpush1.msra.mxu0 %v2068
    %2231 = vmatprep.subr.mxu0 0.0
    %2232 = vmatpush1.msra.mxu0 %v2069
    %2233 = vmatprep.subr.mxu0 0.0
    %2234 = vmatpush1.msra.mxu0 %v2070
    %2235 = vmatprep.subr.mxu0 0.0
    %2236 = vmatpush1.msra.mxu0 %v2071
    %2237 = vmatprep.subr.mxu0 0.0
    %2238 = vmatpush1.msra.mxu0 %v2072
    %2239 = vmatprep.subr.mxu0 0.0
    %2240 = vmatpush1.msra.mxu0 %v2073
    %2241 = vmatprep.subr.mxu0 0.0
    %2242 = vmatpush1.msra.mxu0 %v2074
    %2243 = vmatprep.subr.mxu0 0.0
    %2244 = vmatpush1.msra.mxu0 %v2075
    %2245 = vmatprep.subr.mxu0 0.0
    %2246 = vmatpush1.msra.mxu0 %v2076
    %2247 = vmatprep.subr.mxu0 0.0
    %2248 = vmatpush1.msra.mxu0 %v2077
    %2249 = vmatprep.subr.mxu0 0.0
    %2250 = vmatpush1.msra.mxu0 %v2078
    %2251 = vmatprep.subr.mxu0 0.0
    %2252 = vmatpush1.msra.mxu0 %v2079
    %2253 = vmatprep.mubr.f32.mxu0 %v2013
    %2254 = vmatmul.mubr.f32.gmra.mrb[0].mxu0 %v2012
    %v2255 = vpop.f32.mrb[0].mxu0
    %v2256 = vadd.f32 %v2186, %v2255
    %v2257 = vpop.f32.mrb[0].mxu0
    %2258 = vdwg.mxu0
    %2259 = vmatprep.subr.mxu0 0.0
    %2260 = vmatpush1.msra.mxu0 %v2080
    %2261 = vmatprep.subr.mxu0 0.0
    %2262 = vmatpush1.msra.mxu0 %v2081
    %2263 = vmatprep.subr.mxu0 0.0
    %2264 = vmatpush1.msra.mxu0 %v2082
    %2265 = vmatprep.subr.mxu0 0.0
    %2266 = vmatpush1.msra.mxu0 %v2083
    %2267 = vmatprep.subr.mxu0 0.0
    %2268 = vmatpush1.msra.mxu0 %v2084
    %2269 = vmatprep.subr.mxu0 0.0
    %2270 = vmatpush1.msra.mxu0 %v2085
    %2271 = vmatprep.subr.mxu0 0.0
    %2272 = vmatpush1.msra.mxu0 %v2086
    %2273 = vmatprep.subr.mxu0 0.0
    %2274 = vmatpush1.msra.mxu0 %v2087
    %2275 = vmatprep.subr.mxu0 0.0
    %2276 = vmatpush1.msra.mxu0 %v2088
    %2277 = vmatprep.subr.mxu0 0.0
    %2278 = vmatpush1.msra.mxu0 %v2089
    %2279 = vmatprep.subr.mxu0 0.0
    %2280 = vmatpush1.msra.mxu0 %v2090
    %2281 = vmatprep.subr.mxu0 0.0
    %2282 = vmatpush1.msra.mxu0 %v2091
    %2283 = vmatprep.subr.mxu0 0.0
    %2284 = vmatpush1.msra.mxu0 %v2092
    %2285 = vmatprep.subr.mxu0 0.0
    %2286 = vmatpush1.msra.mxu0 %v2093
    %2287 = vmatprep.subr.mxu0 0.0
    %2288 = vmatpush1.msra.mxu0 %v2094
    %2289 = vmatprep.subr.mxu0 0.0
    %2290 = vmatpush1.msra.mxu0 %v2095
    %2291 = vmatprep.subr.mxu0 0.0
    %2292 = vmatpush1.msra.mxu0 %v2096
    %2293 = vmatprep.subr.mxu0 0.0
    %2294 = vmatpush1.msra.mxu0 %v2097
    %2295 = vmatprep.subr.mxu0 0.0
    %2296 = vmatpush1.msra.mxu0 %v2098
    %2297 = vmatprep.subr.mxu0 0.0
    %2298 = vmatpush1.msra.mxu0 %v2099
    %2299 = vmatprep.subr.mxu0 0.0
    %2300 = vmatpush1.msra.mxu0 %v2100
    %2301 = vmatprep.subr.mxu0 0.0
    %2302 = vmatpush1.msra.mxu0 %v2101
    %2303 = vmatprep.subr.mxu0 0.0
    %2304 = vmatpush1.msra.mxu0 %v2102
    %2305 = vmatprep.subr.mxu0 0.0
    %2306 = vmatpush1.msra.mxu0 %v2103
    %2307 = vmatprep.subr.mxu0 0.0
    %2308 = vmatpush1.msra.mxu0 %v2104
    %2309 = vmatprep.subr.mxu0 0.0
    %2310 = vmatpush1.msra.mxu0 %v2105
    %2311 = vmatprep.subr.mxu0 0.0
    %2312 = vmatpush1.msra.mxu0 %v2106
    %2313 = vmatprep.subr.mxu0 0.0
    %2314 = vmatpush1.msra.mxu0 %v2107
    %2315 = vmatprep.subr.mxu0 0.0
    %2316 = vmatpush1.msra.mxu0 %v2108
    %2317 = vmatprep.subr.mxu0 0.0
    %2318 = vmatpush1.msra.mxu0 %v2109
    %2319 = vmatprep.subr.mxu0 0.0
    %2320 = vmatpush1.msra.mxu0 %v2110
    %2321 = vmatprep.subr.mxu0 0.0
    %2322 = vmatpush1.msra.mxu0 %v2111
    %2323 = vmatprep.mubr.f32.mxu0 %v2015
    %2324 = vmatmul.mubr.f32.gmra.mrb[0].mxu0 %v2014
    %v2325 = vpop.f32.mrb[0].mxu0
    %v2326 = vadd.f32 %v2256, %v2325
    %v2327 = vpop.f32.mrb[0].mxu0
    %2328 = vdwg.mxu0
    %v2329 = vmax.f32 %v2326, -4.0
    %v2330 = vmin.f32 %v2329, 15.0
    %v2331 = vmul.f32 %v2330, 1.442695
    %v2332 = vpow.pop %v2331
    %2334 = vrot.lane.b32.xlu0 %v256, 8
    %v2335 = vpop.permute.xlu0 %2334
    %v2337 = vmul.f32 %v2332, %v2335
    %2339 = vrot.lane.b32.xlu0 %v2337, 120
    %v2340 = vpop.permute.xlu0 %2339
    %v2342 = vadd.f32 %v2326, %v2340
    %v2343 = vld [vmem:[#allocation17] sm:$0xff]
    %v2344 = vld [vmem:[#allocation17 + $0x8] sm:$0xff]
    %v2345 = vld [vmem:[#allocation17 + $0x10] sm:$0xff]
    %v2346 = vld [vmem:[#allocation17 + $0x18] sm:$0xff]
    %v2347 = vld [vmem:[#allocation17 + $0x20] sm:$0xff]
    %v2348 = vld [vmem:[#allocation17 + $0x28] sm:$0xff]
    %v2349 = vld [vmem:[#allocation19] sm:$0xff]
    %v2350 = vld [vmem:[#allocation19 + $0x8] sm:$0xff]
    %v2351 = vld [vmem:[#allocation19 + $0x10] sm:$0xff]
    %v2352 = vld [vmem:[#allocation19 + $0x18] sm:$0xff]
    %v2353 = vld [vmem:[#allocation19 + $0x20] sm:$0xff]
    %v2354 = vld [vmem:[#allocation19 + $0x28] sm:$0xff]
    %v2356 = vsel %vm502, %v2342, 0
    %2358 = vmatprep.subr.mxu0 %v2350
    %2359 = vmatpush1.msra.mxu0 %v2349
    %2360 = vmatprep.subr.mxu0 0.0
    %2361 = vmatpush1.msra.mxu0 0.0
    %2362 = vmatprep.subr.mxu0 0.0
    %2363 = vmatpush1.msra.mxu0 0.0
    %2364 = vmatprep.subr.mxu0 0.0
    %2365 = vmatpush1.msra.mxu0 0.0
    %2366 = vmatprep.subr.mxu0 0.0
    %2367 = vmatpush1.msra.mxu0 0.0
    %2368 = vmatprep.subr.mxu0 0.0
    %2369 = vmatpush1.msra.mxu0 0.0
    %2370 = vmatprep.subr.mxu0 0.0
    %2371 = vmatpush1.msra.mxu0 0.0
    %2372 = vmatprep.subr.mxu0 0.0
    %2373 = vmatpush1.msra.mxu0 0.0
    %2374 = vmatprep.subr.mxu0 0.0
    %2375 = vmatpush1.msra.mxu0 0.0
    %2376 = vmatprep.subr.mxu0 0.0
    %2377 = vmatpush1.msra.mxu0 0.0
    %2378 = vmatprep.subr.mxu0 0.0
    %2379 = vmatpush1.msra.mxu0 0.0
    %2380 = vmatprep.subr.mxu0 0.0
    %2381 = vmatpush1.msra.mxu0 0.0
    %2382 = vmatprep.subr.mxu0 0.0
    %2383 = vmatpush1.msra.mxu0 0.0
    %2384 = vmatprep.subr.mxu0 0.0
    %2385 = vmatpush1.msra.mxu0 0.0
    %2386 = vmatprep.subr.mxu0 0.0
    %2387 = vmatpush1.msra.mxu0 0.0
    %2388 = vmatprep.subr.mxu0 0.0
    %2389 = vmatpush1.msra.mxu0 0.0
    %2390 = vmatprep.subr.mxu0 0.0
    %2391 = vmatpush1.msra.mxu0 0.0
    %2392 = vmatprep.subr.mxu0 0.0
    %2393 = vmatpush1.msra.mxu0 0.0
    %2394 = vmatprep.subr.mxu0 0.0
    %2395 = vmatpush1.msra.mxu0 0.0
    %2396 = vmatprep.subr.mxu0 0.0
    %2397 = vmatpush1.msra.mxu0 0.0
    %2398 = vmatprep.subr.mxu0 0.0
    %2399 = vmatpush1.msra.mxu0 0.0
    %2400 = vmatprep.subr.mxu0 0.0
    %2401 = vmatpush1.msra.mxu0 0.0
    %2402 = vmatprep.subr.mxu0 0.0
    %2403 = vmatpush1.msra.mxu0 0.0
    %2404 = vmatprep.subr.mxu0 0.0
    %2405 = vmatpush1.msra.mxu0 0.0
    %2406 = vmatprep.subr.mxu0 0.0
    %2407 = vmatpush1.msra.mxu0 0.0
    %2408 = vmatprep.subr.mxu0 0.0
    %2409 = vmatpush1.msra.mxu0 0.0
    %2410 = vmatprep.subr.mxu0 0.0
    %2411 = vmatpush1.msra.mxu0 0.0
    %2412 = vmatprep.subr.mxu0 0.0
    %2413 = vmatpush1.msra.mxu0 0.0
    %2414 = vmatprep.subr.mxu0 0.0
    %2415 = vmatpush1.msra.mxu0 0.0
    %2416 = vmatprep.subr.mxu0 0.0
    %2417 = vmatpush1.msra.mxu0 0.0
    %2418 = vmatprep.subr.mxu0 0.0
    %2419 = vmatpush1.msra.mxu0 0.0
    %2420 = vmatprep.subr.mxu0 0.0
    %2421 = vmatpush1.msra.mxu0 0.0
    %2422 = vmatprep.mubr.f32.mxu0 0.0
    %2423 = vmatmul.mubr.f32.gmra.mrb[0].mxu0 %v2356
    %v2424 = vpop.f32.mrb[0].mxu0
    %v2425 = vadd.f32 0.0, %v2424
    %v2426 = vpop.f32.mrb[0].mxu0
    %v2427 = vadd.f32 0.0, %v2426
    %2428 = vdwg.mxu0
    %2429 = vmatprep.subr.mxu0 %v2352
    %2430 = vmatpush1.msra.mxu0 %v2351
    %2431 = vmatprep.subr.mxu0 0.0
    %2432 = vmatpush1.msra.mxu0 0.0
    %2433 = vmatprep.subr.mxu0 0.0
    %2434 = vmatpush1.msra.mxu0 0.0
    %2435 = vmatprep.subr.mxu0 0.0
    %2436 = vmatpush1.msra.mxu0 0.0
    %2437 = vmatprep.subr.mxu0 0.0
    %2438 = vmatpush1.msra.mxu0 0.0
    %2439 = vmatprep.subr.mxu0 0.0
    %2440 = vmatpush1.msra.mxu0 0.0
    %2441 = vmatprep.subr.mxu0 0.0
    %2442 = vmatpush1.msra.mxu0 0.0
    %2443 = vmatprep.subr.mxu0 0.0
    %2444 = vmatpush1.msra.mxu0 0.0
    %2445 = vmatprep.subr.mxu0 0.0
    %2446 = vmatpush1.msra.mxu0 0.0
    %2447 = vmatprep.subr.mxu0 0.0
    %2448 = vmatpush1.msra.mxu0 0.0
    %2449 = vmatprep.subr.mxu0 0.0
    %2450 = vmatpush1.msra.mxu0 0.0
    %2451 = vmatprep.subr.mxu0 0.0
    %2452 = vmatpush1.msra.mxu0 0.0
    %2453 = vmatprep.subr.mxu0 0.0
    %2454 = vmatpush1.msra.mxu0 0.0
    %2455 = vmatprep.subr.mxu0 0.0
    %2456 = vmatpush1.msra.mxu0 0.0
    %2457 = vmatprep.subr.mxu0 0.0
    %2458 = vmatpush1.msra.mxu0 0.0
    %2459 = vmatprep.subr.mxu0 0.0
    %2460 = vmatpush1.msra.mxu0 0.0
    %2461 = vmatprep.subr.mxu0 0.0
    %2462 = vmatpush1.msra.mxu0 0.0
    %2463 = vmatprep.subr.mxu0 0.0
    %2464 = vmatpush1.msra.mxu0 0.0
    %2465 = vmatprep.subr.mxu0 0.0
    %2466 = vmatpush1.msra.mxu0 0.0
    %2467 = vmatprep.subr.mxu0 0.0
    %2468 = vmatpush1.msra.mxu0 0.0
    %2469 = vmatprep.subr.mxu0 0.0
    %2470 = vmatpush1.msra.mxu0 0.0
    %2471 = vmatprep.subr.mxu0 0.0
    %2472 = vmatpush1.msra.mxu0 0.0
    %2473 = vmatprep.subr.mxu0 0.0
    %2474 = vmatpush1.msra.mxu0 0.0
    %2475 = vmatprep.subr.mxu0 0.0
    %2476 = vmatpush1.msra.mxu0 0.0
    %2477 = vmatprep.subr.mxu0 0.0
    %2478 = vmatpush1.msra.mxu0 0.0
    %2479 = vmatprep.subr.mxu0 0.0
    %2480 = vmatpush1.msra.mxu0 0.0
    %2481 = vmatprep.subr.mxu0 0.0
    %2482 = vmatpush1.msra.mxu0 0.0
    %2483 = vmatprep.subr.mxu0 0.0
    %2484 = vmatpush1.msra.mxu0 0.0
    %2485 = vmatprep.subr.mxu0 0.0
    %2486 = vmatpush1.msra.mxu0 0.0
    %2487 = vmatprep.subr.mxu0 0.0
    %2488 = vmatpush1.msra.mxu0 0.0
    %2489 = vmatprep.subr.mxu0 0.0
    %2490 = vmatpush1.msra.mxu0 0.0
    %2491 = vmatprep.subr.mxu0 0.0
    %2492 = vmatpush1.msra.mxu0 0.0
    %2493 = vmatprep.mubr.f32.mxu0 0.0
    %2494 = vmatmul.mubr.f32.gmra.mrb[0].mxu0 %v2356
    %v2495 = vpop.f32.mrb[0].mxu0
    %v2496 = vadd.f32 0.0, %v2495
    %v2497 = vpop.f32.mrb[0].mxu0
    %v2498 = vadd.f32 0.0, %v2497
    %2499 = vdwg.mxu0
    %2500 = vmatprep.subr.mxu0 %v2354
    %2501 = vmatpush1.msra.mxu0 %v2353
    %2502 = vmatprep.subr.mxu0 0.0
    %2503 = vmatpush1.msra.mxu0 0.0
    %2504 = vmatprep.subr.mxu0 0.0
    %2505 = vmatpush1.msra.mxu0 0.0
    %2506 = vmatprep.subr.mxu0 0.0
    %2507 = vmatpush1.msra.mxu0 0.0
    %2508 = vmatprep.subr.mxu0 0.0
    %2509 = vmatpush1.msra.mxu0 0.0
    %2510 = vmatprep.subr.mxu0 0.0
    %2511 = vmatpush1.msra.mxu0 0.0
    %2512 = vmatprep.subr.mxu0 0.0
    %2513 = vmatpush1.msra.mxu0 0.0
    %2514 = vmatprep.subr.mxu0 0.0
    %2515 = vmatpush1.msra.mxu0 0.0
    %2516 = vmatprep.subr.mxu0 0.0
    %2517 = vmatpush1.msra.mxu0 0.0
    %2518 = vmatprep.subr.mxu0 0.0
    %2519 = vmatpush1.msra.mxu0 0.0
    %2520 = vmatprep.subr.mxu0 0.0
    %2521 = vmatpush1.msra.mxu0 0.0
    %2522 = vmatprep.subr.mxu0 0.0
    %2523 = vmatpush1.msra.mxu0 0.0
    %2524 = vmatprep.subr.mxu0 0.0
    %2525 = vmatpush1.msra.mxu0 0.0
    %2526 = vmatprep.subr.mxu0 0.0
    %2527 = vmatpush1.msra.mxu0 0.0
    %2528 = vmatprep.subr.mxu0 0.0
    %2529 = vmatpush1.msra.mxu0 0.0
    %2530 = vmatprep.subr.mxu0 0.0
    %2531 = vmatpush1.msra.mxu0 0.0
    %2532 = vmatprep.subr.mxu0 0.0
    %2533 = vmatpush1.msra.mxu0 0.0
    %2534 = vmatprep.subr.mxu0 0.0
    %2535 = vmatpush1.msra.mxu0 0.0
    %2536 = vmatprep.subr.mxu0 0.0
    %2537 = vmatpush1.msra.mxu0 0.0
    %2538 = vmatprep.subr.mxu0 0.0
    %2539 = vmatpush1.msra.mxu0 0.0
    %2540 = vmatprep.subr.mxu0 0.0
    %2541 = vmatpush1.msra.mxu0 0.0
    %2542 = vmatprep.subr.mxu0 0.0
    %2543 = vmatpush1.msra.mxu0 0.0
    %2544 = vmatprep.subr.mxu0 0.0
    %2545 = vmatpush1.msra.mxu0 0.0
    %2546 = vmatprep.subr.mxu0 0.0
    %2547 = vmatpush1.msra.mxu0 0.0
    %2548 = vmatprep.subr.mxu0 0.0
    %2549 = vmatpush1.msra.mxu0 0.0
    %2550 = vmatprep.subr.mxu0 0.0
    %2551 = vmatpush1.msra.mxu0 0.0
    %2552 = vmatprep.subr.mxu0 0.0
    %2553 = vmatpush1.msra.mxu0 0.0
    %2554 = vmatprep.subr.mxu0 0.0
    %2555 = vmatpush1.msra.mxu0 0.0
    %2556 = vmatprep.subr.mxu0 0.0
    %2557 = vmatpush1.msra.mxu0 0.0
    %2558 = vmatprep.subr.mxu0 0.0
    %2559 = vmatpush1.msra.mxu0 0.0
    %2560 = vmatprep.subr.mxu0 0.0
    %2561 = vmatpush1.msra.mxu0 0.0
    %2562 = vmatprep.subr.mxu0 0.0
    %2563 = vmatpush1.msra.mxu0 0.0
    %2564 = vmatprep.mubr.f32.mxu0 0.0
    %2565 = vmatmul.mubr.f32.gmra.mrb[0].mxu0 %v2356
    %v2566 = vpop.f32.mrb[0].mxu0
    %v2567 = vadd.f32 0.0, %v2566
    %v2568 = vpop.f32.mrb[0].mxu0
    %v2569 = vadd.f32 0.0, %v2568
    %2570 = vdwg.mxu0
    %2571 = vmatprep.subr.mxu0 %v2344
    %2572 = vmatpush1.msra.mxu0 %v2343
    %2573 = vmatprep.subr.mxu0 0.0
    %2574 = vmatpush1.msra.mxu0 0.0
    %2575 = vmatprep.subr.mxu0 0.0
    %2576 = vmatpush1.msra.mxu0 0.0
    %2577 = vmatprep.subr.mxu0 0.0
    %2578 = vmatpush1.msra.mxu0 0.0
    %2579 = vmatprep.subr.mxu0 0.0
    %2580 = vmatpush1.msra.mxu0 0.0
    %2581 = vmatprep.subr.mxu0 0.0
    %2582 = vmatpush1.msra.mxu0 0.0
    %2583 = vmatprep.subr.mxu0 0.0
    %2584 = vmatpush1.msra.mxu0 0.0
    %2585 = vmatprep.subr.mxu0 0.0
    %2586 = vmatpush1.msra.mxu0 0.0
    %2587 = vmatprep.subr.mxu0 0.0
    %2588 = vmatpush1.msra.mxu0 0.0
    %2589 = vmatprep.subr.mxu0 0.0
    %2590 = vmatpush1.msra.mxu0 0.0
    %2591 = vmatprep.subr.mxu0 0.0
    %2592 = vmatpush1.msra.mxu0 0.0
    %2593 = vmatprep.subr.mxu0 0.0
    %2594 = vmatpush1.msra.mxu0 0.0
    %2595 = vmatprep.subr.mxu0 0.0
    %2596 = vmatpush1.msra.mxu0 0.0
    %2597 = vmatprep.subr.mxu0 0.0
    %2598 = vmatpush1.msra.mxu0 0.0
    %2599 = vmatprep.subr.mxu0 0.0
    %2600 = vmatpush1.msra.mxu0 0.0
    %2601 = vmatprep.subr.mxu0 0.0
    %2602 = vmatpush1.msra.mxu0 0.0
    %2603 = vmatprep.subr.mxu0 0.0
    %2604 = vmatpush1.msra.mxu0 0.0
    %2605 = vmatprep.subr.mxu0 0.0
    %2606 = vmatpush1.msra.mxu0 0.0
    %2607 = vmatprep.subr.mxu0 0.0
    %2608 = vmatpush1.msra.mxu0 0.0
    %2609 = vmatprep.subr.mxu0 0.0
    %2610 = vmatpush1.msra.mxu0 0.0
    %2611 = vmatprep.subr.mxu0 0.0
    %2612 = vmatpush1.msra.mxu0 0.0
    %2613 = vmatprep.subr.mxu0 0.0
    %2614 = vmatpush1.msra.mxu0 0.0
    %2615 = vmatprep.subr.mxu0 0.0
    %2616 = vmatpush1.msra.mxu0 0.0
    %2617 = vmatprep.subr.mxu0 0.0
    %2618 = vmatpush1.msra.mxu0 0.0
    %2619 = vmatprep.subr.mxu0 0.0
    %2620 = vmatpush1.msra.mxu0 0.0
    %2621 = vmatprep.subr.mxu0 0.0
    %2622 = vmatpush1.msra.mxu0 0.0
    %2623 = vmatprep.subr.mxu0 0.0
    %2624 = vmatpush1.msra.mxu0 0.0
    %2625 = vmatprep.subr.mxu0 0.0
    %2626 = vmatpush1.msra.mxu0 0.0
    %2627 = vmatprep.subr.mxu0 0.0
    %2628 = vmatpush1.msra.mxu0 0.0
    %2629 = vmatprep.subr.mxu0 0.0
    %2630 = vmatpush1.msra.mxu0 0.0
    %2631 = vmatprep.subr.mxu0 0.0
    %2632 = vmatpush1.msra.mxu0 0.0
    %2633 = vmatprep.subr.mxu0 0.0
    %2634 = vmatpush1.msra.mxu0 0.0
    %2635 = vmatprep.mubr.f32.mxu0 0.0
    %2636 = vmatmul.mubr.f32.gmra.mrb[0].mxu0 %v504
    %v2637 = vpop.f32.mrb[0].mxu0
    %v2638 = vadd.f32 %v2425, %v2637
    %v2639 = vpop.f32.mrb[0].mxu0
    %v2640 = vadd.f32 %v2427, %v2639
    %2641 = vdwg.mxu0
    %2642 = vmatprep.subr.mxu0 %v2346
    %2643 = vmatpush1.msra.mxu0 %v2345
    %2644 = vmatprep.subr.mxu0 0.0
    %2645 = vmatpush1.msra.mxu0 0.0
    %2646 = vmatprep.subr.mxu0 0.0
    %2647 = vmatpush1.msra.mxu0 0.0
    %2648 = vmatprep.subr.mxu0 0.0
    %2649 = vmatpush1.msra.mxu0 0.0
    %2650 = vmatprep.subr.mxu0 0.0
    %2651 = vmatpush1.msra.mxu0 0.0
    %2652 = vmatprep.subr.mxu0 0.0
    %2653 = vmatpush1.msra.mxu0 0.0
    %2654 = vmatprep.subr.mxu0 0.0
    %2655 = vmatpush1.msra.mxu0 0.0
    %2656 = vmatprep.subr.mxu0 0.0
    %2657 = vmatpush1.msra.mxu0 0.0
    %2658 = vmatprep.subr.mxu0 0.0
    %2659 = vmatpush1.msra.mxu0 0.0
    %2660 = vmatprep.subr.mxu0 0.0
    %2661 = vmatpush1.msra.mxu0 0.0
    %2662 = vmatprep.subr.mxu0 0.0
    %2663 = vmatpush1.msra.mxu0 0.0
    %2664 = vmatprep.subr.mxu0 0.0
    %2665 = vmatpush1.msra.mxu0 0.0
    %2666 = vmatprep.subr.mxu0 0.0
    %2667 = vmatpush1.msra.mxu0 0.0
    %2668 = vmatprep.subr.mxu0 0.0
    %2669 = vmatpush1.msra.mxu0 0.0
    %2670 = vmatprep.subr.mxu0 0.0
    %2671 = vmatpush1.msra.mxu0 0.0
    %2672 = vmatprep.subr.mxu0 0.0
    %2673 = vmatpush1.msra.mxu0 0.0
    %2674 = vmatprep.subr.mxu0 0.0
    %2675 = vmatpush1.msra.mxu0 0.0
    %2676 = vmatprep.subr.mxu0 0.0
    %2677 = vmatpush1.msra.mxu0 0.0
    %2678 = vmatprep.subr.mxu0 0.0
    %2679 = vmatpush1.msra.mxu0 0.0
    %2680 = vmatprep.subr.mxu0 0.0
    %2681 = vmatpush1.msra.mxu0 0.0
    %2682 = vmatprep.subr.mxu0 0.0
    %2683 = vmatpush1.msra.mxu0 0.0
    %2684 = vmatprep.subr.mxu0 0.0
    %2685 = vmatpush1.msra.mxu0 0.0
    %2686 = vmatprep.subr.mxu0 0.0
    %2687 = vmatpush1.msra.mxu0 0.0
    %2688 = vmatprep.subr.mxu0 0.0
    %2689 = vmatpush1.msra.mxu0 0.0
    %2690 = vmatprep.subr.mxu0 0.0
    %2691 = vmatpush1.msra.mxu0 0.0
    %2692 = vmatprep.subr.mxu0 0.0
    %2693 = vmatpush1.msra.mxu0 0.0
    %2694 = vmatprep.subr.mxu0 0.0
    %2695 = vmatpush1.msra.mxu0 0.0
    %2696 = vmatprep.subr.mxu0 0.0
    %2697 = vmatpush1.msra.mxu0 0.0
    %2698 = vmatprep.subr.mxu0 0.0
    %2699 = vmatpush1.msra.mxu0 0.0
    %2700 = vmatprep.subr.mxu0 0.0
    %2701 = vmatpush1.msra.mxu0 0.0
    %2702 = vmatprep.subr.mxu0 0.0
    %2703 = vmatpush1.msra.mxu0 0.0
    %2704 = vmatprep.subr.mxu0 0.0
    %2705 = vmatpush1.msra.mxu0 0.0
    %2706 = vmatprep.mubr.f32.mxu0 0.0
    %2707 = vmatmul.mubr.f32.gmra.mrb[0].mxu0 %v504
    %v2708 = vpop.f32.mrb[0].mxu0
    %v2709 = vadd.f32 %v2496, %v2708
    %v2710 = vpop.f32.mrb[0].mxu0
    %v2711 = vadd.f32 %v2498, %v2710
    %2712 = vdwg.mxu0
    %2713 = vmatprep.subr.mxu0 %v2348
    %2714 = vmatpush1.msra.mxu0 %v2347
    %2715 = vmatprep.subr.mxu0 0.0
    %2716 = vmatpush1.msra.mxu0 0.0
    %2717 = vmatprep.subr.mxu0 0.0
    %2718 = vmatpush1.msra.mxu0 0.0
    %2719 = vmatprep.subr.mxu0 0.0
    %2720 = vmatpush1.msra.mxu0 0.0
    %2721 = vmatprep.subr.mxu0 0.0
    %2722 = vmatpush1.msra.mxu0 0.0
    %2723 = vmatprep.subr.mxu0 0.0
    %2724 = vmatpush1.msra.mxu0 0.0
    %2725 = vmatprep.subr.mxu0 0.0
    %2726 = vmatpush1.msra.mxu0 0.0
    %2727 = vmatprep.subr.mxu0 0.0
    %2728 = vmatpush1.msra.mxu0 0.0
    %2729 = vmatprep.subr.mxu0 0.0
    %2730 = vmatpush1.msra.mxu0 0.0
    %2731 = vmatprep.subr.mxu0 0.0
    %2732 = vmatpush1.msra.mxu0 0.0
    %2733 = vmatprep.subr.mxu0 0.0
    %2734 = vmatpush1.msra.mxu0 0.0
    %2735 = vmatprep.subr.mxu0 0.0
    %2736 = vmatpush1.msra.mxu0 0.0
    %2737 = vmatprep.subr.mxu0 0.0
    %2738 = vmatpush1.msra.mxu0 0.0
    %2739 = vmatprep.subr.mxu0 0.0
    %2740 = vmatpush1.msra.mxu0 0.0
    %2741 = vmatprep.subr.mxu0 0.0
    %2742 = vmatpush1.msra.mxu0 0.0
    %2743 = vmatprep.subr.mxu0 0.0
    %2744 = vmatpush1.msra.mxu0 0.0
    %2745 = vmatprep.subr.mxu0 0.0
    %2746 = vmatpush1.msra.mxu0 0.0
    %2747 = vmatprep.subr.mxu0 0.0
    %2748 = vmatpush1.msra.mxu0 0.0
    %2749 = vmatprep.subr.mxu0 0.0
    %2750 = vmatpush1.msra.mxu0 0.0
    %2751 = vmatprep.subr.mxu0 0.0
    %2752 = vmatpush1.msra.mxu0 0.0
    %2753 = vmatprep.subr.mxu0 0.0
    %2754 = vmatpush1.msra.mxu0 0.0
    %2755 = vmatprep.subr.mxu0 0.0
    %2756 = vmatpush1.msra.mxu0 0.0
    %2757 = vmatprep.subr.mxu0 0.0
    %2758 = vmatpush1.msra.mxu0 0.0
    %2759 = vmatprep.subr.mxu0 0.0
    %2760 = vmatpush1.msra.mxu0 0.0
    %2761 = vmatprep.subr.mxu0 0.0
    %2762 = vmatpush1.msra.mxu0 0.0
    %2763 = vmatprep.subr.mxu0 0.0
    %2764 = vmatpush1.msra.mxu0 0.0
    %2765 = vmatprep.subr.mxu0 0.0
    %2766 = vmatpush1.msra.mxu0 0.0
    %2767 = vmatprep.subr.mxu0 0.0
    %2768 = vmatpush1.msra.mxu0 0.0
    %2769 = vmatprep.subr.mxu0 0.0
    %2770 = vmatpush1.msra.mxu0 0.0
    %2771 = vmatprep.subr.mxu0 0.0
    %2772 = vmatpush1.msra.mxu0 0.0
    %2773 = vmatprep.subr.mxu0 0.0
    %2774 = vmatpush1.msra.mxu0 0.0
    %2775 = vmatprep.subr.mxu0 0.0
    %2776 = vmatpush1.msra.mxu0 0.0
    %2777 = vmatprep.mubr.f32.mxu0 0.0
    %2778 = vmatmul.mubr.f32.gmra.mrb[0].mxu0 %v504
    %v2779 = vpop.f32.mrb[0].mxu0
    %v2780 = vadd.f32 %v2567, %v2779
    %v2781 = vpop.f32.mrb[0].mxu0
    %v2782 = vadd.f32 %v2569, %v2781
    %2783 = vdwg.mxu0
    %v2784 = vld [vmem:[#allocation20] sm:$0x3f]
    %v2786 = vlaneseq
    %v2787 = vshrl.u32 %v2786, 7
    %v2788 = vsub.s32 0, %v2787
    %v2789 = vrot.slane %v2784, %v2788
    %v2790 = vlaneseq
    %v2791 = vshrl.u32 %v2790, 7
    %v2792 = vsub.s32 1, %v2791
    %v2793 = vrot.slane %v2784, %v2792
    %v2794 = vlaneseq
    %v2795 = vshrl.u32 %v2794, 7
    %v2796 = vsub.s32 2, %v2795
    %v2797 = vrot.slane %v2784, %v2796
    %v2798 = vlaneseq
    %v2799 = vshrl.u32 %v2798, 7
    %v2800 = vsub.s32 3, %v2799
    %v2801 = vrot.slane %v2784, %v2800
    %v2802 = vlaneseq
    %v2803 = vshrl.u32 %v2802, 7
    %v2804 = vsub.s32 4, %v2803
    %v2805 = vrot.slane %v2784, %v2804
    %v2806 = vlaneseq
    %v2807 = vshrl.u32 %v2806, 7
    %v2808 = vsub.s32 5, %v2807
    %v2809 = vrot.slane %v2784, %v2808
    %v2816 = vadd.f32 %v2638, %v2789
    %v2817 = vadd.f32 %v2640, %v2793
    %v2818 = vadd.f32 %v2709, %v2797
    %v2819 = vadd.f32 %v2711, %v2801
    %v2820 = vadd.f32 %v2780, %v2805
    %v2821 = vadd.f32 %v2782, %v2809
    %v2822 = vmax.f32 %v2816, 0.0
    %v2823 = vmax.f32 %v2817, 0.0
    %v2824 = vmax.f32 %v2818, 0.0
    %v2825 = vmax.f32 %v2819, 0.0
    %v2826 = vmax.f32 %v2820, 0.0
    %v2827 = vmax.f32 %v2821, 0.0
    %v2828 = vld [vmem:[#allocation22] sm:$0xff]
    %v2829 = vld [vmem:[#allocation22 + $0x8] sm:$0xff]
    %v2830 = vld [vmem:[#allocation22 + $0x10] sm:$0xff]
    %v2831 = vld [vmem:[#allocation22 + $0x18] sm:$0xff]
    %v2832 = vld [vmem:[#allocation22 + $0x20] sm:$0xff]
    %v2833 = vld [vmem:[#allocation22 + $0x28] sm:$0xff]
    %v2834 = vld [vmem:[#allocation22 + $0x30] sm:$0xff]
    %v2835 = vld [vmem:[#allocation22 + $0x38] sm:$0xff]
    %v2836 = vld [vmem:[#allocation22 + $0x40] sm:$0xff]
    %v2837 = vld [vmem:[#allocation22 + $0x48] sm:$0xff]
    %v2838 = vld [vmem:[#allocation22 + $0x50] sm:$0xff]
    %v2839 = vld [vmem:[#allocation22 + $0x58] sm:$0xff]
    %v2840 = vld [vmem:[#allocation22 + $0x60] sm:$0xff]
    %v2841 = vld [vmem:[#allocation22 + $0x68] sm:$0xff]
    %v2842 = vld [vmem:[#allocation22 + $0x70] sm:$0xff]
    %v2843 = vld [vmem:[#allocation22 + $0x78] sm:$0xff]
    %v2844 = vld [vmem:[#allocation22 + $0x80] sm:$0xff]
    %v2845 = vld [vmem:[#allocation22 + $0x88] sm:$0xff]
    %v2846 = vld [vmem:[#allocation22 + $0x90] sm:$0xff]
    %v2847 = vld [vmem:[#allocation22 + $0x98] sm:$0xff]
    %v2848 = vld [vmem:[#allocation22 + $0xa0] sm:$0xff]
    %v2849 = vld [vmem:[#allocation22 + $0xa8] sm:$0xff]
    %v2850 = vld [vmem:[#allocation22 + $0xb0] sm:$0xff]
    %v2851 = vld [vmem:[#allocation22 + $0xb8] sm:$0xff]
    %v2852 = vld [vmem:[#allocation22 + $0xc0] sm:$0xff]
    %v2853 = vld [vmem:[#allocation22 + $0xc8] sm:$0xff]
    %v2854 = vld [vmem:[#allocation22 + $0xd0] sm:$0xff]
    %v2855 = vld [vmem:[#allocation22 + $0xd8] sm:$0xff]
    %v2856 = vld [vmem:[#allocation22 + $0xe0] sm:$0xff]
    %v2857 = vld [vmem:[#allocation22 + $0xe8] sm:$0xff]
    %v2858 = vld [vmem:[#allocation22 + $0xf0] sm:$0xff]
    %v2859 = vld [vmem:[#allocation22 + $0xf8] sm:$0xff]
    %v2860 = vld [vmem:[#allocation22 + $0x100] sm:$0xff]
    %v2861 = vld [vmem:[#allocation22 + $0x108] sm:$0xff]
    %v2862 = vld [vmem:[#allocation22 + $0x110] sm:$0xff]
    %v2863 = vld [vmem:[#allocation22 + $0x118] sm:$0xff]
    %v2864 = vld [vmem:[#allocation22 + $0x120] sm:$0xff]
    %v2865 = vld [vmem:[#allocation22 + $0x128] sm:$0xff]
    %v2866 = vld [vmem:[#allocation22 + $0x130] sm:$0xff]
    %v2867 = vld [vmem:[#allocation22 + $0x138] sm:$0xff]
    %v2868 = vld [vmem:[#allocation22 + $0x140] sm:$0xff]
    %v2869 = vld [vmem:[#allocation22 + $0x148] sm:$0xff]
    %v2870 = vld [vmem:[#allocation22 + $0x150] sm:$0xff]
    %v2871 = vld [vmem:[#allocation22 + $0x158] sm:$0xff]
    %v2872 = vld [vmem:[#allocation22 + $0x160] sm:$0xff]
    %v2873 = vld [vmem:[#allocation22 + $0x168] sm:$0xff]
    %v2874 = vld [vmem:[#allocation22 + $0x170] sm:$0xff]
    %v2875 = vld [vmem:[#allocation22 + $0x178] sm:$0xff]
    %v2876 = vld [vmem:[#allocation22 + $0x180] sm:$0xff]
    %v2877 = vld [vmem:[#allocation22 + $0x188] sm:$0xff]
    %v2878 = vld [vmem:[#allocation22 + $0x190] sm:$0xff]
    %v2879 = vld [vmem:[#allocation22 + $0x198] sm:$0xff]
    %v2880 = vld [vmem:[#allocation22 + $0x1a0] sm:$0xff]
    %v2881 = vld [vmem:[#allocation22 + $0x1a8] sm:$0xff]
    %v2882 = vld [vmem:[#allocation22 + $0x1b0] sm:$0xff]
    %v2883 = vld [vmem:[#allocation22 + $0x1b8] sm:$0xff]
    %v2884 = vld [vmem:[#allocation22 + $0x1c0] sm:$0xff]
    %v2885 = vld [vmem:[#allocation22 + $0x1c8] sm:$0xff]
    %v2886 = vld [vmem:[#allocation22 + $0x1d0] sm:$0xff]
    %v2887 = vld [vmem:[#allocation22 + $0x1d8] sm:$0xff]
    %v2888 = vld [vmem:[#allocation22 + $0x1e0] sm:$0xff]
    %v2889 = vld [vmem:[#allocation22 + $0x1e8] sm:$0xff]
    %v2890 = vld [vmem:[#allocation22 + $0x1f0] sm:$0xff]
    %v2891 = vld [vmem:[#allocation22 + $0x1f8] sm:$0xff]
    %v2892 = vld [vmem:[#allocation22 + $0x200] sm:$0xff]
    %v2893 = vld [vmem:[#allocation22 + $0x208] sm:$0xff]
    %v2894 = vld [vmem:[#allocation22 + $0x210] sm:$0xff]
    %v2895 = vld [vmem:[#allocation22 + $0x218] sm:$0xff]
    %v2896 = vld [vmem:[#allocation22 + $0x220] sm:$0xff]
    %v2897 = vld [vmem:[#allocation22 + $0x228] sm:$0xff]
    %v2898 = vld [vmem:[#allocation22 + $0x230] sm:$0xff]
    %v2899 = vld [vmem:[#allocation22 + $0x238] sm:$0xff]
    %v2900 = vld [vmem:[#allocation22 + $0x240] sm:$0xff]
    %v2901 = vld [vmem:[#allocation22 + $0x248] sm:$0xff]
    %v2902 = vld [vmem:[#allocation22 + $0x250] sm:$0xff]
    %v2903 = vld [vmem:[#allocation22 + $0x258] sm:$0xff]
    %v2904 = vld [vmem:[#allocation22 + $0x260] sm:$0xff]
    %v2905 = vld [vmem:[#allocation22 + $0x268] sm:$0xff]
    %v2906 = vld [vmem:[#allocation22 + $0x270] sm:$0xff]
    %v2907 = vld [vmem:[#allocation22 + $0x278] sm:$0xff]
    %v2908 = vld [vmem:[#allocation22 + $0x280] sm:$0xff]
    %v2909 = vld [vmem:[#allocation22 + $0x288] sm:$0xff]
    %v2910 = vld [vmem:[#allocation22 + $0x290] sm:$0xff]
    %v2911 = vld [vmem:[#allocation22 + $0x298] sm:$0xff]
    %v2912 = vld [vmem:[#allocation22 + $0x2a0] sm:$0xff]
    %v2913 = vld [vmem:[#allocation22 + $0x2a8] sm:$0xff]
    %v2914 = vld [vmem:[#allocation22 + $0x2b0] sm:$0xff]
    %v2915 = vld [vmem:[#allocation22 + $0x2b8] sm:$0xff]
    %v2916 = vld [vmem:[#allocation22 + $0x2c0] sm:$0xff]
    %v2917 = vld [vmem:[#allocation22 + $0x2c8] sm:$0xff]
    %v2918 = vld [vmem:[#allocation22 + $0x2d0] sm:$0xff]
    %v2919 = vld [vmem:[#allocation22 + $0x2d8] sm:$0xff]
    %v2920 = vld [vmem:[#allocation22 + $0x2e0] sm:$0xff]
    %v2921 = vld [vmem:[#allocation22 + $0x2e8] sm:$0xff]
    %v2922 = vld [vmem:[#allocation22 + $0x2f0] sm:$0xff]
    %v2923 = vld [vmem:[#allocation22 + $0x2f8] sm:$0xff]
    %v2924 = vld [vmem:[#allocation22 + $0x300] sm:$0xff]
    %v2925 = vld [vmem:[#allocation22 + $0x308] sm:$0xff]
    %v2926 = vld [vmem:[#allocation22 + $0x310] sm:$0xff]
    %v2927 = vld [vmem:[#allocation22 + $0x318] sm:$0xff]
    %v2928 = vld [vmem:[#allocation22 + $0x320] sm:$0xff]
    %v2929 = vld [vmem:[#allocation22 + $0x328] sm:$0xff]
    %v2930 = vld [vmem:[#allocation22 + $0x330] sm:$0xff]
    %v2931 = vld [vmem:[#allocation22 + $0x338] sm:$0xff]
    %v2932 = vld [vmem:[#allocation22 + $0x340] sm:$0xff]
    %v2933 = vld [vmem:[#allocation22 + $0x348] sm:$0xff]
    %v2934 = vld [vmem:[#allocation22 + $0x350] sm:$0xff]
    %v2935 = vld [vmem:[#allocation22 + $0x358] sm:$0xff]
    %v2936 = vld [vmem:[#allocation22 + $0x360] sm:$0xff]
    %v2937 = vld [vmem:[#allocation22 + $0x368] sm:$0xff]
    %v2938 = vld [vmem:[#allocation22 + $0x370] sm:$0xff]
    %v2939 = vld [vmem:[#allocation22 + $0x378] sm:$0xff]
    %v2940 = vld [vmem:[#allocation22 + $0x380] sm:$0xff]
    %v2941 = vld [vmem:[#allocation22 + $0x388] sm:$0xff]
    %v2942 = vld [vmem:[#allocation22 + $0x390] sm:$0xff]
    %v2943 = vld [vmem:[#allocation22 + $0x398] sm:$0xff]
    %v2944 = vld [vmem:[#allocation22 + $0x3a0] sm:$0xff]
    %v2945 = vld [vmem:[#allocation22 + $0x3a8] sm:$0xff]
    %v2946 = vld [vmem:[#allocation22 + $0x3b0] sm:$0xff]
    %v2947 = vld [vmem:[#allocation22 + $0x3b8] sm:$0xff]
    %v2948 = vld [vmem:[#allocation22 + $0x3c0] sm:$0xff]
    %v2949 = vld [vmem:[#allocation22 + $0x3c8] sm:$0xff]
    %v2950 = vld [vmem:[#allocation22 + $0x3d0] sm:$0xff]
    %v2951 = vld [vmem:[#allocation22 + $0x3d8] sm:$0xff]
    %v2952 = vld [vmem:[#allocation22 + $0x3e0] sm:$0xff]
    %v2953 = vld [vmem:[#allocation22 + $0x3e8] sm:$0xff]
    %v2954 = vld [vmem:[#allocation22 + $0x3f0] sm:$0xff]
    %v2955 = vld [vmem:[#allocation22 + $0x3f8] sm:$0xff]
    %v2956 = vld [vmem:[#allocation22 + $0x400] sm:$0xff]
    %v2957 = vld [vmem:[#allocation22 + $0x408] sm:$0xff]
    %v2958 = vld [vmem:[#allocation22 + $0x410] sm:$0xff]
    %v2959 = vld [vmem:[#allocation22 + $0x418] sm:$0xff]
    %v2960 = vld [vmem:[#allocation22 + $0x420] sm:$0xff]
    %v2961 = vld [vmem:[#allocation22 + $0x428] sm:$0xff]
    %v2962 = vld [vmem:[#allocation22 + $0x430] sm:$0xff]
    %v2963 = vld [vmem:[#allocation22 + $0x438] sm:$0xff]
    %v2964 = vld [vmem:[#allocation22 + $0x440] sm:$0xff]
    %v2965 = vld [vmem:[#allocation22 + $0x448] sm:$0xff]
    %v2966 = vld [vmem:[#allocation22 + $0x450] sm:$0xff]
    %v2967 = vld [vmem:[#allocation22 + $0x458] sm:$0xff]
    %v2968 = vld [vmem:[#allocation22 + $0x460] sm:$0xff]
    %v2969 = vld [vmem:[#allocation22 + $0x468] sm:$0xff]
    %v2970 = vld [vmem:[#allocation22 + $0x470] sm:$0xff]
    %v2971 = vld [vmem:[#allocation22 + $0x478] sm:$0xff]
    %v2972 = vld [vmem:[#allocation22 + $0x480] sm:$0xff]
    %v2973 = vld [vmem:[#allocation22 + $0x488] sm:$0xff]
    %v2974 = vld [vmem:[#allocation22 + $0x490] sm:$0xff]
    %v2975 = vld [vmem:[#allocation22 + $0x498] sm:$0xff]
    %v2976 = vld [vmem:[#allocation22 + $0x4a0] sm:$0xff]
    %v2977 = vld [vmem:[#allocation22 + $0x4a8] sm:$0xff]
    %v2978 = vld [vmem:[#allocation22 + $0x4b0] sm:$0xff]
    %v2979 = vld [vmem:[#allocation22 + $0x4b8] sm:$0xff]
    %v2980 = vld [vmem:[#allocation22 + $0x4c0] sm:$0xff]
    %v2981 = vld [vmem:[#allocation22 + $0x4c8] sm:$0xff]
    %v2982 = vld [vmem:[#allocation22 + $0x4d0] sm:$0xff]
    %v2983 = vld [vmem:[#allocation22 + $0x4d8] sm:$0xff]
    %v2984 = vld [vmem:[#allocation22 + $0x4e0] sm:$0xff]
    %v2985 = vld [vmem:[#allocation22 + $0x4e8] sm:$0xff]
    %v2986 = vld [vmem:[#allocation22 + $0x4f0] sm:$0xff]
    %v2987 = vld [vmem:[#allocation22 + $0x4f8] sm:$0xff]
    %v2988 = vld [vmem:[#allocation22 + $0x500] sm:$0xff]
    %v2989 = vld [vmem:[#allocation22 + $0x508] sm:$0xff]
    %v2990 = vld [vmem:[#allocation22 + $0x510] sm:$0xff]
    %v2991 = vld [vmem:[#allocation22 + $0x518] sm:$0xff]
    %v2992 = vld [vmem:[#allocation22 + $0x520] sm:$0xff]
    %v2993 = vld [vmem:[#allocation22 + $0x528] sm:$0xff]
    %v2994 = vld [vmem:[#allocation22 + $0x530] sm:$0xff]
    %v2995 = vld [vmem:[#allocation22 + $0x538] sm:$0xff]
    %v2996 = vld [vmem:[#allocation22 + $0x540] sm:$0xff]
    %v2997 = vld [vmem:[#allocation22 + $0x548] sm:$0xff]
    %v2998 = vld [vmem:[#allocation22 + $0x550] sm:$0xff]
    %v2999 = vld [vmem:[#allocation22 + $0x558] sm:$0xff]
    %v3000 = vld [vmem:[#allocation22 + $0x560] sm:$0xff]
    %v3001 = vld [vmem:[#allocation22 + $0x568] sm:$0xff]
    %v3002 = vld [vmem:[#allocation22 + $0x570] sm:$0xff]
    %v3003 = vld [vmem:[#allocation22 + $0x578] sm:$0xff]
    %v3004 = vld [vmem:[#allocation22 + $0x580] sm:$0xff]
    %v3005 = vld [vmem:[#allocation22 + $0x588] sm:$0xff]
    %v3006 = vld [vmem:[#allocation22 + $0x590] sm:$0xff]
    %v3007 = vld [vmem:[#allocation22 + $0x598] sm:$0xff]
    %v3008 = vld [vmem:[#allocation22 + $0x5a0] sm:$0xff]
    %v3009 = vld [vmem:[#allocation22 + $0x5a8] sm:$0xff]
    %v3010 = vld [vmem:[#allocation22 + $0x5b0] sm:$0xff]
    %v3011 = vld [vmem:[#allocation22 + $0x5b8] sm:$0xff]
    %v3012 = vld [vmem:[#allocation22 + $0x5c0] sm:$0xff]
    %v3013 = vld [vmem:[#allocation22 + $0x5c8] sm:$0xff]
    %v3014 = vld [vmem:[#allocation22 + $0x5d0] sm:$0xff]
    %v3015 = vld [vmem:[#allocation22 + $0x5d8] sm:$0xff]
    %v3016 = vld [vmem:[#allocation22 + $0x5e0] sm:$0xff]
    %v3017 = vld [vmem:[#allocation22 + $0x5e8] sm:$0xff]
    %v3018 = vld [vmem:[#allocation22 + $0x5f0] sm:$0xff]
    %v3019 = vld [vmem:[#allocation22 + $0x5f8] sm:$0xff]
    %v3020 = vld [vmem:[#allocation22 + $0x600] sm:$0xff]
    %v3021 = vld [vmem:[#allocation22 + $0x608] sm:$0xff]
    %v3022 = vld [vmem:[#allocation22 + $0x610] sm:$0xff]
    %v3023 = vld [vmem:[#allocation22 + $0x618] sm:$0xff]
    %v3024 = vld [vmem:[#allocation22 + $0x620] sm:$0xff]
    %v3025 = vld [vmem:[#allocation22 + $0x628] sm:$0xff]
    %v3026 = vld [vmem:[#allocation22 + $0x630] sm:$0xff]
    %v3027 = vld [vmem:[#allocation22 + $0x638] sm:$0xff]
    %v3028 = vld [vmem:[#allocation22 + $0x640] sm:$0xff]
    %v3029 = vld [vmem:[#allocation22 + $0x648] sm:$0xff]
    %v3030 = vld [vmem:[#allocation22 + $0x650] sm:$0xff]
    %v3031 = vld [vmem:[#allocation22 + $0x658] sm:$0xff]
    %v3032 = vld [vmem:[#allocation22 + $0x660] sm:$0xff]
    %v3033 = vld [vmem:[#allocation22 + $0x668] sm:$0xff]
    %v3034 = vld [vmem:[#allocation22 + $0x670] sm:$0xff]
    %v3035 = vld [vmem:[#allocation22 + $0x678] sm:$0xff]
    %v3036 = vld [vmem:[#allocation22 + $0x680] sm:$0xff]
    %v3037 = vld [vmem:[#allocation22 + $0x688] sm:$0xff]
    %v3038 = vld [vmem:[#allocation22 + $0x690] sm:$0xff]
    %v3039 = vld [vmem:[#allocation22 + $0x698] sm:$0xff]
    %v3040 = vld [vmem:[#allocation22 + $0x6a0] sm:$0xff]
    %v3041 = vld [vmem:[#allocation22 + $0x6a8] sm:$0xff]
    %v3042 = vld [vmem:[#allocation22 + $0x6b0] sm:$0xff]
    %v3043 = vld [vmem:[#allocation22 + $0x6b8] sm:$0xff]
    %v3044 = vld [vmem:[#allocation22 + $0x6c0] sm:$0xff]
    %v3045 = vld [vmem:[#allocation22 + $0x6c8] sm:$0xff]
    %v3046 = vld [vmem:[#allocation22 + $0x6d0] sm:$0xff]
    %v3047 = vld [vmem:[#allocation22 + $0x6d8] sm:$0xff]
    %v3048 = vld [vmem:[#allocation22 + $0x6e0] sm:$0xff]
    %v3049 = vld [vmem:[#allocation22 + $0x6e8] sm:$0xff]
    %v3050 = vld [vmem:[#allocation22 + $0x6f0] sm:$0xff]
    %v3051 = vld [vmem:[#allocation22 + $0x6f8] sm:$0xff]
    %v3052 = vld [vmem:[#allocation22 + $0x700] sm:$0xff]
    %v3053 = vld [vmem:[#allocation22 + $0x708] sm:$0xff]
    %v3054 = vld [vmem:[#allocation22 + $0x710] sm:$0xff]
    %v3055 = vld [vmem:[#allocation22 + $0x718] sm:$0xff]
    %v3056 = vld [vmem:[#allocation22 + $0x720] sm:$0xff]
    %v3057 = vld [vmem:[#allocation22 + $0x728] sm:$0xff]
    %v3058 = vld [vmem:[#allocation22 + $0x730] sm:$0xff]
    %v3059 = vld [vmem:[#allocation22 + $0x738] sm:$0xff]
    %v3060 = vld [vmem:[#allocation22 + $0x740] sm:$0xff]
    %v3061 = vld [vmem:[#allocation22 + $0x748] sm:$0xff]
    %v3062 = vld [vmem:[#allocation22 + $0x750] sm:$0xff]
    %v3063 = vld [vmem:[#allocation22 + $0x758] sm:$0xff]
    %v3064 = vld [vmem:[#allocation22 + $0x760] sm:$0xff]
    %v3065 = vld [vmem:[#allocation22 + $0x768] sm:$0xff]
    %v3066 = vld [vmem:[#allocation22 + $0x770] sm:$0xff]
    %v3067 = vld [vmem:[#allocation22 + $0x778] sm:$0xff]
    %v3068 = vld [vmem:[#allocation22 + $0x780] sm:$0xff]
    %v3069 = vld [vmem:[#allocation22 + $0x788] sm:$0xff]
    %v3070 = vld [vmem:[#allocation22 + $0x790] sm:$0xff]
    %v3071 = vld [vmem:[#allocation22 + $0x798] sm:$0xff]
    %v3072 = vld [vmem:[#allocation22 + $0x7a0] sm:$0xff]
    %v3073 = vld [vmem:[#allocation22 + $0x7a8] sm:$0xff]
    %v3074 = vld [vmem:[#allocation22 + $0x7b0] sm:$0xff]
    %v3075 = vld [vmem:[#allocation22 + $0x7b8] sm:$0xff]
    %v3076 = vld [vmem:[#allocation22 + $0x7c0] sm:$0xff]
    %v3077 = vld [vmem:[#allocation22 + $0x7c8] sm:$0xff]
    %v3078 = vld [vmem:[#allocation22 + $0x7d0] sm:$0xff]
    %v3079 = vld [vmem:[#allocation22 + $0x7d8] sm:$0xff]
    %v3080 = vld [vmem:[#allocation22 + $0x7e0] sm:$0xff]
    %v3081 = vld [vmem:[#allocation22 + $0x7e8] sm:$0xff]
    %v3082 = vld [vmem:[#allocation22 + $0x7f0] sm:$0xff]
    %v3083 = vld [vmem:[#allocation22 + $0x7f8] sm:$0xff]
    %v3084 = vld [vmem:[#allocation22 + $0x800] sm:$0xff]
    %v3085 = vld [vmem:[#allocation22 + $0x808] sm:$0xff]
    %v3086 = vld [vmem:[#allocation22 + $0x810] sm:$0xff]
    %v3087 = vld [vmem:[#allocation22 + $0x818] sm:$0xff]
    %v3088 = vld [vmem:[#allocation22 + $0x820] sm:$0xff]
    %v3089 = vld [vmem:[#allocation22 + $0x828] sm:$0xff]
    %v3090 = vld [vmem:[#allocation22 + $0x830] sm:$0xff]
    %v3091 = vld [vmem:[#allocation22 + $0x838] sm:$0xff]
    %v3092 = vld [vmem:[#allocation22 + $0x840] sm:$0xff]
    %v3093 = vld [vmem:[#allocation22 + $0x848] sm:$0xff]
    %v3094 = vld [vmem:[#allocation22 + $0x850] sm:$0xff]
    %v3095 = vld [vmem:[#allocation22 + $0x858] sm:$0xff]
    %v3096 = vld [vmem:[#allocation22 + $0x860] sm:$0xff]
    %v3097 = vld [vmem:[#allocation22 + $0x868] sm:$0xff]
    %v3098 = vld [vmem:[#allocation22 + $0x870] sm:$0xff]
    %v3099 = vld [vmem:[#allocation22 + $0x878] sm:$0xff]
    %v3100 = vld [vmem:[#allocation22 + $0x880] sm:$0xff]
    %v3101 = vld [vmem:[#allocation22 + $0x888] sm:$0xff]
    %v3102 = vld [vmem:[#allocation22 + $0x890] sm:$0xff]
    %v3103 = vld [vmem:[#allocation22 + $0x898] sm:$0xff]
    %v3104 = vld [vmem:[#allocation22 + $0x8a0] sm:$0xff]
    %v3105 = vld [vmem:[#allocation22 + $0x8a8] sm:$0xff]
    %v3106 = vld [vmem:[#allocation22 + $0x8b0] sm:$0xff]
    %v3107 = vld [vmem:[#allocation22 + $0x8b8] sm:$0xff]
    %v3108 = vld [vmem:[#allocation22 + $0x8c0] sm:$0xff]
    %v3109 = vld [vmem:[#allocation22 + $0x8c8] sm:$0xff]
    %v3110 = vld [vmem:[#allocation22 + $0x8d0] sm:$0xff]
    %v3111 = vld [vmem:[#allocation22 + $0x8d8] sm:$0xff]
    %v3112 = vld [vmem:[#allocation22 + $0x8e0] sm:$0xff]
    %v3113 = vld [vmem:[#allocation22 + $0x8e8] sm:$0xff]
    %v3114 = vld [vmem:[#allocation22 + $0x8f0] sm:$0xff]
    %v3115 = vld [vmem:[#allocation22 + $0x8f8] sm:$0xff]
    %v3116 = vld [vmem:[#allocation22 + $0x900] sm:$0xff]
    %v3117 = vld [vmem:[#allocation22 + $0x908] sm:$0xff]
    %v3118 = vld [vmem:[#allocation22 + $0x910] sm:$0xff]
    %v3119 = vld [vmem:[#allocation22 + $0x918] sm:$0xff]
    %v3120 = vld [vmem:[#allocation22 + $0x920] sm:$0xff]
    %v3121 = vld [vmem:[#allocation22 + $0x928] sm:$0xff]
    %v3122 = vld [vmem:[#allocation22 + $0x930] sm:$0xff]
    %v3123 = vld [vmem:[#allocation22 + $0x938] sm:$0xff]
    %v3124 = vld [vmem:[#allocation22 + $0x940] sm:$0xff]
    %v3125 = vld [vmem:[#allocation22 + $0x948] sm:$0xff]
    %v3126 = vld [vmem:[#allocation22 + $0x950] sm:$0xff]
    %v3127 = vld [vmem:[#allocation22 + $0x958] sm:$0xff]
    %v3128 = vld [vmem:[#allocation22 + $0x960] sm:$0xff]
    %v3129 = vld [vmem:[#allocation22 + $0x968] sm:$0xff]
    %v3130 = vld [vmem:[#allocation22 + $0x970] sm:$0xff]
    %v3131 = vld [vmem:[#allocation22 + $0x978] sm:$0xff]
    %v3132 = vld [vmem:[#allocation22 + $0x980] sm:$0xff]
    %v3133 = vld [vmem:[#allocation22 + $0x988] sm:$0xff]
    %v3134 = vld [vmem:[#allocation22 + $0x990] sm:$0xff]
    %v3135 = vld [vmem:[#allocation22 + $0x998] sm:$0xff]
    %v3136 = vld [vmem:[#allocation22 + $0x9a0] sm:$0xff]
    %v3137 = vld [vmem:[#allocation22 + $0x9a8] sm:$0xff]
    %v3138 = vld [vmem:[#allocation22 + $0x9b0] sm:$0xff]
    %v3139 = vld [vmem:[#allocation22 + $0x9b8] sm:$0xff]
    %v3140 = vld [vmem:[#allocation22 + $0x9c0] sm:$0xff]
    %v3141 = vld [vmem:[#allocation22 + $0x9c8] sm:$0xff]
    %v3142 = vld [vmem:[#allocation22 + $0x9d0] sm:$0xff]
    %v3143 = vld [vmem:[#allocation22 + $0x9d8] sm:$0xff]
    %v3144 = vld [vmem:[#allocation22 + $0x9e0] sm:$0xff]
    %v3145 = vld [vmem:[#allocation22 + $0x9e8] sm:$0xff]
    %v3146 = vld [vmem:[#allocation22 + $0x9f0] sm:$0xff]
    %v3147 = vld [vmem:[#allocation22 + $0x9f8] sm:$0xff]
    %v3148 = vld [vmem:[#allocation22 + $0xa00] sm:$0xff]
    %v3149 = vld [vmem:[#allocation22 + $0xa08] sm:$0xff]
    %v3150 = vld [vmem:[#allocation22 + $0xa10] sm:$0xff]
    %v3151 = vld [vmem:[#allocation22 + $0xa18] sm:$0xff]
    %v3152 = vld [vmem:[#allocation22 + $0xa20] sm:$0xff]
    %v3153 = vld [vmem:[#allocation22 + $0xa28] sm:$0xff]
    %v3154 = vld [vmem:[#allocation22 + $0xa30] sm:$0xff]
    %v3155 = vld [vmem:[#allocation22 + $0xa38] sm:$0xff]
    %v3156 = vld [vmem:[#allocation22 + $0xa40] sm:$0xff]
    %v3157 = vld [vmem:[#allocation22 + $0xa48] sm:$0xff]
    %v3158 = vld [vmem:[#allocation22 + $0xa50] sm:$0xff]
    %v3159 = vld [vmem:[#allocation22 + $0xa58] sm:$0xff]
    %v3160 = vld [vmem:[#allocation22 + $0xa60] sm:$0xff]
    %v3161 = vld [vmem:[#allocation22 + $0xa68] sm:$0xff]
    %v3162 = vld [vmem:[#allocation22 + $0xa70] sm:$0xff]
    %v3163 = vld [vmem:[#allocation22 + $0xa78] sm:$0xff]
    %v3164 = vld [vmem:[#allocation22 + $0xa80] sm:$0xff]
    %v3165 = vld [vmem:[#allocation22 + $0xa88] sm:$0xff]
    %v3166 = vld [vmem:[#allocation22 + $0xa90] sm:$0xff]
    %v3167 = vld [vmem:[#allocation22 + $0xa98] sm:$0xff]
    %v3168 = vld [vmem:[#allocation22 + $0xaa0] sm:$0xff]
    %v3169 = vld [vmem:[#allocation22 + $0xaa8] sm:$0xff]
    %v3170 = vld [vmem:[#allocation22 + $0xab0] sm:$0xff]
    %v3171 = vld [vmem:[#allocation22 + $0xab8] sm:$0xff]
    %v3172 = vld [vmem:[#allocation22 + $0xac0] sm:$0xff]
    %v3173 = vld [vmem:[#allocation22 + $0xac8] sm:$0xff]
    %v3174 = vld [vmem:[#allocation22 + $0xad0] sm:$0xff]
    %v3175 = vld [vmem:[#allocation22 + $0xad8] sm:$0xff]
    %v3176 = vld [vmem:[#allocation22 + $0xae0] sm:$0xff]
    %v3177 = vld [vmem:[#allocation22 + $0xae8] sm:$0xff]
    %v3178 = vld [vmem:[#allocation22 + $0xaf0] sm:$0xff]
    %v3179 = vld [vmem:[#allocation22 + $0xaf8] sm:$0xff]
    %v3180 = vld [vmem:[#allocation22 + $0xb00] sm:$0xff]
    %v3181 = vld [vmem:[#allocation22 + $0xb08] sm:$0xff]
    %v3182 = vld [vmem:[#allocation22 + $0xb10] sm:$0xff]
    %v3183 = vld [vmem:[#allocation22 + $0xb18] sm:$0xff]
    %v3184 = vld [vmem:[#allocation22 + $0xb20] sm:$0xff]
    %v3185 = vld [vmem:[#allocation22 + $0xb28] sm:$0xff]
    %v3186 = vld [vmem:[#allocation22 + $0xb30] sm:$0xff]
    %v3187 = vld [vmem:[#allocation22 + $0xb38] sm:$0xff]
    %v3188 = vld [vmem:[#allocation22 + $0xb40] sm:$0xff]
    %v3189 = vld [vmem:[#allocation22 + $0xb48] sm:$0xff]
    %v3190 = vld [vmem:[#allocation22 + $0xb50] sm:$0xff]
    %v3191 = vld [vmem:[#allocation22 + $0xb58] sm:$0xff]
    %v3192 = vld [vmem:[#allocation22 + $0xb60] sm:$0xff]
    %v3193 = vld [vmem:[#allocation22 + $0xb68] sm:$0xff]
    %v3194 = vld [vmem:[#allocation22 + $0xb70] sm:$0xff]
    %v3195 = vld [vmem:[#allocation22 + $0xb78] sm:$0xff]
    %v3196 = vld [vmem:[#allocation22 + $0xb80] sm:$0xff]
    %v3197 = vld [vmem:[#allocation22 + $0xb88] sm:$0xff]
    %v3198 = vld [vmem:[#allocation22 + $0xb90] sm:$0xff]
    %v3199 = vld [vmem:[#allocation22 + $0xb98] sm:$0xff]
    %v3200 = vld [vmem:[#allocation22 + $0xba0] sm:$0xff]
    %v3201 = vld [vmem:[#allocation22 + $0xba8] sm:$0xff]
    %v3202 = vld [vmem:[#allocation22 + $0xbb0] sm:$0xff]
    %v3203 = vld [vmem:[#allocation22 + $0xbb8] sm:$0xff]
    %v3204 = vld [vmem:[#allocation22 + $0xbc0] sm:$0xff]
    %v3205 = vld [vmem:[#allocation22 + $0xbc8] sm:$0xff]
    %v3206 = vld [vmem:[#allocation22 + $0xbd0] sm:$0xff]
    %v3207 = vld [vmem:[#allocation22 + $0xbd8] sm:$0xff]
    %v3208 = vld [vmem:[#allocation22 + $0xbe0] sm:$0xff]
    %v3209 = vld [vmem:[#allocation22 + $0xbe8] sm:$0xff]
    %v3210 = vld [vmem:[#allocation22 + $0xbf0] sm:$0xff]
    %v3211 = vld [vmem:[#allocation22 + $0xbf8] sm:$0xff]
    %v3212 = vld [vmem:[#allocation22 + $0xc00] sm:$0xff]
    %v3213 = vld [vmem:[#allocation22 + $0xc08] sm:$0xff]
    %v3214 = vld [vmem:[#allocation22 + $0xc10] sm:$0xff]
    %v3215 = vld [vmem:[#allocation22 + $0xc18] sm:$0xff]
    %v3216 = vld [vmem:[#allocation22 + $0xc20] sm:$0xff]
    %v3217 = vld [vmem:[#allocation22 + $0xc28] sm:$0xff]
    %v3218 = vld [vmem:[#allocation22 + $0xc30] sm:$0xff]
    %v3219 = vld [vmem:[#allocation22 + $0xc38] sm:$0xff]
    %v3220 = vld [vmem:[#allocation22 + $0xc40] sm:$0xff]
    %v3221 = vld [vmem:[#allocation22 + $0xc48] sm:$0xff]
    %v3222 = vld [vmem:[#allocation22 + $0xc50] sm:$0xff]
    %v3223 = vld [vmem:[#allocation22 + $0xc58] sm:$0xff]
    %v3224 = vld [vmem:[#allocation22 + $0xc60] sm:$0xff]
    %v3225 = vld [vmem:[#allocation22 + $0xc68] sm:$0xff]
    %v3226 = vld [vmem:[#allocation22 + $0xc70] sm:$0xff]
    %v3227 = vld [vmem:[#allocation22 + $0xc78] sm:$0xff]
    %v3228 = vld [vmem:[#allocation22 + $0xc80] sm:$0xff]
    %v3229 = vld [vmem:[#allocation22 + $0xc88] sm:$0xff]
    %v3230 = vld [vmem:[#allocation22 + $0xc90] sm:$0xff]
    %v3231 = vld [vmem:[#allocation22 + $0xc98] sm:$0xff]
    %v3232 = vld [vmem:[#allocation22 + $0xca0] sm:$0xff]
    %v3233 = vld [vmem:[#allocation22 + $0xca8] sm:$0xff]
    %v3234 = vld [vmem:[#allocation22 + $0xcb0] sm:$0xff]
    %v3235 = vld [vmem:[#allocation22 + $0xcb8] sm:$0xff]
    %v3236 = vld [vmem:[#allocation22 + $0xcc0] sm:$0xff]
    %v3237 = vld [vmem:[#allocation22 + $0xcc8] sm:$0xff]
    %v3238 = vld [vmem:[#allocation22 + $0xcd0] sm:$0xff]
    %v3239 = vld [vmem:[#allocation22 + $0xcd8] sm:$0xff]
    %v3240 = vld [vmem:[#allocation22 + $0xce0] sm:$0xff]
    %v3241 = vld [vmem:[#allocation22 + $0xce8] sm:$0xff]
    %v3242 = vld [vmem:[#allocation22 + $0xcf0] sm:$0xff]
    %v3243 = vld [vmem:[#allocation22 + $0xcf8] sm:$0xff]
    %v3244 = vld [vmem:[#allocation22 + $0xd00] sm:$0xff]
    %v3245 = vld [vmem:[#allocation22 + $0xd08] sm:$0xff]
    %v3246 = vld [vmem:[#allocation22 + $0xd10] sm:$0xff]
    %v3247 = vld [vmem:[#allocation22 + $0xd18] sm:$0xff]
    %v3248 = vld [vmem:[#allocation22 + $0xd20] sm:$0xff]
    %v3249 = vld [vmem:[#allocation22 + $0xd28] sm:$0xff]
    %v3250 = vld [vmem:[#allocation22 + $0xd30] sm:$0xff]
    %v3251 = vld [vmem:[#allocation22 + $0xd38] sm:$0xff]
    %v3252 = vld [vmem:[#allocation22 + $0xd40] sm:$0xff]
    %v3253 = vld [vmem:[#allocation22 + $0xd48] sm:$0xff]
    %v3254 = vld [vmem:[#allocation22 + $0xd50] sm:$0xff]
    %v3255 = vld [vmem:[#allocation22 + $0xd58] sm:$0xff]
    %v3256 = vld [vmem:[#allocation22 + $0xd60] sm:$0xff]
    %v3257 = vld [vmem:[#allocation22 + $0xd68] sm:$0xff]
    %v3258 = vld [vmem:[#allocation22 + $0xd70] sm:$0xff]
    %v3259 = vld [vmem:[#allocation22 + $0xd78] sm:$0xff]
    %v3260 = vld [vmem:[#allocation22 + $0xd80] sm:$0xff]
    %v3261 = vld [vmem:[#allocation22 + $0xd88] sm:$0xff]
    %v3262 = vld [vmem:[#allocation22 + $0xd90] sm:$0xff]
    %v3263 = vld [vmem:[#allocation22 + $0xd98] sm:$0xff]
    %v3264 = vld [vmem:[#allocation22 + $0xda0] sm:$0xff]
    %v3265 = vld [vmem:[#allocation22 + $0xda8] sm:$0xff]
    %v3266 = vld [vmem:[#allocation22 + $0xdb0] sm:$0xff]
    %v3267 = vld [vmem:[#allocation22 + $0xdb8] sm:$0xff]
    %v3268 = vld [vmem:[#allocation22 + $0xdc0] sm:$0xff]
    %v3269 = vld [vmem:[#allocation22 + $0xdc8] sm:$0xff]
    %v3270 = vld [vmem:[#allocation22 + $0xdd0] sm:$0xff]
    %v3271 = vld [vmem:[#allocation22 + $0xdd8] sm:$0xff]
    %v3272 = vld [vmem:[#allocation22 + $0xde0] sm:$0xff]
    %v3273 = vld [vmem:[#allocation22 + $0xde8] sm:$0xff]
    %v3274 = vld [vmem:[#allocation22 + $0xdf0] sm:$0xff]
    %v3275 = vld [vmem:[#allocation22 + $0xdf8] sm:$0xff]
    %v3276 = vld [vmem:[#allocation22 + $0xe00] sm:$0xff]
    %v3277 = vld [vmem:[#allocation22 + $0xe08] sm:$0xff]
    %v3278 = vld [vmem:[#allocation22 + $0xe10] sm:$0xff]
    %v3279 = vld [vmem:[#allocation22 + $0xe18] sm:$0xff]
    %v3280 = vld [vmem:[#allocation22 + $0xe20] sm:$0xff]
    %v3281 = vld [vmem:[#allocation22 + $0xe28] sm:$0xff]
    %v3282 = vld [vmem:[#allocation22 + $0xe30] sm:$0xff]
    %v3283 = vld [vmem:[#allocation22 + $0xe38] sm:$0xff]
    %v3284 = vld [vmem:[#allocation22 + $0xe40] sm:$0xff]
    %v3285 = vld [vmem:[#allocation22 + $0xe48] sm:$0xff]
    %v3286 = vld [vmem:[#allocation22 + $0xe50] sm:$0xff]
    %v3287 = vld [vmem:[#allocation22 + $0xe58] sm:$0xff]
    %v3288 = vld [vmem:[#allocation22 + $0xe60] sm:$0xff]
    %v3289 = vld [vmem:[#allocation22 + $0xe68] sm:$0xff]
    %v3290 = vld [vmem:[#allocation22 + $0xe70] sm:$0xff]
    %v3291 = vld [vmem:[#allocation22 + $0xe78] sm:$0xff]
    %v3292 = vld [vmem:[#allocation22 + $0xe80] sm:$0xff]
    %v3293 = vld [vmem:[#allocation22 + $0xe88] sm:$0xff]
    %v3294 = vld [vmem:[#allocation22 + $0xe90] sm:$0xff]
    %v3295 = vld [vmem:[#allocation22 + $0xe98] sm:$0xff]
    %v3296 = vld [vmem:[#allocation22 + $0xea0] sm:$0xff]
    %v3297 = vld [vmem:[#allocation22 + $0xea8] sm:$0xff]
    %v3298 = vld [vmem:[#allocation22 + $0xeb0] sm:$0xff]
    %v3299 = vld [vmem:[#allocation22 + $0xeb8] sm:$0xff]
    %v3300 = vld [vmem:[#allocation22 + $0xec0] sm:$0xff]
    %v3301 = vld [vmem:[#allocation22 + $0xec8] sm:$0xff]
    %v3302 = vld [vmem:[#allocation22 + $0xed0] sm:$0xff]
    %v3303 = vld [vmem:[#allocation22 + $0xed8] sm:$0xff]
    %v3304 = vld [vmem:[#allocation22 + $0xee0] sm:$0xff]
    %v3305 = vld [vmem:[#allocation22 + $0xee8] sm:$0xff]
    %v3306 = vld [vmem:[#allocation22 + $0xef0] sm:$0xff]
    %v3307 = vld [vmem:[#allocation22 + $0xef8] sm:$0xff]
    %v3308 = vld [vmem:[#allocation22 + $0xf00] sm:$0xff]
    %v3309 = vld [vmem:[#allocation22 + $0xf08] sm:$0xff]
    %v3310 = vld [vmem:[#allocation22 + $0xf10] sm:$0xff]
    %v3311 = vld [vmem:[#allocation22 + $0xf18] sm:$0xff]
    %v3312 = vld [vmem:[#allocation22 + $0xf20] sm:$0xff]
    %v3313 = vld [vmem:[#allocation22 + $0xf28] sm:$0xff]
    %v3314 = vld [vmem:[#allocation22 + $0xf30] sm:$0xff]
    %v3315 = vld [vmem:[#allocation22 + $0xf38] sm:$0xff]
    %v3316 = vld [vmem:[#allocation22 + $0xf40] sm:$0xff]
    %v3317 = vld [vmem:[#allocation22 + $0xf48] sm:$0xff]
    %v3318 = vld [vmem:[#allocation22 + $0xf50] sm:$0xff]
    %v3319 = vld [vmem:[#allocation22 + $0xf58] sm:$0xff]
    %v3320 = vld [vmem:[#allocation22 + $0xf60] sm:$0xff]
    %v3321 = vld [vmem:[#allocation22 + $0xf68] sm:$0xff]
    %v3322 = vld [vmem:[#allocation22 + $0xf70] sm:$0xff]
    %v3323 = vld [vmem:[#allocation22 + $0xf78] sm:$0xff]
    %v3324 = vld [vmem:[#allocation22 + $0xf80] sm:$0xff]
    %v3325 = vld [vmem:[#allocation22 + $0xf88] sm:$0xff]
    %v3326 = vld [vmem:[#allocation22 + $0xf90] sm:$0xff]
    %v3327 = vld [vmem:[#allocation22 + $0xf98] sm:$0xff]
    %v3328 = vld [vmem:[#allocation22 + $0xfa0] sm:$0xff]
    %v3329 = vld [vmem:[#allocation22 + $0xfa8] sm:$0xff]
    %v3330 = vld [vmem:[#allocation22 + $0xfb0] sm:$0xff]
    %v3331 = vld [vmem:[#allocation22 + $0xfb8] sm:$0xff]
    %v3332 = vld [vmem:[#allocation22 + $0xfc0] sm:$0xff]
    %v3333 = vld [vmem:[#allocation22 + $0xfc8] sm:$0xff]
    %v3334 = vld [vmem:[#allocation22 + $0xfd0] sm:$0xff]
    %v3335 = vld [vmem:[#allocation22 + $0xfd8] sm:$0xff]
    %v3336 = vld [vmem:[#allocation22 + $0xfe0] sm:$0xff]
    %v3337 = vld [vmem:[#allocation22 + $0xfe8] sm:$0xff]
    %v3338 = vld [vmem:[#allocation22 + $0xff0] sm:$0xff]
    %v3339 = vld [vmem:[#allocation22 + $0xff8] sm:$0xff]
    %v3340 = vld [vmem:[#allocation22 + $0x1000] sm:$0xff]
    %v3341 = vld [vmem:[#allocation22 + $0x1008] sm:$0xff]
    %v3342 = vld [vmem:[#allocation22 + $0x1010] sm:$0xff]
    %v3343 = vld [vmem:[#allocation22 + $0x1018] sm:$0xff]
    %v3344 = vld [vmem:[#allocation22 + $0x1020] sm:$0xff]
    %v3345 = vld [vmem:[#allocation22 + $0x1028] sm:$0xff]
    %v3346 = vld [vmem:[#allocation22 + $0x1030] sm:$0xff]
    %v3347 = vld [vmem:[#allocation22 + $0x1038] sm:$0xff]
    %v3348 = vld [vmem:[#allocation22 + $0x1040] sm:$0xff]
    %v3349 = vld [vmem:[#allocation22 + $0x1048] sm:$0xff]
    %v3350 = vld [vmem:[#allocation22 + $0x1050] sm:$0xff]
    %v3351 = vld [vmem:[#allocation22 + $0x1058] sm:$0xff]
    %v3352 = vld [vmem:[#allocation22 + $0x1060] sm:$0xff]
    %v3353 = vld [vmem:[#allocation22 + $0x1068] sm:$0xff]
    %v3354 = vld [vmem:[#allocation22 + $0x1070] sm:$0xff]
    %v3355 = vld [vmem:[#allocation22 + $0x1078] sm:$0xff]
    %v3356 = vld [vmem:[#allocation22 + $0x1080] sm:$0xff]
    %v3357 = vld [vmem:[#allocation22 + $0x1088] sm:$0xff]
    %v3358 = vld [vmem:[#allocation22 + $0x1090] sm:$0xff]
    %v3359 = vld [vmem:[#allocation22 + $0x1098] sm:$0xff]
    %v3360 = vld [vmem:[#allocation22 + $0x10a0] sm:$0xff]
    %v3361 = vld [vmem:[#allocation22 + $0x10a8] sm:$0xff]
    %v3362 = vld [vmem:[#allocation22 + $0x10b0] sm:$0xff]
    %v3363 = vld [vmem:[#allocation22 + $0x10b8] sm:$0xff]
    %v3364 = vld [vmem:[#allocation22 + $0x10c0] sm:$0xff]
    %v3365 = vld [vmem:[#allocation22 + $0x10c8] sm:$0xff]
    %v3366 = vld [vmem:[#allocation22 + $0x10d0] sm:$0xff]
    %v3367 = vld [vmem:[#allocation22 + $0x10d8] sm:$0xff]
    %v3368 = vld [vmem:[#allocation22 + $0x10e0] sm:$0xff]
    %v3369 = vld [vmem:[#allocation22 + $0x10e8] sm:$0xff]
    %v3370 = vld [vmem:[#allocation22 + $0x10f0] sm:$0xff]
    %v3371 = vld [vmem:[#allocation22 + $0x10f8] sm:$0xff]
    %v3372 = vld [vmem:[#allocation22 + $0x1100] sm:$0xff]
    %v3373 = vld [vmem:[#allocation22 + $0x1108] sm:$0xff]
    %v3374 = vld [vmem:[#allocation22 + $0x1110] sm:$0xff]
    %v3375 = vld [vmem:[#allocation22 + $0x1118] sm:$0xff]
    %v3376 = vld [vmem:[#allocation22 + $0x1120] sm:$0xff]
    %v3377 = vld [vmem:[#allocation22 + $0x1128] sm:$0xff]
    %v3378 = vld [vmem:[#allocation22 + $0x1130] sm:$0xff]
    %v3379 = vld [vmem:[#allocation22 + $0x1138] sm:$0xff]
    %v3380 = vld [vmem:[#allocation22 + $0x1140] sm:$0xff]
    %v3381 = vld [vmem:[#allocation22 + $0x1148] sm:$0xff]
    %v3382 = vld [vmem:[#allocation22 + $0x1150] sm:$0xff]
    %v3383 = vld [vmem:[#allocation22 + $0x1158] sm:$0xff]
    %v3384 = vld [vmem:[#allocation22 + $0x1160] sm:$0xff]
    %v3385 = vld [vmem:[#allocation22 + $0x1168] sm:$0xff]
    %v3386 = vld [vmem:[#allocation22 + $0x1170] sm:$0xff]
    %v3387 = vld [vmem:[#allocation22 + $0x1178] sm:$0xff]
    %v3388 = vld [vmem:[#allocation22 + $0x1180] sm:$0xff]
    %v3389 = vld [vmem:[#allocation22 + $0x1188] sm:$0xff]
    %v3390 = vld [vmem:[#allocation22 + $0x1190] sm:$0xff]
    %v3391 = vld [vmem:[#allocation22 + $0x1198] sm:$0xff]
    %v3392 = vld [vmem:[#allocation22 + $0x11a0] sm:$0xff]
    %v3393 = vld [vmem:[#allocation22 + $0x11a8] sm:$0xff]
    %v3394 = vld [vmem:[#allocation22 + $0x11b0] sm:$0xff]
    %v3395 = vld [vmem:[#allocation22 + $0x11b8] sm:$0xff]
    %v3396 = vld [vmem:[#allocation22 + $0x11c0] sm:$0xff]
    %v3397 = vld [vmem:[#allocation22 + $0x11c8] sm:$0xff]
    %v3398 = vld [vmem:[#allocation22 + $0x11d0] sm:$0xff]
    %v3399 = vld [vmem:[#allocation22 + $0x11d8] sm:$0xff]
    %v3400 = vld [vmem:[#allocation22 + $0x11e0] sm:$0xff]
    %v3401 = vld [vmem:[#allocation22 + $0x11e8] sm:$0xff]
    %v3402 = vld [vmem:[#allocation22 + $0x11f0] sm:$0xff]
    %v3403 = vld [vmem:[#allocation22 + $0x11f8] sm:$0xff]
    %v3404 = vld [vmem:[#allocation23] sm:$0x3f]
    %v3406 = vlaneseq
    %v3407 = vshrl.u32 %v3406, 7
    %v3408 = vsub.s32 0, %v3407
    %v3409 = vrot.slane %v3404, %v3408
    %v3410 = vlaneseq
    %v3411 = vshrl.u32 %v3410, 7
    %v3412 = vsub.s32 1, %v3411
    %v3413 = vrot.slane %v3404, %v3412
    %v3414 = vlaneseq
    %v3415 = vshrl.u32 %v3414, 7
    %v3416 = vsub.s32 2, %v3415
    %v3417 = vrot.slane %v3404, %v3416
    %v3418 = vlaneseq
    %v3419 = vshrl.u32 %v3418, 7
    %v3420 = vsub.s32 3, %v3419
    %v3421 = vrot.slane %v3404, %v3420
    %v3422 = vlaneseq
    %v3423 = vshrl.u32 %v3422, 7
    %v3424 = vsub.s32 4, %v3423
    %v3425 = vrot.slane %v3404, %v3424
    %v3426 = vlaneseq
    %v3427 = vshrl.u32 %v3426, 7
    %v3428 = vsub.s32 5, %v3427
    %v3429 = vrot.slane %v3404, %v3428
    %3436 = vmatprep.subr.mxu0 %v2829
    %3437 = vmatpush1.msra.mxu0 %v2828
    %3438 = vmatprep.subr.mxu0 %v2835
    %3439 = vmatpush1.msra.mxu0 %v2834
    %3440 = vmatprep.subr.mxu0 %v2841
    %3441 = vmatpush1.msra.mxu0 %v2840
    %3442 = vmatprep.subr.mxu0 %v2847
    %3443 = vmatpush1.msra.mxu0 %v2846
    %3444 = vmatprep.subr.mxu0 %v2853
    %3445 = vmatpush1.msra.mxu0 %v2852
    %3446 = vmatprep.subr.mxu0 %v2859
    %3447 = vmatpush1.msra.mxu0 %v2858
    %3448 = vmatprep.subr.mxu0 %v2865
    %3449 = vmatpush1.msra.mxu0 %v2864
    %3450 = vmatprep.subr.mxu0 %v2871
    %3451 = vmatpush1.msra.mxu0 %v2870
    %3452 = vmatprep.subr.mxu0 %v2877
    %3453 = vmatpush1.msra.mxu0 %v2876
    %3454 = vmatprep.subr.mxu0 %v2883
    %3455 = vmatpush1.msra.mxu0 %v2882
    %3456 = vmatprep.subr.mxu0 %v2889
    %3457 = vmatpush1.msra.mxu0 %v2888
    %3458 = vmatprep.subr.mxu0 %v2895
    %3459 = vmatpush1.msra.mxu0 %v2894
    %3460 = vmatprep.subr.mxu0 %v2901
    %3461 = vmatpush1.msra.mxu0 %v2900
    %3462 = vmatprep.subr.mxu0 %v2907
    %3463 = vmatpush1.msra.mxu0 %v2906
    %3464 = vmatprep.subr.mxu0 %v2913
    %3465 = vmatpush1.msra.mxu0 %v2912
    %3466 = vmatprep.subr.mxu0 %v2919
    %3467 = vmatpush1.msra.mxu0 %v2918
    %3468 = vmatprep.subr.mxu0 %v2925
    %3469 = vmatpush1.msra.mxu0 %v2924
    %3470 = vmatprep.subr.mxu0 %v2931
    %3471 = vmatpush1.msra.mxu0 %v2930
    %3472 = vmatprep.subr.mxu0 %v2937
    %3473 = vmatpush1.msra.mxu0 %v2936
    %3474 = vmatprep.subr.mxu0 %v2943
    %3475 = vmatpush1.msra.mxu0 %v2942
    %3476 = vmatprep.subr.mxu0 %v2949
    %3477 = vmatpush1.msra.mxu0 %v2948
    %3478 = vmatprep.subr.mxu0 %v2955
    %3479 = vmatpush1.msra.mxu0 %v2954
    %3480 = vmatprep.subr.mxu0 %v2961
    %3481 = vmatpush1.msra.mxu0 %v2960
    %3482 = vmatprep.subr.mxu0 %v2967
    %3483 = vmatpush1.msra.mxu0 %v2966
    %3484 = vmatprep.subr.mxu0 %v2973
    %3485 = vmatpush1.msra.mxu0 %v2972
    %3486 = vmatprep.subr.mxu0 %v2979
    %3487 = vmatpush1.msra.mxu0 %v2978
    %3488 = vmatprep.subr.mxu0 %v2985
    %3489 = vmatpush1.msra.mxu0 %v2984
    %3490 = vmatprep.subr.mxu0 %v2991
    %3491 = vmatpush1.msra.mxu0 %v2990
    %3492 = vmatprep.subr.mxu0 %v2997
    %3493 = vmatpush1.msra.mxu0 %v2996
    %3494 = vmatprep.subr.mxu0 %v3003
    %3495 = vmatpush1.msra.mxu0 %v3002
    %3496 = vmatprep.subr.mxu0 %v3009
    %3497 = vmatpush1.msra.mxu0 %v3008
    %3498 = vmatprep.subr.mxu0 %v3015
    %3499 = vmatpush1.msra.mxu0 %v3014
    %3500 = vmatprep.mubr.f32.mxu0 %v2823
    %3501 = vmatmul.mubr.f32.gmra.mrb[0].mxu0 %v2822
    %v3502 = vpop.f32.mrb[0].mxu0
    %v3503 = vadd.f32 %v3409, %v3502
    %v3504 = vpop.f32.mrb[0].mxu0
    %v3505 = vadd.f32 %v3413, %v3504
    %3506 = vdwg.mxu0
    %3507 = vmatprep.subr.mxu0 %v3021
    %3508 = vmatpush1.msra.mxu0 %v3020
    %3509 = vmatprep.subr.mxu0 %v3027
    %3510 = vmatpush1.msra.mxu0 %v3026
    %3511 = vmatprep.subr.mxu0 %v3033
    %3512 = vmatpush1.msra.mxu0 %v3032
    %3513 = vmatprep.subr.mxu0 %v3039
    %3514 = vmatpush1.msra.mxu0 %v3038
    %3515 = vmatprep.subr.mxu0 %v3045
    %3516 = vmatpush1.msra.mxu0 %v3044
    %3517 = vmatprep.subr.mxu0 %v3051
    %3518 = vmatpush1.msra.mxu0 %v3050
    %3519 = vmatprep.subr.mxu0 %v3057
    %3520 = vmatpush1.msra.mxu0 %v3056
    %3521 = vmatprep.subr.mxu0 %v3063
    %3522 = vmatpush1.msra.mxu0 %v3062
    %3523 = vmatprep.subr.mxu0 %v3069
    %3524 = vmatpush1.msra.mxu0 %v3068
    %3525 = vmatprep.subr.mxu0 %v3075
    %3526 = vmatpush1.msra.mxu0 %v3074
    %3527 = vmatprep.subr.mxu0 %v3081
    %3528 = vmatpush1.msra.mxu0 %v3080
    %3529 = vmatprep.subr.mxu0 %v3087
    %3530 = vmatpush1.msra.mxu0 %v3086
    %3531 = vmatprep.subr.mxu0 %v3093
    %3532 = vmatpush1.msra.mxu0 %v3092
    %3533 = vmatprep.subr.mxu0 %v3099
    %3534 = vmatpush1.msra.mxu0 %v3098
    %3535 = vmatprep.subr.mxu0 %v3105
    %3536 = vmatpush1.msra.mxu0 %v3104
    %3537 = vmatprep.subr.mxu0 %v3111
    %3538 = vmatpush1.msra.mxu0 %v3110
    %3539 = vmatprep.subr.mxu0 %v3117
    %3540 = vmatpush1.msra.mxu0 %v3116
    %3541 = vmatprep.subr.mxu0 %v3123
    %3542 = vmatpush1.msra.mxu0 %v3122
    %3543 = vmatprep.subr.mxu0 %v3129
    %3544 = vmatpush1.msra.mxu0 %v3128
    %3545 = vmatprep.subr.mxu0 %v3135
    %3546 = vmatpush1.msra.mxu0 %v3134
    %3547 = vmatprep.subr.mxu0 %v3141
    %3548 = vmatpush1.msra.mxu0 %v3140
    %3549 = vmatprep.subr.mxu0 %v3147
    %3550 = vmatpush1.msra.mxu0 %v3146
    %3551 = vmatprep.subr.mxu0 %v3153
    %3552 = vmatpush1.msra.mxu0 %v3152
    %3553 = vmatprep.subr.mxu0 %v3159
    %3554 = vmatpush1.msra.mxu0 %v3158
    %3555 = vmatprep.subr.mxu0 %v3165
    %3556 = vmatpush1.msra.mxu0 %v3164
    %3557 = vmatprep.subr.mxu0 %v3171
    %3558 = vmatpush1.msra.mxu0 %v3170
    %3559 = vmatprep.subr.mxu0 %v3177
    %3560 = vmatpush1.msra.mxu0 %v3176
    %3561 = vmatprep.subr.mxu0 %v3183
    %3562 = vmatpush1.msra.mxu0 %v3182
    %3563 = vmatprep.subr.mxu0 %v3189
    %3564 = vmatpush1.msra.mxu0 %v3188
    %3565 = vmatprep.subr.mxu0 %v3195
    %3566 = vmatpush1.msra.mxu0 %v3194
    %3567 = vmatprep.subr.mxu0 %v3201
    %3568 = vmatpush1.msra.mxu0 %v3200
    %3569 = vmatprep.subr.mxu0 %v3207
    %3570 = vmatpush1.msra.mxu0 %v3206
    %3571 = vmatprep.mubr.f32.mxu0 %v2825
    %3572 = vmatmul.mubr.f32.gmra.mrb[0].mxu0 %v2824
    %v3573 = vpop.f32.mrb[0].mxu0
    %v3574 = vadd.f32 %v3503, %v3573
    %v3575 = vpop.f32.mrb[0].mxu0
    %v3576 = vadd.f32 %v3505, %v3575
    %3577 = vdwg.mxu0
    %3578 = vmatprep.subr.mxu0 %v3213
    %3579 = vmatpush1.msra.mxu0 %v3212
    %3580 = vmatprep.subr.mxu0 %v3219
    %3581 = vmatpush1.msra.mxu0 %v3218
    %3582 = vmatprep.subr.mxu0 %v3225
    %3583 = vmatpush1.msra.mxu0 %v3224
    %3584 = vmatprep.subr.mxu0 %v3231
    %3585 = vmatpush1.msra.mxu0 %v3230
    %3586 = vmatprep.subr.mxu0 %v3237
    %3587 = vmatpush1.msra.mxu0 %v3236
    %3588 = vmatprep.subr.mxu0 %v3243
    %3589 = vmatpush1.msra.mxu0 %v3242
    %3590 = vmatprep.subr.mxu0 %v3249
    %3591 = vmatpush1.msra.mxu0 %v3248
    %3592 = vmatprep.subr.mxu0 %v3255
    %3593 = vmatpush1.msra.mxu0 %v3254
    %3594 = vmatprep.subr.mxu0 %v3261
    %3595 = vmatpush1.msra.mxu0 %v3260
    %3596 = vmatprep.subr.mxu0 %v3267
    %3597 = vmatpush1.msra.mxu0 %v3266
    %3598 = vmatprep.subr.mxu0 %v3273
    %3599 = vmatpush1.msra.mxu0 %v3272
    %3600 = vmatprep.subr.mxu0 %v3279
    %3601 = vmatpush1.msra.mxu0 %v3278
    %3602 = vmatprep.subr.mxu0 %v3285
    %3603 = vmatpush1.msra.mxu0 %v3284
    %3604 = vmatprep.subr.mxu0 %v3291
    %3605 = vmatpush1.msra.mxu0 %v3290
    %3606 = vmatprep.subr.mxu0 %v3297
    %3607 = vmatpush1.msra.mxu0 %v3296
    %3608 = vmatprep.subr.mxu0 %v3303
    %3609 = vmatpush1.msra.mxu0 %v3302
    %3610 = vmatprep.subr.mxu0 %v3309
    %3611 = vmatpush1.msra.mxu0 %v3308
    %3612 = vmatprep.subr.mxu0 %v3315
    %3613 = vmatpush1.msra.mxu0 %v3314
    %3614 = vmatprep.subr.mxu0 %v3321
    %3615 = vmatpush1.msra.mxu0 %v3320
    %3616 = vmatprep.subr.mxu0 %v3327
    %3617 = vmatpush1.msra.mxu0 %v3326
    %3618 = vmatprep.subr.mxu0 %v3333
    %3619 = vmatpush1.msra.mxu0 %v3332
    %3620 = vmatprep.subr.mxu0 %v3339
    %3621 = vmatpush1.msra.mxu0 %v3338
    %3622 = vmatprep.subr.mxu0 %v3345
    %3623 = vmatpush1.msra.mxu0 %v3344
    %3624 = vmatprep.subr.mxu0 %v3351
    %3625 = vmatpush1.msra.mxu0 %v3350
    %3626 = vmatprep.subr.mxu0 %v3357
    %3627 = vmatpush1.msra.mxu0 %v3356
    %3628 = vmatprep.subr.mxu0 %v3363
    %3629 = vmatpush1.msra.mxu0 %v3362
    %3630 = vmatprep.subr.mxu0 %v3369
    %3631 = vmatpush1.msra.mxu0 %v3368
    %3632 = vmatprep.subr.mxu0 %v3375
    %3633 = vmatpush1.msra.mxu0 %v3374
    %3634 = vmatprep.subr.mxu0 %v3381
    %3635 = vmatpush1.msra.mxu0 %v3380
    %3636 = vmatprep.subr.mxu0 %v3387
    %3637 = vmatpush1.msra.mxu0 %v3386
    %3638 = vmatprep.subr.mxu0 %v3393
    %3639 = vmatpush1.msra.mxu0 %v3392
    %3640 = vmatprep.subr.mxu0 %v3399
    %3641 = vmatpush1.msra.mxu0 %v3398
    %3642 = vmatprep.mubr.f32.mxu0 %v2827
    %3643 = vmatmul.mubr.f32.gmra.mrb[0].mxu0 %v2826
    %v3644 = vpop.f32.mrb[0].mxu0
    %v3645 = vadd.f32 %v3574, %v3644
    %v3646 = vpop.f32.mrb[0].mxu0
    %v3647 = vadd.f32 %v3576, %v3646
    %3648 = vdwg.mxu0
    %3649 = vmatprep.subr.mxu0 %v2831
    %3650 = vmatpush1.msra.mxu0 %v2830
    %3651 = vmatprep.subr.mxu0 %v2837
    %3652 = vmatpush1.msra.mxu0 %v2836
    %3653 = vmatprep.subr.mxu0 %v2843
    %3654 = vmatpush1.msra.mxu0 %v2842
    %3655 = vmatprep.subr.mxu0 %v2849
    %3656 = vmatpush1.msra.mxu0 %v2848
    %3657 = vmatprep.subr.mxu0 %v2855
    %3658 = vmatpush1.msra.mxu0 %v2854
    %3659 = vmatprep.subr.mxu0 %v2861
    %3660 = vmatpush1.msra.mxu0 %v2860
    %3661 = vmatprep.subr.mxu0 %v2867
    %3662 = vmatpush1.msra.mxu0 %v2866
    %3663 = vmatprep.subr.mxu0 %v2873
    %3664 = vmatpush1.msra.mxu0 %v2872
    %3665 = vmatprep.subr.mxu0 %v2879
    %3666 = vmatpush1.msra.mxu0 %v2878
    %3667 = vmatprep.subr.mxu0 %v2885
    %3668 = vmatpush1.msra.mxu0 %v2884
    %3669 = vmatprep.subr.mxu0 %v2891
    %3670 = vmatpush1.msra.mxu0 %v2890
    %3671 = vmatprep.subr.mxu0 %v2897
    %3672 = vmatpush1.msra.mxu0 %v2896
    %3673 = vmatprep.subr.mxu0 %v2903
    %3674 = vmatpush1.msra.mxu0 %v2902
    %3675 = vmatprep.subr.mxu0 %v2909
    %3676 = vmatpush1.msra.mxu0 %v2908
    %3677 = vmatprep.subr.mxu0 %v2915
    %3678 = vmatpush1.msra.mxu0 %v2914
    %3679 = vmatprep.subr.mxu0 %v2921
    %3680 = vmatpush1.msra.mxu0 %v2920
    %3681 = vmatprep.subr.mxu0 %v2927
    %3682 = vmatpush1.msra.mxu0 %v2926
    %3683 = vmatprep.subr.mxu0 %v2933
    %3684 = vmatpush1.msra.mxu0 %v2932
    %3685 = vmatprep.subr.mxu0 %v2939
    %3686 = vmatpush1.msra.mxu0 %v2938
    %3687 = vmatprep.subr.mxu0 %v2945
    %3688 = vmatpush1.msra.mxu0 %v2944
    %3689 = vmatprep.subr.mxu0 %v2951
    %3690 = vmatpush1.msra.mxu0 %v2950
    %3691 = vmatprep.subr.mxu0 %v2957
    %3692 = vmatpush1.msra.mxu0 %v2956
    %3693 = vmatprep.subr.mxu0 %v2963
    %3694 = vmatpush1.msra.mxu0 %v2962
    %3695 = vmatprep.subr.mxu0 %v2969
    %3696 = vmatpush1.msra.mxu0 %v2968
    %3697 = vmatprep.subr.mxu0 %v2975
    %3698 = vmatpush1.msra.mxu0 %v2974
    %3699 = vmatprep.subr.mxu0 %v2981
    %3700 = vmatpush1.msra.mxu0 %v2980
    %3701 = vmatprep.subr.mxu0 %v2987
    %3702 = vmatpush1.msra.mxu0 %v2986
    %3703 = vmatprep.subr.mxu0 %v2993
    %3704 = vmatpush1.msra.mxu0 %v2992
    %3705 = vmatprep.subr.mxu0 %v2999
    %3706 = vmatpush1.msra.mxu0 %v2998
    %3707 = vmatprep.subr.mxu0 %v3005
    %3708 = vmatpush1.msra.mxu0 %v3004
    %3709 = vmatprep.subr.mxu0 %v3011
    %3710 = vmatpush1.msra.mxu0 %v3010
    %3711 = vmatprep.subr.mxu0 %v3017
    %3712 = vmatpush1.msra.mxu0 %v3016
    %3713 = vmatprep.mubr.f32.mxu0 %v2823
    %3714 = vmatmul.mubr.f32.gmra.mrb[0].mxu0 %v2822
    %v3715 = vpop.f32.mrb[0].mxu0
    %v3716 = vadd.f32 %v3417, %v3715
    %v3717 = vpop.f32.mrb[0].mxu0
    %v3718 = vadd.f32 %v3421, %v3717
    %3719 = vdwg.mxu0
    %3720 = vmatprep.subr.mxu0 %v3023
    %3721 = vmatpush1.msra.mxu0 %v3022
    %3722 = vmatprep.subr.mxu0 %v3029
    %3723 = vmatpush1.msra.mxu0 %v3028
    %3724 = vmatprep.subr.mxu0 %v3035
    %3725 = vmatpush1.msra.mxu0 %v3034
    %3726 = vmatprep.subr.mxu0 %v3041
    %3727 = vmatpush1.msra.mxu0 %v3040
    %3728 = vmatprep.subr.mxu0 %v3047
    %3729 = vmatpush1.msra.mxu0 %v3046
    %3730 = vmatprep.subr.mxu0 %v3053
    %3731 = vmatpush1.msra.mxu0 %v3052
    %3732 = vmatprep.subr.mxu0 %v3059
    %3733 = vmatpush1.msra.mxu0 %v3058
    %3734 = vmatprep.subr.mxu0 %v3065
    %3735 = vmatpush1.msra.mxu0 %v3064
    %3736 = vmatprep.subr.mxu0 %v3071
    %3737 = vmatpush1.msra.mxu0 %v3070
    %3738 = vmatprep.subr.mxu0 %v3077
    %3739 = vmatpush1.msra.mxu0 %v3076
    %3740 = vmatprep.subr.mxu0 %v3083
    %3741 = vmatpush1.msra.mxu0 %v3082
    %3742 = vmatprep.subr.mxu0 %v3089
    %3743 = vmatpush1.msra.mxu0 %v3088
    %3744 = vmatprep.subr.mxu0 %v3095
    %3745 = vmatpush1.msra.mxu0 %v3094
    %3746 = vmatprep.subr.mxu0 %v3101
    %3747 = vmatpush1.msra.mxu0 %v3100
    %3748 = vmatprep.subr.mxu0 %v3107
    %3749 = vmatpush1.msra.mxu0 %v3106
    %3750 = vmatprep.subr.mxu0 %v3113
    %3751 = vmatpush1.msra.mxu0 %v3112
    %3752 = vmatprep.subr.mxu0 %v3119
    %3753 = vmatpush1.msra.mxu0 %v3118
    %3754 = vmatprep.subr.mxu0 %v3125
    %3755 = vmatpush1.msra.mxu0 %v3124
    %3756 = vmatprep.subr.mxu0 %v3131
    %3757 = vmatpush1.msra.mxu0 %v3130
    %3758 = vmatprep.subr.mxu0 %v3137
    %3759 = vmatpush1.msra.mxu0 %v3136
    %3760 = vmatprep.subr.mxu0 %v3143
    %3761 = vmatpush1.msra.mxu0 %v3142
    %3762 = vmatprep.subr.mxu0 %v3149
    %3763 = vmatpush1.msra.mxu0 %v3148
    %3764 = vmatprep.subr.mxu0 %v3155
    %3765 = vmatpush1.msra.mxu0 %v3154
    %3766 = vmatprep.subr.mxu0 %v3161
    %3767 = vmatpush1.msra.mxu0 %v3160
    %3768 = vmatprep.subr.mxu0 %v3167
    %3769 = vmatpush1.msra.mxu0 %v3166
    %3770 = vmatprep.subr.mxu0 %v3173
    %3771 = vmatpush1.msra.mxu0 %v3172
    %3772 = vmatprep.subr.mxu0 %v3179
    %3773 = vmatpush1.msra.mxu0 %v3178
    %3774 = vmatprep.subr.mxu0 %v3185
    %3775 = vmatpush1.msra.mxu0 %v3184
    %3776 = vmatprep.subr.mxu0 %v3191
    %3777 = vmatpush1.msra.mxu0 %v3190
    %3778 = vmatprep.subr.mxu0 %v3197
    %3779 = vmatpush1.msra.mxu0 %v3196
    %3780 = vmatprep.subr.mxu0 %v3203
    %3781 = vmatpush1.msra.mxu0 %v3202
    %3782 = vmatprep.subr.mxu0 %v3209
    %3783 = vmatpush1.msra.mxu0 %v3208
    %3784 = vmatprep.mubr.f32.mxu0 %v2825
    %3785 = vmatmul.mubr.f32.gmra.mrb[0].mxu0 %v2824
    %v3786 = vpop.f32.mrb[0].mxu0
    %v3787 = vadd.f32 %v3716, %v3786
    %v3788 = vpop.f32.mrb[0].mxu0
    %v3789 = vadd.f32 %v3718, %v3788
    %3790 = vdwg.mxu0
    %3791 = vmatprep.subr.mxu0 %v3215
    %3792 = vmatpush1.msra.mxu0 %v3214
    %3793 = vmatprep.subr.mxu0 %v3221
    %3794 = vmatpush1.msra.mxu0 %v3220
    %3795 = vmatprep.subr.mxu0 %v3227
    %3796 = vmatpush1.msra.mxu0 %v3226
    %3797 = vmatprep.subr.mxu0 %v3233
    %3798 = vmatpush1.msra.mxu0 %v3232
    %3799 = vmatprep.subr.mxu0 %v3239
    %3800 = vmatpush1.msra.mxu0 %v3238
    %3801 = vmatprep.subr.mxu0 %v3245
    %3802 = vmatpush1.msra.mxu0 %v3244
    %3803 = vmatprep.subr.mxu0 %v3251
    %3804 = vmatpush1.msra.mxu0 %v3250
    %3805 = vmatprep.subr.mxu0 %v3257
    %3806 = vmatpush1.msra.mxu0 %v3256
    %3807 = vmatprep.subr.mxu0 %v3263
    %3808 = vmatpush1.msra.mxu0 %v3262
    %3809 = vmatprep.subr.mxu0 %v3269
    %3810 = vmatpush1.msra.mxu0 %v3268
    %3811 = vmatprep.subr.mxu0 %v3275
    %3812 = vmatpush1.msra.mxu0 %v3274
    %3813 = vmatprep.subr.mxu0 %v3281
    %3814 = vmatpush1.msra.mxu0 %v3280
    %3815 = vmatprep.subr.mxu0 %v3287
    %3816 = vmatpush1.msra.mxu0 %v3286
    %3817 = vmatprep.subr.mxu0 %v3293
    %3818 = vmatpush1.msra.mxu0 %v3292
    %3819 = vmatprep.subr.mxu0 %v3299
    %3820 = vmatpush1.msra.mxu0 %v3298
    %3821 = vmatprep.subr.mxu0 %v3305
    %3822 = vmatpush1.msra.mxu0 %v3304
    %3823 = vmatprep.subr.mxu0 %v3311
    %3824 = vmatpush1.msra.mxu0 %v3310
    %3825 = vmatprep.subr.mxu0 %v3317
    %3826 = vmatpush1.msra.mxu0 %v3316
    %3827 = vmatprep.subr.mxu0 %v3323
    %3828 = vmatpush1.msra.mxu0 %v3322
    %3829 = vmatprep.subr.mxu0 %v3329
    %3830 = vmatpush1.msra.mxu0 %v3328
    %3831 = vmatprep.subr.mxu0 %v3335
    %3832 = vmatpush1.msra.mxu0 %v3334
    %3833 = vmatprep.subr.mxu0 %v3341
    %3834 = vmatpush1.msra.mxu0 %v3340
    %3835 = vmatprep.subr.mxu0 %v3347
    %3836 = vmatpush1.msra.mxu0 %v3346
    %3837 = vmatprep.subr.mxu0 %v3353
    %3838 = vmatpush1.msra.mxu0 %v3352
    %3839 = vmatprep.subr.mxu0 %v3359
    %3840 = vmatpush1.msra.mxu0 %v3358
    %3841 = vmatprep.subr.mxu0 %v3365
    %3842 = vmatpush1.msra.mxu0 %v3364
    %3843 = vmatprep.subr.mxu0 %v3371
    %3844 = vmatpush1.msra.mxu0 %v3370
    %3845 = vmatprep.subr.mxu0 %v3377
    %3846 = vmatpush1.msra.mxu0 %v3376
    %3847 = vmatprep.subr.mxu0 %v3383
    %3848 = vmatpush1.msra.mxu0 %v3382
    %3849 = vmatprep.subr.mxu0 %v3389
    %3850 = vmatpush1.msra.mxu0 %v3388
    %3851 = vmatprep.subr.mxu0 %v3395
    %3852 = vmatpush1.msra.mxu0 %v3394
    %3853 = vmatprep.subr.mxu0 %v3401
    %3854 = vmatpush1.msra.mxu0 %v3400
    %3855 = vmatprep.mubr.f32.mxu0 %v2827
    %3856 = vmatmul.mubr.f32.gmra.mrb[0].mxu0 %v2826
    %v3857 = vpop.f32.mrb[0].mxu0
    %v3858 = vadd.f32 %v3787, %v3857
    %v3859 = vpop.f32.mrb[0].mxu0
    %v3860 = vadd.f32 %v3789, %v3859
    %3861 = vdwg.mxu0
    %3862 = vmatprep.subr.mxu0 %v2833
    %3863 = vmatpush1.msra.mxu0 %v2832
    %3864 = vmatprep.subr.mxu0 %v2839
    %3865 = vmatpush1.msra.mxu0 %v2838
    %3866 = vmatprep.subr.mxu0 %v2845
    %3867 = vmatpush1.msra.mxu0 %v2844
    %3868 = vmatprep.subr.mxu0 %v2851
    %3869 = vmatpush1.msra.mxu0 %v2850
    %3870 = vmatprep.subr.mxu0 %v2857
    %3871 = vmatpush1.msra.mxu0 %v2856
    %3872 = vmatprep.subr.mxu0 %v2863
    %3873 = vmatpush1.msra.mxu0 %v2862
    %3874 = vmatprep.subr.mxu0 %v2869
    %3875 = vmatpush1.msra.mxu0 %v2868
    %3876 = vmatprep.subr.mxu0 %v2875
    %3877 = vmatpush1.msra.mxu0 %v2874
    %3878 = vmatprep.subr.mxu0 %v2881
    %3879 = vmatpush1.msra.mxu0 %v2880
    %3880 = vmatprep.subr.mxu0 %v2887
    %3881 = vmatpush1.msra.mxu0 %v2886
    %3882 = vmatprep.subr.mxu0 %v2893
    %3883 = vmatpush1.msra.mxu0 %v2892
    %3884 = vmatprep.subr.mxu0 %v2899
    %3885 = vmatpush1.msra.mxu0 %v2898
    %3886 = vmatprep.subr.mxu0 %v2905
    %3887 = vmatpush1.msra.mxu0 %v2904
    %3888 = vmatprep.subr.mxu0 %v2911
    %3889 = vmatpush1.msra.mxu0 %v2910
    %3890 = vmatprep.subr.mxu0 %v2917
    %3891 = vmatpush1.msra.mxu0 %v2916
    %3892 = vmatprep.subr.mxu0 %v2923
    %3893 = vmatpush1.msra.mxu0 %v2922
    %3894 = vmatprep.subr.mxu0 %v2929
    %3895 = vmatpush1.msra.mxu0 %v2928
    %3896 = vmatprep.subr.mxu0 %v2935
    %3897 = vmatpush1.msra.mxu0 %v2934
    %3898 = vmatprep.subr.mxu0 %v2941
    %3899 = vmatpush1.msra.mxu0 %v2940
    %3900 = vmatprep.subr.mxu0 %v2947
    %3901 = vmatpush1.msra.mxu0 %v2946
    %3902 = vmatprep.subr.mxu0 %v2953
    %3903 = vmatpush1.msra.mxu0 %v2952
    %3904 = vmatprep.subr.mxu0 %v2959
    %3905 = vmatpush1.msra.mxu0 %v2958
    %3906 = vmatprep.subr.mxu0 %v2965
    %3907 = vmatpush1.msra.mxu0 %v2964
    %3908 = vmatprep.subr.mxu0 %v2971
    %3909 = vmatpush1.msra.mxu0 %v2970
    %3910 = vmatprep.subr.mxu0 %v2977
    %3911 = vmatpush1.msra.mxu0 %v2976
    %3912 = vmatprep.subr.mxu0 %v2983
    %3913 = vmatpush1.msra.mxu0 %v2982
    %3914 = vmatprep.subr.mxu0 %v2989
    %3915 = vmatpush1.msra.mxu0 %v2988
    %3916 = vmatprep.subr.mxu0 %v2995
    %3917 = vmatpush1.msra.mxu0 %v2994
    %3918 = vmatprep.subr.mxu0 %v3001
    %3919 = vmatpush1.msra.mxu0 %v3000
    %3920 = vmatprep.subr.mxu0 %v3007
    %3921 = vmatpush1.msra.mxu0 %v3006
    %3922 = vmatprep.subr.mxu0 %v3013
    %3923 = vmatpush1.msra.mxu0 %v3012
    %3924 = vmatprep.subr.mxu0 %v3019
    %3925 = vmatpush1.msra.mxu0 %v3018
    %3926 = vmatprep.mubr.f32.mxu0 %v2823
    %3927 = vmatmul.mubr.f32.gmra.mrb[0].mxu0 %v2822
    %v3928 = vpop.f32.mrb[0].mxu0
    %v3929 = vadd.f32 %v3425, %v3928
    %v3930 = vpop.f32.mrb[0].mxu0
    %v3931 = vadd.f32 %v3429, %v3930
    %3932 = vdwg.mxu0
    %3933 = vmatprep.subr.mxu0 %v3025
    %3934 = vmatpush1.msra.mxu0 %v3024
    %3935 = vmatprep.subr.mxu0 %v3031
    %3936 = vmatpush1.msra.mxu0 %v3030
    %3937 = vmatprep.subr.mxu0 %v3037
    %3938 = vmatpush1.msra.mxu0 %v3036
    %3939 = vmatprep.subr.mxu0 %v3043
    %3940 = vmatpush1.msra.mxu0 %v3042
    %3941 = vmatprep.subr.mxu0 %v3049
    %3942 = vmatpush1.msra.mxu0 %v3048
    %3943 = vmatprep.subr.mxu0 %v3055
    %3944 = vmatpush1.msra.mxu0 %v3054
    %3945 = vmatprep.subr.mxu0 %v3061
    %3946 = vmatpush1.msra.mxu0 %v3060
    %3947 = vmatprep.subr.mxu0 %v3067
    %3948 = vmatpush1.msra.mxu0 %v3066
    %3949 = vmatprep.subr.mxu0 %v3073
    %3950 = vmatpush1.msra.mxu0 %v3072
    %3951 = vmatprep.subr.mxu0 %v3079
    %3952 = vmatpush1.msra.mxu0 %v3078
    %3953 = vmatprep.subr.mxu0 %v3085
    %3954 = vmatpush1.msra.mxu0 %v3084
    %3955 = vmatprep.subr.mxu0 %v3091
    %3956 = vmatpush1.msra.mxu0 %v3090
    %3957 = vmatprep.subr.mxu0 %v3097
    %3958 = vmatpush1.msra.mxu0 %v3096
    %3959 = vmatprep.subr.mxu0 %v3103
    %3960 = vmatpush1.msra.mxu0 %v3102
    %3961 = vmatprep.subr.mxu0 %v3109
    %3962 = vmatpush1.msra.mxu0 %v3108
    %3963 = vmatprep.subr.mxu0 %v3115
    %3964 = vmatpush1.msra.mxu0 %v3114
    %3965 = vmatprep.subr.mxu0 %v3121
    %3966 = vmatpush1.msra.mxu0 %v3120
    %3967 = vmatprep.subr.mxu0 %v3127
    %3968 = vmatpush1.msra.mxu0 %v3126
    %3969 = vmatprep.subr.mxu0 %v3133
    %3970 = vmatpush1.msra.mxu0 %v3132
    %3971 = vmatprep.subr.mxu0 %v3139
    %3972 = vmatpush1.msra.mxu0 %v3138
    %3973 = vmatprep.subr.mxu0 %v3145
    %3974 = vmatpush1.msra.mxu0 %v3144
    %3975 = vmatprep.subr.mxu0 %v3151
    %3976 = vmatpush1.msra.mxu0 %v3150
    %3977 = vmatprep.subr.mxu0 %v3157
    %3978 = vmatpush1.msra.mxu0 %v3156
    %3979 = vmatprep.subr.mxu0 %v3163
    %3980 = vmatpush1.msra.mxu0 %v3162
    %3981 = vmatprep.subr.mxu0 %v3169
    %3982 = vmatpush1.msra.mxu0 %v3168
    %3983 = vmatprep.subr.mxu0 %v3175
    %3984 = vmatpush1.msra.mxu0 %v3174
    %3985 = vmatprep.subr.mxu0 %v3181
    %3986 = vmatpush1.msra.mxu0 %v3180
    %3987 = vmatprep.subr.mxu0 %v3187
    %3988 = vmatpush1.msra.mxu0 %v3186
    %3989 = vmatprep.subr.mxu0 %v3193
    %3990 = vmatpush1.msra.mxu0 %v3192
    %3991 = vmatprep.subr.mxu0 %v3199
    %3992 = vmatpush1.msra.mxu0 %v3198
    %3993 = vmatprep.subr.mxu0 %v3205
    %3994 = vmatpush1.msra.mxu0 %v3204
    %3995 = vmatprep.subr.mxu0 %v3211
    %3996 = vmatpush1.msra.mxu0 %v3210
    %3997 = vmatprep.mubr.f32.mxu0 %v2825
    %3998 = vmatmul.mubr.f32.gmra.mrb[0].mxu0 %v2824
    %v3999 = vpop.f32.mrb[0].mxu0
    %v4000 = vadd.f32 %v3929, %v3999
    %v4001 = vpop.f32.mrb[0].mxu0
    %v4002 = vadd.f32 %v3931, %v4001
    %4003 = vdwg.mxu0
    %4004 = vmatprep.subr.mxu0 %v3217
    %4005 = vmatpush1.msra.mxu0 %v3216
    %4006 = vmatprep.subr.mxu0 %v3223
    %4007 = vmatpush1.msra.mxu0 %v3222
    %4008 = vmatprep.subr.mxu0 %v3229
    %4009 = vmatpush1.msra.mxu0 %v3228
    %4010 = vmatprep.subr.mxu0 %v3235
    %4011 = vmatpush1.msra.mxu0 %v3234
    %4012 = vmatprep.subr.mxu0 %v3241
    %4013 = vmatpush1.msra.mxu0 %v3240
    %4014 = vmatprep.subr.mxu0 %v3247
    %4015 = vmatpush1.msra.mxu0 %v3246
    %4016 = vmatprep.subr.mxu0 %v3253
    %4017 = vmatpush1.msra.mxu0 %v3252
    %4018 = vmatprep.subr.mxu0 %v3259
    %4019 = vmatpush1.msra.mxu0 %v3258
    %4020 = vmatprep.subr.mxu0 %v3265
    %4021 = vmatpush1.msra.mxu0 %v3264
    %4022 = vmatprep.subr.mxu0 %v3271
    %4023 = vmatpush1.msra.mxu0 %v3270
    %4024 = vmatprep.subr.mxu0 %v3277
    %4025 = vmatpush1.msra.mxu0 %v3276
    %4026 = vmatprep.subr.mxu0 %v3283
    %4027 = vmatpush1.msra.mxu0 %v3282
    %4028 = vmatprep.subr.mxu0 %v3289
    %4029 = vmatpush1.msra.mxu0 %v3288
    %4030 = vmatprep.subr.mxu0 %v3295
    %4031 = vmatpush1.msra.mxu0 %v3294
    %4032 = vmatprep.subr.mxu0 %v3301
    %4033 = vmatpush1.msra.mxu0 %v3300
    %4034 = vmatprep.subr.mxu0 %v3307
    %4035 = vmatpush1.msra.mxu0 %v3306
    %4036 = vmatprep.subr.mxu0 %v3313
    %4037 = vmatpush1.msra.mxu0 %v3312
    %4038 = vmatprep.subr.mxu0 %v3319
    %4039 = vmatpush1.msra.mxu0 %v3318
    %4040 = vmatprep.subr.mxu0 %v3325
    %4041 = vmatpush1.msra.mxu0 %v3324
    %4042 = vmatprep.subr.mxu0 %v3331
    %4043 = vmatpush1.msra.mxu0 %v3330
    %4044 = vmatprep.subr.mxu0 %v3337
    %4045 = vmatpush1.msra.mxu0 %v3336
    %4046 = vmatprep.subr.mxu0 %v3343
    %4047 = vmatpush1.msra.mxu0 %v3342
    %4048 = vmatprep.subr.mxu0 %v3349
    %4049 = vmatpush1.msra.mxu0 %v3348
    %4050 = vmatprep.subr.mxu0 %v3355
    %4051 = vmatpush1.msra.mxu0 %v3354
    %4052 = vmatprep.subr.mxu0 %v3361
    %4053 = vmatpush1.msra.mxu0 %v3360
    %4054 = vmatprep.subr.mxu0 %v3367
    %4055 = vmatpush1.msra.mxu0 %v3366
    %4056 = vmatprep.subr.mxu0 %v3373
    %4057 = vmatpush1.msra.mxu0 %v3372
    %4058 = vmatprep.subr.mxu0 %v3379
    %4059 = vmatpush1.msra.mxu0 %v3378
    %4060 = vmatprep.subr.mxu0 %v3385
    %4061 = vmatpush1.msra.mxu0 %v3384
    %4062 = vmatprep.subr.mxu0 %v3391
    %4063 = vmatpush1.msra.mxu0 %v3390
    %4064 = vmatprep.subr.mxu0 %v3397
    %4065 = vmatpush1.msra.mxu0 %v3396
    %4066 = vmatprep.subr.mxu0 %v3403
    %4067 = vmatpush1.msra.mxu0 %v3402
    %4068 = vmatprep.mubr.f32.mxu0 %v2827
    %4069 = vmatmul.mubr.f32.gmra.mrb[0].mxu0 %v2826
    %v4070 = vpop.f32.mrb[0].mxu0
    %v4071 = vadd.f32 %v4000, %v4070
    %v4072 = vpop.f32.mrb[0].mxu0
    %v4073 = vadd.f32 %v4002, %v4072
    %4074 = vdwg.mxu0
    %v4075 = vmax.f32 %v3645, 0.0
    %v4076 = vmax.f32 %v3647, 0.0
    %v4077 = vmax.f32 %v3858, 0.0
    %v4078 = vmax.f32 %v3860, 0.0
    %v4079 = vmax.f32 %v4071, 0.0
    %v4080 = vmax.f32 %v4073, 0.0
    %v4081 = vld [vmem:[#allocation25] sm:$0xff]
    %v4082 = vld [vmem:[#allocation25 + $0x8] sm:$0xff]
    %v4083 = vld [vmem:[#allocation25 + $0x10] sm:$0xff]
    %v4084 = vld [vmem:[#allocation25 + $0x18] sm:$0xff]
    %v4085 = vld [vmem:[#allocation25 + $0x20] sm:$0xff]
    %v4086 = vld [vmem:[#allocation25 + $0x28] sm:$0xff]
    %v4087 = vld [vmem:[#allocation25 + $0x30] sm:$0xff]
    %v4088 = vld [vmem:[#allocation25 + $0x38] sm:$0xff]
    %v4089 = vld [vmem:[#allocation25 + $0x40] sm:$0xff]
    %v4090 = vld [vmem:[#allocation25 + $0x48] sm:$0xff]
    %v4091 = vld [vmem:[#allocation25 + $0x50] sm:$0xff]
    %v4092 = vld [vmem:[#allocation25 + $0x58] sm:$0xff]
    %v4093 = vld [vmem:[#allocation25 + $0x60] sm:$0xff]
    %v4094 = vld [vmem:[#allocation25 + $0x68] sm:$0xff]
    %v4095 = vld [vmem:[#allocation25 + $0x70] sm:$0xff]
    %v4096 = vld [vmem:[#allocation25 + $0x78] sm:$0xff]
    %v4097 = vld [vmem:[#allocation25 + $0x80] sm:$0xff]
    %v4098 = vld [vmem:[#allocation25 + $0x88] sm:$0xff]
    %v4099 = vld [vmem:[#allocation25 + $0x90] sm:$0xff]
    %v4100 = vld [vmem:[#allocation25 + $0x98] sm:$0xff]
    %v4101 = vld [vmem:[#allocation25 + $0xa0] sm:$0xff]
    %v4102 = vld [vmem:[#allocation25 + $0xa8] sm:$0xff]
    %v4103 = vld [vmem:[#allocation25 + $0xb0] sm:$0xff]
    %v4104 = vld [vmem:[#allocation25 + $0xb8] sm:$0xff]
    %v4105 = vld [vmem:[#allocation25 + $0xc0] sm:$0xff]
    %v4106 = vld [vmem:[#allocation25 + $0xc8] sm:$0xff]
    %v4107 = vld [vmem:[#allocation25 + $0xd0] sm:$0xff]
    %v4108 = vld [vmem:[#allocation25 + $0xd8] sm:$0xff]
    %v4109 = vld [vmem:[#allocation25 + $0xe0] sm:$0xff]
    %v4110 = vld [vmem:[#allocation25 + $0xe8] sm:$0xff]
    %v4111 = vld [vmem:[#allocation25 + $0xf0] sm:$0xff]
    %v4112 = vld [vmem:[#allocation25 + $0xf8] sm:$0xff]
    %v4113 = vld [vmem:[#allocation25 + $0x100] sm:$0xff]
    %v4114 = vld [vmem:[#allocation25 + $0x108] sm:$0xff]
    %v4115 = vld [vmem:[#allocation25 + $0x110] sm:$0xff]
    %v4116 = vld [vmem:[#allocation25 + $0x118] sm:$0xff]
    %v4117 = vld [vmem:[#allocation25 + $0x120] sm:$0xff]
    %v4118 = vld [vmem:[#allocation25 + $0x128] sm:$0xff]
    %v4119 = vld [vmem:[#allocation25 + $0x130] sm:$0xff]
    %v4120 = vld [vmem:[#allocation25 + $0x138] sm:$0xff]
    %v4121 = vld [vmem:[#allocation25 + $0x140] sm:$0xff]
    %v4122 = vld [vmem:[#allocation25 + $0x148] sm:$0xff]
    %v4123 = vld [vmem:[#allocation25 + $0x150] sm:$0xff]
    %v4124 = vld [vmem:[#allocation25 + $0x158] sm:$0xff]
    %v4125 = vld [vmem:[#allocation25 + $0x160] sm:$0xff]
    %v4126 = vld [vmem:[#allocation25 + $0x168] sm:$0xff]
    %v4127 = vld [vmem:[#allocation25 + $0x170] sm:$0xff]
    %v4128 = vld [vmem:[#allocation25 + $0x178] sm:$0xff]
    %v4129 = vld [vmem:[#allocation25 + $0x180] sm:$0xff]
    %v4130 = vld [vmem:[#allocation25 + $0x188] sm:$0xff]
    %v4131 = vld [vmem:[#allocation25 + $0x190] sm:$0xff]
    %v4132 = vld [vmem:[#allocation25 + $0x198] sm:$0xff]
    %v4133 = vld [vmem:[#allocation25 + $0x1a0] sm:$0xff]
    %v4134 = vld [vmem:[#allocation25 + $0x1a8] sm:$0xff]
    %v4135 = vld [vmem:[#allocation25 + $0x1b0] sm:$0xff]
    %v4136 = vld [vmem:[#allocation25 + $0x1b8] sm:$0xff]
    %v4137 = vld [vmem:[#allocation25 + $0x1c0] sm:$0xff]
    %v4138 = vld [vmem:[#allocation25 + $0x1c8] sm:$0xff]
    %v4139 = vld [vmem:[#allocation25 + $0x1d0] sm:$0xff]
    %v4140 = vld [vmem:[#allocation25 + $0x1d8] sm:$0xff]
    %v4141 = vld [vmem:[#allocation25 + $0x1e0] sm:$0xff]
    %v4142 = vld [vmem:[#allocation25 + $0x1e8] sm:$0xff]
    %v4143 = vld [vmem:[#allocation25 + $0x1f0] sm:$0xff]
    %v4144 = vld [vmem:[#allocation25 + $0x1f8] sm:$0xff]
    %v4145 = vld [vmem:[#allocation25 + $0x200] sm:$0xff]
    %v4146 = vld [vmem:[#allocation25 + $0x208] sm:$0xff]
    %v4147 = vld [vmem:[#allocation25 + $0x210] sm:$0xff]
    %v4148 = vld [vmem:[#allocation25 + $0x218] sm:$0xff]
    %v4149 = vld [vmem:[#allocation25 + $0x220] sm:$0xff]
    %v4150 = vld [vmem:[#allocation25 + $0x228] sm:$0xff]
    %v4151 = vld [vmem:[#allocation25 + $0x230] sm:$0xff]
    %v4152 = vld [vmem:[#allocation25 + $0x238] sm:$0xff]
    %v4153 = vld [vmem:[#allocation25 + $0x240] sm:$0xff]
    %v4154 = vld [vmem:[#allocation25 + $0x248] sm:$0xff]
    %v4155 = vld [vmem:[#allocation25 + $0x250] sm:$0xff]
    %v4156 = vld [vmem:[#allocation25 + $0x258] sm:$0xff]
    %v4157 = vld [vmem:[#allocation25 + $0x260] sm:$0xff]
    %v4158 = vld [vmem:[#allocation25 + $0x268] sm:$0xff]
    %v4159 = vld [vmem:[#allocation25 + $0x270] sm:$0xff]
    %v4160 = vld [vmem:[#allocation25 + $0x278] sm:$0xff]
    %v4161 = vld [vmem:[#allocation25 + $0x280] sm:$0xff]
    %v4162 = vld [vmem:[#allocation25 + $0x288] sm:$0xff]
    %v4163 = vld [vmem:[#allocation25 + $0x290] sm:$0xff]
    %v4164 = vld [vmem:[#allocation25 + $0x298] sm:$0xff]
    %v4165 = vld [vmem:[#allocation25 + $0x2a0] sm:$0xff]
    %v4166 = vld [vmem:[#allocation25 + $0x2a8] sm:$0xff]
    %v4167 = vld [vmem:[#allocation25 + $0x2b0] sm:$0xff]
    %v4168 = vld [vmem:[#allocation25 + $0x2b8] sm:$0xff]
    %v4169 = vld [vmem:[#allocation25 + $0x2c0] sm:$0xff]
    %v4170 = vld [vmem:[#allocation25 + $0x2c8] sm:$0xff]
    %v4171 = vld [vmem:[#allocation25 + $0x2d0] sm:$0xff]
    %v4172 = vld [vmem:[#allocation25 + $0x2d8] sm:$0xff]
    %v4173 = vld [vmem:[#allocation25 + $0x2e0] sm:$0xff]
    %v4174 = vld [vmem:[#allocation25 + $0x2e8] sm:$0xff]
    %v4175 = vld [vmem:[#allocation25 + $0x2f0] sm:$0xff]
    %v4176 = vld [vmem:[#allocation25 + $0x2f8] sm:$0xff]
    %v4177 = vld [vmem:[#allocation26] sm:$0x1]
    %v4179 = vlaneseq
    %v4180 = vshrl.u32 %v4179, 7
    %v4181 = vsub.s32 0, %v4180
    %v4182 = vrot.slane %v4177, %v4181
    %4184 = vmatprep.subr.mxu0 0.0
    %4185 = vmatpush1.msra.mxu0 %v4081
    %4186 = vmatprep.subr.mxu0 0.0
    %4187 = vmatpush1.msra.mxu0 %v4082
    %4188 = vmatprep.subr.mxu0 0.0
    %4189 = vmatpush1.msra.mxu0 %v4083
    %4190 = vmatprep.subr.mxu0 0.0
    %4191 = vmatpush1.msra.mxu0 %v4084
    %4192 = vmatprep.subr.mxu0 0.0
    %4193 = vmatpush1.msra.mxu0 %v4085
    %4194 = vmatprep.subr.mxu0 0.0
    %4195 = vmatpush1.msra.mxu0 %v4086
    %4196 = vmatprep.subr.mxu0 0.0
    %4197 = vmatpush1.msra.mxu0 %v4087
    %4198 = vmatprep.subr.mxu0 0.0
    %4199 = vmatpush1.msra.mxu0 %v4088
    %4200 = vmatprep.subr.mxu0 0.0
    %4201 = vmatpush1.msra.mxu0 %v4089
    %4202 = vmatprep.subr.mxu0 0.0
    %4203 = vmatpush1.msra.mxu0 %v4090
    %4204 = vmatprep.subr.mxu0 0.0
    %4205 = vmatpush1.msra.mxu0 %v4091
    %4206 = vmatprep.subr.mxu0 0.0
    %4207 = vmatpush1.msra.mxu0 %v4092
    %4208 = vmatprep.subr.mxu0 0.0
    %4209 = vmatpush1.msra.mxu0 %v4093
    %4210 = vmatprep.subr.mxu0 0.0
    %4211 = vmatpush1.msra.mxu0 %v4094
    %4212 = vmatprep.subr.mxu0 0.0
    %4213 = vmatpush1.msra.mxu0 %v4095
    %4214 = vmatprep.subr.mxu0 0.0
    %4215 = vmatpush1.msra.mxu0 %v4096
    %4216 = vmatprep.subr.mxu0 0.0
    %4217 = vmatpush1.msra.mxu0 %v4097
    %4218 = vmatprep.subr.mxu0 0.0
    %4219 = vmatpush1.msra.mxu0 %v4098
    %4220 = vmatprep.subr.mxu0 0.0
    %4221 = vmatpush1.msra.mxu0 %v4099
    %4222 = vmatprep.subr.mxu0 0.0
    %4223 = vmatpush1.msra.mxu0 %v4100
    %4224 = vmatprep.subr.mxu0 0.0
    %4225 = vmatpush1.msra.mxu0 %v4101
    %4226 = vmatprep.subr.mxu0 0.0
    %4227 = vmatpush1.msra.mxu0 %v4102
    %4228 = vmatprep.subr.mxu0 0.0
    %4229 = vmatpush1.msra.mxu0 %v4103
    %4230 = vmatprep.subr.mxu0 0.0
    %4231 = vmatpush1.msra.mxu0 %v4104
    %4232 = vmatprep.subr.mxu0 0.0
    %4233 = vmatpush1.msra.mxu0 %v4105
    %4234 = vmatprep.subr.mxu0 0.0
    %4235 = vmatpush1.msra.mxu0 %v4106
    %4236 = vmatprep.subr.mxu0 0.0
    %4237 = vmatpush1.msra.mxu0 %v4107
    %4238 = vmatprep.subr.mxu0 0.0
    %4239 = vmatpush1.msra.mxu0 %v4108
    %4240 = vmatprep.subr.mxu0 0.0
    %4241 = vmatpush1.msra.mxu0 %v4109
    %4242 = vmatprep.subr.mxu0 0.0
    %4243 = vmatpush1.msra.mxu0 %v4110
    %4244 = vmatprep.subr.mxu0 0.0
    %4245 = vmatpush1.msra.mxu0 %v4111
    %4246 = vmatprep.subr.mxu0 0.0
    %4247 = vmatpush1.msra.mxu0 %v4112
    %4248 = vmatprep.mubr.f32.mxu0 %v4076
    %4249 = vmatmul.mubr.f32.gmra.mrb[0].mxu0 %v4075
    %v4250 = vpop.f32.mrb[0].mxu0
    %v4251 = vadd.f32 %v4182, %v4250
    %v4252 = vpop.f32.mrb[0].mxu0
    %4253 = vdwg.mxu0
    %4254 = vmatprep.subr.mxu0 0.0
    %4255 = vmatpush1.msra.mxu0 %v4113
    %4256 = vmatprep.subr.mxu0 0.0
    %4257 = vmatpush1.msra.mxu0 %v4114
    %4258 = vmatprep.subr.mxu0 0.0
    %4259 = vmatpush1.msra.mxu0 %v4115
    %4260 = vmatprep.subr.mxu0 0.0
    %4261 = vmatpush1.msra.mxu0 %v4116
    %4262 = vmatprep.subr.mxu0 0.0
    %4263 = vmatpush1.msra.mxu0 %v4117
    %4264 = vmatprep.subr.mxu0 0.0
    %4265 = vmatpush1.msra.mxu0 %v4118
    %4266 = vmatprep.subr.mxu0 0.0
    %4267 = vmatpush1.msra.mxu0 %v4119
    %4268 = vmatprep.subr.mxu0 0.0
    %4269 = vmatpush1.msra.mxu0 %v4120
    %4270 = vmatprep.subr.mxu0 0.0
    %4271 = vmatpush1.msra.mxu0 %v4121
    %4272 = vmatprep.subr.mxu0 0.0
    %4273 = vmatpush1.msra.mxu0 %v4122
    %4274 = vmatprep.subr.mxu0 0.0
    %4275 = vmatpush1.msra.mxu0 %v4123
    %4276 = vmatprep.subr.mxu0 0.0
    %4277 = vmatpush1.msra.mxu0 %v4124
    %4278 = vmatprep.subr.mxu0 0.0
    %4279 = vmatpush1.msra.mxu0 %v4125
    %4280 = vmatprep.subr.mxu0 0.0
    %4281 = vmatpush1.msra.mxu0 %v4126
    %4282 = vmatprep.subr.mxu0 0.0
    %4283 = vmatpush1.msra.mxu0 %v4127
    %4284 = vmatprep.subr.mxu0 0.0
    %4285 = vmatpush1.msra.mxu0 %v4128
    %4286 = vmatprep.subr.mxu0 0.0
    %4287 = vmatpush1.msra.mxu0 %v4129
    %4288 = vmatprep.subr.mxu0 0.0
    %4289 = vmatpush1.msra.mxu0 %v4130
    %4290 = vmatprep.subr.mxu0 0.0
    %4291 = vmatpush1.msra.mxu0 %v4131
    %4292 = vmatprep.subr.mxu0 0.0
    %4293 = vmatpush1.msra.mxu0 %v4132
    %4294 = vmatprep.subr.mxu0 0.0
    %4295 = vmatpush1.msra.mxu0 %v4133
    %4296 = vmatprep.subr.mxu0 0.0
    %4297 = vmatpush1.msra.mxu0 %v4134
    %4298 = vmatprep.subr.mxu0 0.0
    %4299 = vmatpush1.msra.mxu0 %v4135
    %4300 = vmatprep.subr.mxu0 0.0
    %4301 = vmatpush1.msra.mxu0 %v4136
    %4302 = vmatprep.subr.mxu0 0.0
    %4303 = vmatpush1.msra.mxu0 %v4137
    %4304 = vmatprep.subr.mxu0 0.0
    %4305 = vmatpush1.msra.mxu0 %v4138
    %4306 = vmatprep.subr.mxu0 0.0
    %4307 = vmatpush1.msra.mxu0 %v4139
    %4308 = vmatprep.subr.mxu0 0.0
    %4309 = vmatpush1.msra.mxu0 %v4140
    %4310 = vmatprep.subr.mxu0 0.0
    %4311 = vmatpush1.msra.mxu0 %v4141
    %4312 = vmatprep.subr.mxu0 0.0
    %4313 = vmatpush1.msra.mxu0 %v4142
    %4314 = vmatprep.subr.mxu0 0.0
    %4315 = vmatpush1.msra.mxu0 %v4143
    %4316 = vmatprep.subr.mxu0 0.0
    %4317 = vmatpush1.msra.mxu0 %v4144
    %4318 = vmatprep.mubr.f32.mxu0 %v4078
    %4319 = vmatmul.mubr.f32.gmra.mrb[0].mxu0 %v4077
    %v4320 = vpop.f32.mrb[0].mxu0
    %v4321 = vadd.f32 %v4251, %v4320
    %v4322 = vpop.f32.mrb[0].mxu0
    %4323 = vdwg.mxu0
    %4324 = vmatprep.subr.mxu0 0.0
    %4325 = vmatpush1.msra.mxu0 %v4145
    %4326 = vmatprep.subr.mxu0 0.0
    %4327 = vmatpush1.msra.mxu0 %v4146
    %4328 = vmatprep.subr.mxu0 0.0
    %4329 = vmatpush1.msra.mxu0 %v4147
    %4330 = vmatprep.subr.mxu0 0.0
    %4331 = vmatpush1.msra.mxu0 %v4148
    %4332 = vmatprep.subr.mxu0 0.0
    %4333 = vmatpush1.msra.mxu0 %v4149
    %4334 = vmatprep.subr.mxu0 0.0
    %4335 = vmatpush1.msra.mxu0 %v4150
    %4336 = vmatprep.subr.mxu0 0.0
    %4337 = vmatpush1.msra.mxu0 %v4151
    %4338 = vmatprep.subr.mxu0 0.0
    %4339 = vmatpush1.msra.mxu0 %v4152
    %4340 = vmatprep.subr.mxu0 0.0
    %4341 = vmatpush1.msra.mxu0 %v4153
    %4342 = vmatprep.subr.mxu0 0.0
    %4343 = vmatpush1.msra.mxu0 %v4154
    %4344 = vmatprep.subr.mxu0 0.0
    %4345 = vmatpush1.msra.mxu0 %v4155
    %4346 = vmatprep.subr.mxu0 0.0
    %4347 = vmatpush1.msra.mxu0 %v4156
    %4348 = vmatprep.subr.mxu0 0.0
    %4349 = vmatpush1.msra.mxu0 %v4157
    %4350 = vmatprep.subr.mxu0 0.0
    %4351 = vmatpush1.msra.mxu0 %v4158
    %4352 = vmatprep.subr.mxu0 0.0
    %4353 = vmatpush1.msra.mxu0 %v4159
    %4354 = vmatprep.subr.mxu0 0.0
    %4355 = vmatpush1.msra.mxu0 %v4160
    %4356 = vmatprep.subr.mxu0 0.0
    %4357 = vmatpush1.msra.mxu0 %v4161
    %4358 = vmatprep.subr.mxu0 0.0
    %4359 = vmatpush1.msra.mxu0 %v4162
    %4360 = vmatprep.subr.mxu0 0.0
    %4361 = vmatpush1.msra.mxu0 %v4163
    %4362 = vmatprep.subr.mxu0 0.0
    %4363 = vmatpush1.msra.mxu0 %v4164
    %4364 = vmatprep.subr.mxu0 0.0
    %4365 = vmatpush1.msra.mxu0 %v4165
    %4366 = vmatprep.subr.mxu0 0.0
    %4367 = vmatpush1.msra.mxu0 %v4166
    %4368 = vmatprep.subr.mxu0 0.0
    %4369 = vmatpush1.msra.mxu0 %v4167
    %4370 = vmatprep.subr.mxu0 0.0
    %4371 = vmatpush1.msra.mxu0 %v4168
    %4372 = vmatprep.subr.mxu0 0.0
    %4373 = vmatpush1.msra.mxu0 %v4169
    %4374 = vmatprep.subr.mxu0 0.0
    %4375 = vmatpush1.msra.mxu0 %v4170
    %4376 = vmatprep.subr.mxu0 0.0
    %4377 = vmatpush1.msra.mxu0 %v4171
    %4378 = vmatprep.subr.mxu0 0.0
    %4379 = vmatpush1.msra.mxu0 %v4172
    %4380 = vmatprep.subr.mxu0 0.0
    %4381 = vmatpush1.msra.mxu0 %v4173
    %4382 = vmatprep.subr.mxu0 0.0
    %4383 = vmatpush1.msra.mxu0 %v4174
    %4384 = vmatprep.subr.mxu0 0.0
    %4385 = vmatpush1.msra.mxu0 %v4175
    %4386 = vmatprep.subr.mxu0 0.0
    %4387 = vmatpush1.msra.mxu0 %v4176
    %4388 = vmatprep.mubr.f32.mxu0 %v4080
    %4389 = vmatmul.mubr.f32.gmra.mrb[0].mxu0 %v4079
    %v4390 = vpop.f32.mrb[0].mxu0
    %v4391 = vadd.f32 %v4321, %v4390
    %v4392 = vpop.f32.mrb[0].mxu0
    %4393 = vdwg.mxu0
    %v4394 = vtanh.pop %v4391
    %4395 = vst [vmem:[#allocation28] sm:$0xff] %v4394
    %4396 = vst [vmem:[#allocation29] sm:$0xff] %v2326
    %4397 = vst [vmem:[#allocation31] sm:$0xff] %v2332
    // Predicated region
    $region134: #{tpu_custom_call.1} parent=1 // pred_check
      _
    $region135: #{tpu_custom_call.1} parent=1 // pred_check_branch
      %4399 = sbr.rel (0) target = $region137
    $region136: #{tpu_custom_call.1} parent=1 // pred_region
      %s4401 = ssub.s32 128, 128
      %4402 = vsyncadd [#allocation4], %s4401
      %s4404 = sshll.u32 [#allocation28], 4
      %s4405 = int_to_ptr.vmem [resolvable:$true] %s4404
      %4407 = dma.vmem_to_hbm [thread:$0]  %s4405, 128, %s17, [#allocation4]
    $region137: #{tpu_custom_call.1} parent=1 // pred_fallthru
      _
    // Predicated region
    $region138: #{tpu_custom_call.1} parent=1 // pred_check
      _
    $region139: #{tpu_custom_call.1} parent=1 // pred_check_branch
      %4409 = sbr.rel (0) target = $region141
    $region140: #{tpu_custom_call.1} parent=1 // pred_region
      %s4411 = ssub.s32 128, 128
      %4412 = vsyncadd [#allocation30], %s4411
      %s4414 = sshll.u32 [#allocation29], 4
      %s4415 = int_to_ptr.vmem [resolvable:$true] %s4414
      %4417 = dma.vmem_to_hbm [thread:$0]  %s4415, 128, %s18, [#allocation30]
    $region141: #{tpu_custom_call.1} parent=1 // pred_fallthru
      _
    // Predicated region
    $region142: #{tpu_custom_call.1} parent=1 // pred_check
      _
    $region143: #{tpu_custom_call.1} parent=1 // pred_check_branch
      %4419 = sbr.rel (0) target = $region145
    $region144: #{tpu_custom_call.1} parent=1 // pred_region
      %s4421 = ssub.s32 128, 128
      %4422 = vsyncadd [#allocation30], %s4421
      %s4424 = sshll.u32 [#allocation31], 4
      %s4425 = int_to_ptr.vmem [resolvable:$true] %s4424
      %4427 = dma.vmem_to_hbm [thread:$0]  %s4425, 128, %s19, [#allocation30]
    $region145: #{tpu_custom_call.1} parent=1 // pred_fallthru
      _
    // Predicated region
    $region146: #{tpu_custom_call.1} parent=1 // pred_check
      _
    $region147: #{tpu_custom_call.1} parent=1 // pred_check_branch
      %4429 = sbr.rel (0) target = $region149
    $region148: #{tpu_custom_call.1} parent=1 // pred_region
      %4430 = dma.done [#allocation4], 128
    $region149: #{tpu_custom_call.1} parent=1 // pred_fallthru
      _
    // Predicated region
    $region150: #{tpu_custom_call.1} parent=1 // pred_check
      _
    $region151: #{tpu_custom_call.1} parent=1 // pred_check_branch
      %4432 = sbr.rel (0) target = $region153
    $region152: #{tpu_custom_call.1} parent=1 // pred_region
      %4433 = dma.done [#allocation30], 128
    $region153: #{tpu_custom_call.1} parent=1 // pred_fallthru
      _
    // Predicated region
    $region154: #{tpu_custom_call.1} parent=1 // pred_check
      _
    $region155: #{tpu_custom_call.1} parent=1 // pred_check_branch
      %4435 = sbr.rel (0) target = $region157
    $region156: #{tpu_custom_call.1} parent=1 // pred_region
      %4436 = dma.done [#allocation30], 128
    $region157: #{tpu_custom_call.1} parent=1 // pred_fallthru
      _
    %4437 = vsyncpa [#allocation3], 1
    %4438 = vsyncpa [#allocation6], 1
    %4439 = vsyncpa [#allocation9], 1
    %4440 = vsyncpa [#allocation12], 1
    %4441 = vsyncpa [#allocation15], 1
    %4442 = vsyncpa [#allocation18], 1
    %4443 = vsyncpa [#allocation21], 1
    %4444 = vsyncpa [#allocation24], 1
    %4445 = vsyncpa [#allocation27], 1
    %4446 = vsyncpa [#allocation4], 1
    %4447 = vsyncpa [#allocation30], 1

</llo_original>
